<compile_context>
chip_gen: v7x
topology: tpu7x:2x2x1
jax: 0.10.0
libtpu: 0.0.40
codegen_flags: <defaults>
</compile_context>

<pallas_src>
import jax
import jax.numpy as jnp
from jax.experimental import pallas as pl
from jax.experimental.pallas import tpu as pltpu


def _parse_ipd_index(ipd_index):
    pairs = [tuple(map(int, s.split(","))) for s in ipd_index.split(";")]
    return [t[0] for t in pairs], [t[1] for t in pairs]


def _vmem_budget_and_limit():
    """(per-step tile budget, vmem_limit_bytes) sized per TPU generation."""
    cap = None
    try:
        cap = int(pltpu.get_tpu_info().vmem_capacity_bytes)
    except Exception:
        cap = None
    if cap is not None and cap >= 100 * 1024 * 1024:
        # 128 MiB parts (v5e / v6e): go big, this kernel is HBM-bound there.
        return 48 * 1024 * 1024, 96 * 1024 * 1024
    # 64 MiB-per-core parts (v7x) or unknown backend: stay conservative.
    return 24 * 1024 * 1024, 32 * 1024 * 1024


def _choose_f_tile(C, F, Tp, M, scratch_channels, in_itemsize, budget_bytes):
    """Largest F tile (multiple of 8, or the full F) whose footprint fits."""

    def need(ft):
        in_blk = C * ft * Tp * in_itemsize          # one input slab
        out_blk = M * ft * Tp * 4                   # one output slab (f32)
        scratch = 2 * scratch_channels * ft * Tp * 4
        return 2 * in_blk + 2 * out_blk + scratch   # double-buffered in/out

    if F <= 8 or need(F) <= budget_bytes:
        return F
    for ft in range((F // 8) * 8, 7, -8):
        if need(ft) <= budget_bytes:
            return ft
    return 8


def _make_ipd_kernel(index_l, index_r, t_valid, t_padded, use_identity, used,
                     slot, scratch_in_vmem):
    """Kernel body. Pair tables / scales are baked-in Python config."""
    M = len(index_l)
    inv_t = 1.0 / float(t_valid)            # python float literal (not captured)
    pad_count = float(t_padded - t_valid)   # zero-pad tail adds cos(0)=1 per col

    def kernel(p_ref, o_ref, *scratch):
        # p_ref: (C, F_TILE, Tp)   o_ref: (M, F_TILE, Tp)
        def load(c):
            x = p_ref[c]
            return x if x.dtype == jnp.float32 else x.astype(jnp.float32)

        if use_identity:
            if scratch_in_vmem:
                cos_sc, sin_sc = scratch
                for c in used:                      # 2*U transcendentals total
                    ph = load(c)
                    cos_sc[slot[c]] = jnp.cos(ph)
                    sin_sc[slot[c]] = jnp.sin(ph)
                cs = lambda c: (cos_sc[slot[c]], sin_sc[slot[c]])
            else:
                cos_v, sin_v = {}, {}
                for c in used:                      # keep live in vregs
                    ph = load(c)
                    cos_v[c] = jnp.cos(ph)
                    sin_v[c] = jnp.sin(ph)
                cs = lambda c: (cos_v[c], sin_v[c])

        for m in range(M):                          # static loop, M is small
            il, ir = index_l[m], index_r[m]
            if use_identity:
                ca, sa = cs(il)
                cb, sb = cs(ir)
                yr = ca * cb + sa * sb              # cos(a - b), VPU only
                yi = sa * cb - ca * sb              # sin(a - b), VPU only
            else:
                diff = load(il) - load(ir)
                yr = jnp.cos(diff)
                yi = jnp.sin(diff)
            yr_sum = jnp.sum(yr, axis=-1, keepdims=True)
            yi_sum = jnp.sum(yi, axis=-1, keepdims=True)
            if pad_count:
                yr_sum = yr_sum - pad_count         # remove zero-pad contribution
            o_ref[m] = jnp.arctan2(yi - yi_sum * inv_t, yr - yr_sum * inv_t)

    return kernel


def ipd_feature(p, index_l, index_r):
    """Pallas IPD feature. p: (N, C, F, T) or (C, F, T) phase -> (N, M*F, T)."""
    index_l = [int(i) for i in index_l]
    index_r = [int(i) for i in index_r]
    if p.ndim == 3:
        p = p[None]
    if p.ndim != 4:
        raise RuntimeError(f"IPDFeature expects 3/4D input, got {p.ndim}D")
    N, C, F, T = p.shape
    M = len(index_l)

    used = sorted(set(index_l) | set(index_r))
    slot = {c: i for i, c in enumerate(used)}
    U = len(used)
    # identity path: 2*U transcendentals per step vs 2*M on the direct path
    use_identity = U < M

    # Pad the time axis only when it is tiny; for T >= 128 the block uses the
    # full T dim (allowed), so there is no extra pad/slice HBM round trip.
    if T < 128:
        Tp = 128
        p = jnp.pad(p, ((0, 0), (0, 0), (0, 0), (0, Tp - T)))
    else:
        Tp = T

    budget, vmem_limit = _vmem_budget_and_limit()
    in_itemsize = jnp.dtype(p.dtype).itemsize
    f_tile = _choose_f_tile(C, F, Tp, M, U if use_identity else 0,
                            in_itemsize, budget)
    grid_f = pl.cdiv(F, f_tile)

    # Guarantee >= 2 parallel grid steps so a second TensorCore (v7x) never
    # idles; extra grid steps are near-free elsewhere.
    if N * grid_f < 2 and F > 8:
        half = (F + 1) // 2
        f_tile = min(F, max(8, ((half + 7) // 8) * 8))
        grid_f = pl.cdiv(F, f_tile)

    # cos/sin live in vregs when the whole identity working set is small.
    scratch_in_vmem = use_identity and (2 * U * f_tile * Tp * 4 > 128 * 1024)
    scratch_shapes = []
    if scratch_in_vmem:
        scratch_shapes = [
            pltpu.VMEM((U, f_tile, Tp), jnp.float32),
            pltpu.VMEM((U, f_tile, Tp), jnp.float32),
        ]

    kernel = _make_ipd_kernel(index_l, index_r, T, Tp, use_identity, used,
                              slot, scratch_in_vmem)

    out = pl.pallas_call(
        kernel,
        out_shape=jax.ShapeDtypeStruct((N, M, F, Tp), jnp.float32),
        grid_spec=pltpu.PrefetchScalarGridSpec(
            num_scalar_prefetch=0,
            grid=(N, grid_f),
            in_specs=[
                # all C channels of one frequency slab; batch dim squeezed
                pl.BlockSpec((None, C, f_tile, Tp), lambda n, f: (n, 0, f, 0)),
            ],
            out_specs=pl.BlockSpec((None, M, f_tile, Tp),
                                   lambda n, f: (n, 0, f, 0)),
            scratch_shapes=scratch_shapes,
        ),
        compiler_params=pltpu.CompilerParams(
            dimension_semantics=("parallel", "parallel"),
            vmem_limit_bytes=vmem_limit,
        ),
    )(p)

    if Tp != T:
        out = out[..., :T]
    # matches torch `ipd.view(N, -1, T)`
    return out.reshape(N, M * F, T)


def ipd_feature_ref(p, index_l, index_r):
    """Pure-JAX reference mirroring the PyTorch forward."""
    if p.ndim == 3:
        p = p[None]
    il = jnp.asarray(index_l)
    ir = jnp.asarray(index_r)
    pha_dif = p[:, il] - p[:, ir]                    # N x M x F x T
    yr = jnp.cos(pha_dif)
    yi = jnp.sin(pha_dif)
    yrm = yr.mean(-1, keepdims=True)
    yim = yi.mean(-1, keepdims=True)
    ipd = jnp.arctan2(yi - yim, yr - yrm)
    N, M, F, T = pha_dif.shape
    return ipd.reshape(N, M * F, T)


if __name__ == "__main__":
    key = jax.random.PRNGKey(0)
    k1, k2 = jax.random.split(key)

    # Case 1: default pairing '1,0;...;6,0' -> M=6, direct cos/sin path,
    # T a multiple of 128 (full-T block, no padding, unmasked stores).
    index_l, index_r = _parse_ipd_index("1,0;2,0;3,0;4,0;5,0;6,0")
    N, C, F, T = 2, 7, 16, 128
    p1 = jax.random.uniform(k1, (N, C, F, T), dtype=jnp.float32,
                            minval=-jnp.pi, maxval=jnp.pi)
    out1 = jax.block_until_ready(ipd_feature(p1, index_l, index_r))
    ref1 = ipd_feature_ref(p1, index_l, index_r)
    assert out1.shape == (N, len(index_l) * F, T)
    assert jnp.allclose(out1, ref1, atol=1e-3, rtol=1e-3), float(
        jnp.max(jnp.abs(out1 - ref1)))

    # Case 2: dense pairing (M > #channels used) -> angle-identity path kept in
    # vregs, and a tiny T (< 128) -> zero-pad + sum-correction path.
    index_l2, index_r2 = _parse_ipd_index("0,1;0,2;1,2;1,0;2,0;2,1")
    N2, C2, F2, T2 = 1, 3, 8, 48
    p2 = jax.random.uniform(k2, (N2, C2, F2, T2), dtype=jnp.float32,
                            minval=-jnp.pi, maxval=jnp.pi)
    out2 = jax.block_until_ready(ipd_feature(p2, index_l2, index_r2))
    ref2 = ipd_feature_ref(p2, index_l2, index_r2)
    assert out2.shape == (N2, len(index_l2) * F2, T2)
    assert jnp.allclose(out2, ref2, atol=1e-3, rtol=1e-3), float(
        jnp.max(jnp.abs(out2 - ref2)))

    print("KERNEL_OK")
</pallas_src>

<mosaic_0001>
module attributes {stable_mosaic.version = 11 : i64} {
  func.func @kernel(%arg0: i32, %arg1: i32, %arg2: memref<1x7x16x128xf32, #tpu.memory_space<vmem>>, %arg3: memref<1x6x16x128xf32, #tpu.memory_space<vmem>>) attributes {dimension_semantics = [#tpu.dimension_semantics<parallel>, #tpu.dimension_semantics<parallel>], iteration_bounds = array<i64: 2, 1>, scalar_prefetch = 0 : i64, scratch_operands = 0 : i64, tpu.core_type = #tpu.core_type<tc>, window_params = [{transform_indices = @transform_0, window_bounds = array<i64: 1, 7, 16, 128>}, {transform_indices = @transform_1, window_bounds = array<i64: 1, 6, 16, 128>}]} {
    %c0 = arith.constant 0 : index
    %c1 = arith.constant 1 : index
    %c0_0 = arith.constant 0 : index
    %c0_1 = arith.constant 0 : index
    %0 = vector.load %arg2[%c0, %c1, %c0_0, %c0_1] : memref<1x7x16x128xf32, #tpu.memory_space<vmem>>, vector<1x1x16x128xf32>
    %1 = vector.shape_cast %0 : vector<1x1x16x128xf32> to vector<16x128xf32>
    %c0_2 = arith.constant 0 : index
    %c0_3 = arith.constant 0 : index
    %c0_4 = arith.constant 0 : index
    %c0_5 = arith.constant 0 : index
    %2 = vector.load %arg2[%c0_2, %c0_3, %c0_4, %c0_5] : memref<1x7x16x128xf32, #tpu.memory_space<vmem>>, vector<1x1x16x128xf32>
    %3 = vector.shape_cast %2 : vector<1x1x16x128xf32> to vector<16x128xf32>
    %4 = arith.subf %1, %3 : vector<16x128xf32>
    %5 = math.cos %4 : vector<16x128xf32>
    %6 = math.sin %4 : vector<16x128xf32>
    %cst = arith.constant dense<0.000000e+00> : vector<16xf32>
    %7 = vector.multi_reduction <add>, %5, %cst [1] : vector<16x128xf32> to vector<16xf32>
    %8 = vector.shape_cast %7 : vector<16xf32> to vector<16x1xf32>
    %cst_6 = arith.constant dense<0.000000e+00> : vector<16xf32>
    %9 = vector.multi_reduction <add>, %6, %cst_6 [1] : vector<16x128xf32> to vector<16xf32>
    %10 = vector.shape_cast %9 : vector<16xf32> to vector<16x1xf32>
    %cst_7 = arith.constant 7.812500e-03 : f32
    %11 = vector.broadcast %cst_7 : f32 to vector<16x1xf32>
    %12 = arith.mulf %10, %11 : vector<16x1xf32>
    %13 = vector.broadcast %12 : vector<16x1xf32> to vector<16x128xf32>
    %14 = arith.subf %6, %13 : vector<16x128xf32>
    %cst_8 = arith.constant 7.812500e-03 : f32
    %15 = vector.broadcast %cst_8 : f32 to vector<16x1xf32>
    %16 = arith.mulf %8, %15 : vector<16x1xf32>
    %17 = vector.broadcast %16 : vector<16x1xf32> to vector<16x128xf32>
    %18 = arith.subf %5, %17 : vector<16x128xf32>
    %19 = math.atan2 %14, %18 : vector<16x128xf32>
    %c0_9 = arith.constant 0 : index
    %c0_10 = arith.constant 0 : index
    %c0_11 = arith.constant 0 : index
    %c0_12 = arith.constant 0 : index
    %20 = vector.load %arg3[%c0_9, %c0_10, %c0_11, %c0_12] : memref<1x6x16x128xf32, #tpu.memory_space<vmem>>, vector<1x1x16x128xf32>
    %21 = vector.shape_cast %20 : vector<1x1x16x128xf32> to vector<16x128xf32>
    %22 = vector.shape_cast %19 : vector<16x128xf32> to vector<1x1x16x128xf32>
    tpu.vector_store %arg3[%c0_9, %c0_10, %c0_11, %c0_12], %22 {strides = array<i32>} : memref<1x6x16x128xf32, #tpu.memory_space<vmem>>, vector<1x1x16x128xf32>,
    %c0_13 = arith.constant 0 : index
    %c2 = arith.constant 2 : index
    %c0_14 = arith.constant 0 : index
    %c0_15 = arith.constant 0 : index
    %23 = vector.load %arg2[%c0_13, %c2, %c0_14, %c0_15] : memref<1x7x16x128xf32, #tpu.memory_space<vmem>>, vector<1x1x16x128xf32>
    %24 = vector.shape_cast %23 : vector<1x1x16x128xf32> to vector<16x128xf32>
    %c0_16 = arith.constant 0 : index
    %c0_17 = arith.constant 0 : index
    %c0_18 = arith.constant 0 : index
    %c0_19 = arith.constant 0 : index
    %25 = vector.load %arg2[%c0_16, %c0_17, %c0_18, %c0_19] : memref<1x7x16x128xf32, #tpu.memory_space<vmem>>, vector<1x1x16x128xf32>
    %26 = vector.shape_cast %25 : vector<1x1x16x128xf32> to vector<16x128xf32>
    %27 = arith.subf %24, %26 : vector<16x128xf32>
    %28 = math.cos %27 : vector<16x128xf32>
    %29 = math.sin %27 : vector<16x128xf32>
    %cst_20 = arith.constant dense<0.000000e+00> : vector<16xf32>
    %30 = vector.multi_reduction <add>, %28, %cst_20 [1] : vector<16x128xf32> to vector<16xf32>
    %31 = vector.shape_cast %30 : vector<16xf32> to vector<16x1xf32>
    %cst_21 = arith.constant dense<0.000000e+00> : vector<16xf32>
    %32 = vector.multi_reduction <add>, %29, %cst_21 [1] : vector<16x128xf32> to vector<16xf32>
    %33 = vector.shape_cast %32 : vector<16xf32> to vector<16x1xf32>
    %cst_22 = arith.constant 7.812500e-03 : f32
    %34 = vector.broadcast %cst_22 : f32 to vector<16x1xf32>
    %35 = arith.mulf %33, %34 : vector<16x1xf32>
    %36 = vector.broadcast %35 : vector<16x1xf32> to vector<16x128xf32>
    %37 = arith.subf %29, %36 : vector<16x128xf32>
    %cst_23 = arith.constant 7.812500e-03 : f32
    %38 = vector.broadcast %cst_23 : f32 to vector<16x1xf32>
    %39 = arith.mulf %31, %38 : vector<16x1xf32>
    %40 = vector.broadcast %39 : vector<16x1xf32> to vector<16x128xf32>
    %41 = arith.subf %28, %40 : vector<16x128xf32>
    %42 = math.atan2 %37, %41 : vector<16x128xf32>
    %c0_24 = arith.constant 0 : index
    %c1_25 = arith.constant 1 : index
    %c0_26 = arith.constant 0 : index
    %c0_27 = arith.constant 0 : index
    %43 = vector.load %arg3[%c0_24, %c1_25, %c0_26, %c0_27] : memref<1x6x16x128xf32, #tpu.memory_space<vmem>>, vector<1x1x16x128xf32>
    %44 = vector.shape_cast %43 : vector<1x1x16x128xf32> to vector<16x128xf32>
    %45 = vector.shape_cast %42 : vector<16x128xf32> to vector<1x1x16x128xf32>
    tpu.vector_store %arg3[%c0_24, %c1_25, %c0_26, %c0_27], %45 {strides = array<i32>} : memref<1x6x16x128xf32, #tpu.memory_space<vmem>>, vector<1x1x16x128xf32>,
    %c0_28 = arith.constant 0 : index
    %c3 = arith.constant 3 : index
    %c0_29 = arith.constant 0 : index
    %c0_30 = arith.constant 0 : index
    %46 = vector.load %arg2[%c0_28, %c3, %c0_29, %c0_30] : memref<1x7x16x128xf32, #tpu.memory_space<vmem>>, vector<1x1x16x128xf32>
    %47 = vector.shape_cast %46 : vector<1x1x16x128xf32> to vector<16x128xf32>
    %c0_31 = arith.constant 0 : index
    %c0_32 = arith.constant 0 : index
    %c0_33 = arith.constant 0 : index
    %c0_34 = arith.constant 0 : index
    %48 = vector.load %arg2[%c0_31, %c0_32, %c0_33, %c0_34] : memref<1x7x16x128xf32, #tpu.memory_space<vmem>>, vector<1x1x16x128xf32>
    %49 = vector.shape_cast %48 : vector<1x1x16x128xf32> to vector<16x128xf32>
    %50 = arith.subf %47, %49 : vector<16x128xf32>
    %51 = math.cos %50 : vector<16x128xf32>
    %52 = math.sin %50 : vector<16x128xf32>
    %cst_35 = arith.constant dense<0.000000e+00> : vector<16xf32>
    %53 = vector.multi_reduction <add>, %51, %cst_35 [1] : vector<16x128xf32> to vector<16xf32>
    %54 = vector.shape_cast %53 : vector<16xf32> to vector<16x1xf32>
    %cst_36 = arith.constant dense<0.000000e+00> : vector<16xf32>
    %55 = vector.multi_reduction <add>, %52, %cst_36 [1] : vector<16x128xf32> to vector<16xf32>
    %56 = vector.shape_cast %55 : vector<16xf32> to vector<16x1xf32>
    %cst_37 = arith.constant 7.812500e-03 : f32
    %57 = vector.broadcast %cst_37 : f32 to vector<16x1xf32>
    %58 = arith.mulf %56, %57 : vector<16x1xf32>
    %59 = vector.broadcast %58 : vector<16x1xf32> to vector<16x128xf32>
    %60 = arith.subf %52, %59 : vector<16x128xf32>
    %cst_38 = arith.constant 7.812500e-03 : f32
    %61 = vector.broadcast %cst_38 : f32 to vector<16x1xf32>
    %62 = arith.mulf %54, %61 : vector<16x1xf32>
    %63 = vector.broadcast %62 : vector<16x1xf32> to vector<16x128xf32>
    %64 = arith.subf %51, %63 : vector<16x128xf32>
    %65 = math.atan2 %60, %64 : vector<16x128xf32>
    %c0_39 = arith.constant 0 : index
    %c2_40 = arith.constant 2 : index
    %c0_41 = arith.constant 0 : index
    %c0_42 = arith.constant 0 : index
    %66 = vector.load %arg3[%c0_39, %c2_40, %c0_41, %c0_42] : memref<1x6x16x128xf32, #tpu.memory_space<vmem>>, vector<1x1x16x128xf32>
    %67 = vector.shape_cast %66 : vector<1x1x16x128xf32> to vector<16x128xf32>
    %68 = vector.shape_cast %65 : vector<16x128xf32> to vector<1x1x16x128xf32>
    tpu.vector_store %arg3[%c0_39, %c2_40, %c0_41, %c0_42], %68 {strides = array<i32>} : memref<1x6x16x128xf32, #tpu.memory_space<vmem>>, vector<1x1x16x128xf32>,
    %c0_43 = arith.constant 0 : index
    %c4 = arith.constant 4 : index
    %c0_44 = arith.constant 0 : index
    %c0_45 = arith.constant 0 : index
    %69 = vector.load %arg2[%c0_43, %c4, %c0_44, %c0_45] : memref<1x7x16x128xf32, #tpu.memory_space<vmem>>, vector<1x1x16x128xf32>
    %70 = vector.shape_cast %69 : vector<1x1x16x128xf32> to vector<16x128xf32>
    %c0_46 = arith.constant 0 : index
    %c0_47 = arith.constant 0 : index
    %c0_48 = arith.constant 0 : index
    %c0_49 = arith.constant 0 : index
    %71 = vector.load %arg2[%c0_46, %c0_47, %c0_48, %c0_49] : memref<1x7x16x128xf32, #tpu.memory_space<vmem>>, vector<1x1x16x128xf32>
    %72 = vector.shape_cast %71 : vector<1x1x16x128xf32> to vector<16x128xf32>
    %73 = arith.subf %70, %72 : vector<16x128xf32>
    %74 = math.cos %73 : vector<16x128xf32>
    %75 = math.sin %73 : vector<16x128xf32>
    %cst_50 = arith.constant dense<0.000000e+00> : vector<16xf32>
    %76 = vector.multi_reduction <add>, %74, %cst_50 [1] : vector<16x128xf32> to vector<16xf32>
    %77 = vector.shape_cast %76 : vector<16xf32> to vector<16x1xf32>
    %cst_51 = arith.constant dense<0.000000e+00> : vector<16xf32>
    %78 = vector.multi_reduction <add>, %75, %cst_51 [1] : vector<16x128xf32> to vector<16xf32>
    %79 = vector.shape_cast %78 : vector<16xf32> to vector<16x1xf32>
    %cst_52 = arith.constant 7.812500e-03 : f32
    %80 = vector.broadcast %cst_52 : f32 to vector<16x1xf32>
    %81 = arith.mulf %79, %80 : vector<16x1xf32>
    %82 = vector.broadcast %81 : vector<16x1xf32> to vector<16x128xf32>
    %83 = arith.subf %75, %82 : vector<16x128xf32>
    %cst_53 = arith.constant 7.812500e-03 : f32
    %84 = vector.broadcast %cst_53 : f32 to vector<16x1xf32>
    %85 = arith.mulf %77, %84 : vector<16x1xf32>
    %86 = vector.broadcast %85 : vector<16x1xf32> to vector<16x128xf32>
    %87 = arith.subf %74, %86 : vector<16x128xf32>
    %88 = math.atan2 %83, %87 : vector<16x128xf32>
    %c0_54 = arith.constant 0 : index
    %c3_55 = arith.constant 3 : index
    %c0_56 = arith.constant 0 : index
    %c0_57 = arith.constant 0 : index
    %89 = vector.load %arg3[%c0_54, %c3_55, %c0_56, %c0_57] : memref<1x6x16x128xf32, #tpu.memory_space<vmem>>, vector<1x1x16x128xf32>
    %90 = vector.shape_cast %89 : vector<1x1x16x128xf32> to vector<16x128xf32>
    %91 = vector.shape_cast %88 : vector<16x128xf32> to vector<1x1x16x128xf32>
    tpu.vector_store %arg3[%c0_54, %c3_55, %c0_56, %c0_57], %91 {strides = array<i32>} : memref<1x6x16x128xf32, #tpu.memory_space<vmem>>, vector<1x1x16x128xf32>,
    %c0_58 = arith.constant 0 : index
    %c5 = arith.constant 5 : index
    %c0_59 = arith.constant 0 : index
    %c0_60 = arith.constant 0 : index
    %92 = vector.load %arg2[%c0_58, %c5, %c0_59, %c0_60] : memref<1x7x16x128xf32, #tpu.memory_space<vmem>>, vector<1x1x16x128xf32>
    %93 = vector.shape_cast %92 : vector<1x1x16x128xf32> to vector<16x128xf32>
    %c0_61 = arith.constant 0 : index
    %c0_62 = arith.constant 0 : index
    %c0_63 = arith.constant 0 : index
    %c0_64 = arith.constant 0 : index
    %94 = vector.load %arg2[%c0_61, %c0_62, %c0_63, %c0_64] : memref<1x7x16x128xf32, #tpu.memory_space<vmem>>, vector<1x1x16x128xf32>
    %95 = vector.shape_cast %94 : vector<1x1x16x128xf32> to vector<16x128xf32>
    %96 = arith.subf %93, %95 : vector<16x128xf32>
    %97 = math.cos %96 : vector<16x128xf32>
    %98 = math.sin %96 : vector<16x128xf32>
    %cst_65 = arith.constant dense<0.000000e+00> : vector<16xf32>
    %99 = vector.multi_reduction <add>, %97, %cst_65 [1] : vector<16x128xf32> to vector<16xf32>
    %100 = vector.shape_cast %99 : vector<16xf32> to vector<16x1xf32>
    %cst_66 = arith.constant dense<0.000000e+00> : vector<16xf32>
    %101 = vector.multi_reduction <add>, %98, %cst_66 [1] : vector<16x128xf32> to vector<16xf32>
    %102 = vector.shape_cast %101 : vector<16xf32> to vector<16x1xf32>
    %cst_67 = arith.constant 7.812500e-03 : f32
    %103 = vector.broadcast %cst_67 : f32 to vector<16x1xf32>
    %104 = arith.mulf %102, %103 : vector<16x1xf32>
    %105 = vector.broadcast %104 : vector<16x1xf32> to vector<16x128xf32>
    %106 = arith.subf %98, %105 : vector<16x128xf32>
    %cst_68 = arith.constant 7.812500e-03 : f32
    %107 = vector.broadcast %cst_68 : f32 to vector<16x1xf32>
    %108 = arith.mulf %100, %107 : vector<16x1xf32>
    %109 = vector.broadcast %108 : vector<16x1xf32> to vector<16x128xf32>
    %110 = arith.subf %97, %109 : vector<16x128xf32>
    %111 = math.atan2 %106, %110 : vector<16x128xf32>
    %c0_69 = arith.constant 0 : index
    %c4_70 = arith.constant 4 : index
    %c0_71 = arith.constant 0 : index
    %c0_72 = arith.constant 0 : index
    %112 = vector.load %arg3[%c0_69, %c4_70, %c0_71, %c0_72] : memref<1x6x16x128xf32, #tpu.memory_space<vmem>>, vector<1x1x16x128xf32>
    %113 = vector.shape_cast %112 : vector<1x1x16x128xf32> to vector<16x128xf32>
    %114 = vector.shape_cast %111 : vector<16x128xf32> to vector<1x1x16x128xf32>
    tpu.vector_store %arg3[%c0_69, %c4_70, %c0_71, %c0_72], %114 {strides = array<i32>} : memref<1x6x16x128xf32, #tpu.memory_space<vmem>>, vector<1x1x16x128xf32>,
    %c0_73 = arith.constant 0 : index
    %c6 = arith.constant 6 : index
    %c0_74 = arith.constant 0 : index
    %c0_75 = arith.constant 0 : index
    %115 = vector.load %arg2[%c0_73, %c6, %c0_74, %c0_75] : memref<1x7x16x128xf32, #tpu.memory_space<vmem>>, vector<1x1x16x128xf32>
    %116 = vector.shape_cast %115 : vector<1x1x16x128xf32> to vector<16x128xf32>
    %c0_76 = arith.constant 0 : index
    %c0_77 = arith.constant 0 : index
    %c0_78 = arith.constant 0 : index
    %c0_79 = arith.constant 0 : index
    %117 = vector.load %arg2[%c0_76, %c0_77, %c0_78, %c0_79] : memref<1x7x16x128xf32, #tpu.memory_space<vmem>>, vector<1x1x16x128xf32>
    %118 = vector.shape_cast %117 : vector<1x1x16x128xf32> to vector<16x128xf32>
    %119 = arith.subf %116, %118 : vector<16x128xf32>
    %120 = math.cos %119 : vector<16x128xf32>
    %121 = math.sin %119 : vector<16x128xf32>
    %cst_80 = arith.constant dense<0.000000e+00> : vector<16xf32>
    %122 = vector.multi_reduction <add>, %120, %cst_80 [1] : vector<16x128xf32> to vector<16xf32>
    %123 = vector.shape_cast %122 : vector<16xf32> to vector<16x1xf32>
    %cst_81 = arith.constant dense<0.000000e+00> : vector<16xf32>
    %124 = vector.multi_reduction <add>, %121, %cst_81 [1] : vector<16x128xf32> to vector<16xf32>
    %125 = vector.shape_cast %124 : vector<16xf32> to vector<16x1xf32>
    %cst_82 = arith.constant 7.812500e-03 : f32
    %126 = vector.broadcast %cst_82 : f32 to vector<16x1xf32>
    %127 = arith.mulf %125, %126 : vector<16x1xf32>
    %128 = vector.broadcast %127 : vector<16x1xf32> to vector<16x128xf32>
    %129 = arith.subf %121, %128 : vector<16x128xf32>
    %cst_83 = arith.constant 7.812500e-03 : f32
    %130 = vector.broadcast %cst_83 : f32 to vector<16x1xf32>
    %131 = arith.mulf %123, %130 : vector<16x1xf32>
    %132 = vector.broadcast %131 : vector<16x1xf32> to vector<16x128xf32>
    %133 = arith.subf %120, %132 : vector<16x128xf32>
    %134 = math.atan2 %129, %133 : vector<16x128xf32>
    %c0_84 = arith.constant 0 : index
    %c5_85 = arith.constant 5 : index
    %c0_86 = arith.constant 0 : index
    %c0_87 = arith.constant 0 : index
    %135 = vector.load %arg3[%c0_84, %c5_85, %c0_86, %c0_87] : memref<1x6x16x128xf32, #tpu.memory_space<vmem>>, vector<1x1x16x128xf32>
    %136 = vector.shape_cast %135 : vector<1x1x16x128xf32> to vector<16x128xf32>
    %137 = vector.shape_cast %134 : vector<16x128xf32> to vector<1x1x16x128xf32>
    tpu.vector_store %arg3[%c0_84, %c5_85, %c0_86, %c0_87], %137 {strides = array<i32>} : memref<1x6x16x128xf32, #tpu.memory_space<vmem>>, vector<1x1x16x128xf32>,
    return
  }
  func.func @transform_0(%arg0: i32, %arg1: i32) -> (i32, i32, i32, i32) {
    %c0_i32 = arith.constant 0 : i32
    %c0_i32_0 = arith.constant 0 : i32
    %c0_i32_1 = arith.constant 0 : i32
    return %arg0, %c0_i32, %arg1, %c0_i32_0 : i32, i32, i32, i32
  }
  func.func @transform_1(%arg0: i32, %arg1: i32) -> (i32, i32, i32, i32) {
    %c0_i32 = arith.constant 0 : i32
    %c0_i32_0 = arith.constant 0 : i32
    %c0_i32_1 = arith.constant 0 : i32
    return %arg0, %c0_i32, %arg1, %c0_i32_0 : i32, i32, i32, i32
  }
}

</mosaic_0001>

<llo_original>
// kernel: tpu_custom_call.1
$region0: #{tpu_custom_call.1}
  #allocation0 [shape = 'u32[]', space=smem, size = 0x4, offset = 0x4, fixed_abs, tag = 'smem constant byte address 0x4 - core index']
  #allocation1 [shape = 'u32[144,128]{1,0:T(1,128)}', space=vmem, size = 0x12000, scoped, tag = 'internal scratch']
  %s0 = inlined_call_operand.hbm [shape: f32[2,7,16,128], index: 0, kind: input, shape index: {}]
  %s1 = inlined_call_operand.hbm [shape: f32[2,6,16,128], index: 1, kind: output, shape index: {}]
  %s2 = sld [smem:[#allocation0]]
  $region41: #{tpu_custom_call.1} parent=0
    _
  %s4 = ssub.s32 1, %s2
  %s5 = scalar_select 0, %s4, %s2
  $region1: #{tpu_custom_call.1} parent=0
    #allocation2 [shape = 'u8[114688]{0}', space=vmem, size = 0x1c000, scoped, tag = 'input window, operand 0']
    #allocation3 [shape = 's32[2]{0}', space=sflag, size = 0x8, scoped, tag = 'scoped memory for tpu_custom_call.1']
    #allocation4 [shape = 's32[2]{0}', space=sflag, size = 0x8, scoped, tag = 'scoped memory for tpu_custom_call.1']
    #allocation5 [shape = 'u8[98304]{0}', space=vmem, size = 0x18000, scoped, tag = 'output window, operand 0']
    %6 = vsyncpa [#allocation3], 0
    %s7 = scalar_lea.sflag [#allocation3], 1
    %8 = vsyncpa %s7, 0
    %9 = vsyncpa [#allocation4], 0
    %s10 = scalar_lea.sflag [#allocation4], 1
    %11 = vsyncpa %s10, 0
    loop: start=0, step=1, limit=4
    $region2: #{tpu_custom_call.1} parent=1 // loop_pre_header
      _
    $region3: #{tpu_custom_call.1} parent=1 // loop_header
      %s13 = sphi 0, %s17
      %p14 = scmp.ge.s32.totalorder %s13, 4
      %s20 = sphi 0, %s32
      %s21 = sphi 0, %s28
      %s22 = sphi 0, %s20
      %s23 = sphi 0, %s21
      %s24 = sphi 0, %s22
      %s25 = sphi 0, %s23
      %s37 = sphi 0, %s39
      %s40 = sphi 0, %s37
      %s41 = sphi 0, %s40
      %s57 = sphi 0, %s41
      %s65 = sphi 0, %s67
      %s68 = sphi 0, %s65
      %s69 = sphi 0, %s68
      %s85 = sphi 0, %s69
    $region4: #{tpu_custom_call.1} parent=1 // loop_header_branch
      %16 = sbr.rel (%p14) target = $region8
    $region5: #{tpu_custom_call.1} parent=1 // loop_body
      %s18 = ssub.s32 %s13, 1
      %s19 = ssub.s32 %s13, 2
      %s26 = sadd.s32 1, %s21
      %p27 = scmp.ge.s32.totalorder %s26, 1
      %s28 = scalar_select %p27, 0, %s26
      %s29 = sadd.s32 1, %s20
      %s30 = scalar_select %p27, %s29, %s20
      %p31 = scmp.ge.s32.totalorder %s30, 2
      %s32 = scalar_select %p31, 0, %s30
      %s33 = ssub.s32 %s20, %s32
      %s34 = ssub.s32 %s21, %s28
      %s35 = sor.u32 %s33, %s34
      %p36 = scmp.eq.s32.totalorder %s35, 0
      %s38 = sadd.s32 %s37, 1
      %s39 = scalar_select %p36, %s37, %s38
      %p42 = pneg %p36
      %p43 = scmp.eq.s32.totalorder %s13, 1
      %p44 = por %p42, %p43
      %p45 = scmp.ne.s32.totalorder %s37, %s40
      %p46 = scmp.eq.s32.totalorder %s13, 0
      %p47 = por %p45, %p46
      %p48 = scmp.ne.s32.totalorder %s37, %s40
      %p49 = scmp.eq.s32.totalorder %s18, 1
      %p50 = por %p48, %p49
      %p51 = scmp.ne.s32.totalorder %s40, %s41
      %p52 = scmp.eq.s32.totalorder %s18, 0
      %p53 = por %p51, %p52
      %p54 = scmp.ne.s32.totalorder %s40, %s41
      %p55 = scmp.eq.s32.totalorder %s19, 1
      %p56 = por %p54, %p55
      %p58 = scmp.ne.s32.totalorder %s41, %s57
      %p59 = scmp.eq.s32.totalorder %s19, 0
      %p60 = por %p58, %p59
      %s61 = ssub.s32 %s20, %s32
      %s62 = ssub.s32 %s21, %s28
      %s63 = sor.u32 %s61, %s62
      %p64 = scmp.eq.s32.totalorder %s63, 0
      %s66 = sadd.s32 %s65, 1
      %s67 = scalar_select %p64, %s65, %s66
      %p70 = pneg %p64
      %p71 = scmp.eq.s32.totalorder %s13, 1
      %p72 = por %p70, %p71
      %p73 = scmp.ne.s32.totalorder %s65, %s68
      %p74 = scmp.eq.s32.totalorder %s13, 0
      %p75 = por %p73, %p74
      %p76 = scmp.ne.s32.totalorder %s65, %s68
      %p77 = scmp.eq.s32.totalorder %s18, 1
      %p78 = por %p76, %p77
      %p79 = scmp.ne.s32.totalorder %s68, %s69
      %p80 = scmp.eq.s32.totalorder %s18, 0
      %p81 = por %p79, %p80
      %p82 = scmp.ne.s32.totalorder %s68, %s69
      %p83 = scmp.eq.s32.totalorder %s19, 1
      %p84 = por %p82, %p83
      %p86 = scmp.ne.s32.totalorder %s69, %s85
      %p87 = scmp.eq.s32.totalorder %s19, 0
      %p88 = por %p86, %p87
      %p89 = scmp.le.s32.totalorder 1, %s13
      %p90 = scmp.lt.s32.totalorder %s13, 3
      %p91 = pnand %p89, %p90
      %p92 = pneg %p91
      // Predicated region
      $region9: #{tpu_custom_call.1} parent=5 // pred_check
        _
      $region10: #{tpu_custom_call.1} parent=5 // pred_check_branch
        %94 = sbr.rel (%p91) target = $region12
      $region11: #{tpu_custom_call.1} parent=5 // pred_region
        %s95 = ssub.s32 %s13, 1
      $region12: #{tpu_custom_call.1} parent=5 // pred_fallthru
        _
      %p96 = scmp.lt.s32.totalorder %s13, 2
      // Predicated region
      $region13: #{tpu_custom_call.1} parent=5 // pred_check
        %p97 = pneg %p96
      $region14: #{tpu_custom_call.1} parent=5 // pred_check_branch
        %99 = sbr.rel (%p97) target = $region16
      $region15: #{tpu_custom_call.1} parent=5 // pred_region
        // Predicated region
        $region17: #{tpu_custom_call.1} parent=15 // pred_check
          %p100 = pneg %p47
        $region18: #{tpu_custom_call.1} parent=15 // pred_check_branch
          %102 = sbr.rel (%p100) target = $region20
        $region19: #{tpu_custom_call.1} parent=15 // pred_region
          %s103 = sand.u32 %s37, 1
          %s104 = scalar_lea.sflag [#allocation3], %s103
          %s105 = sand.u32 %s37, 1
          %s106 = smul.addr %s105, 112
          %s107 = scalar_lea.vmem [#allocation2], %s106
          %s108 = smul.u32 2, %s21
          %s110 = ssub.s32 1792, 1792
          %111 = vsyncadd %s104, %s110
          %s112 = smul.addr %s20, 14
          %s113 = sadd.s32 %s108, %s112
          %s114 = smul.addr %s113, 128
          %s115 = scalar_lea.hbm %s0, %s114
          %s116 = sshll.u32 %s107, 4
          %s117 = int_to_ptr.vmem [resolvable:$true] %s116
          %122 = dma.hbm_to_vmem [thread:$0]  %s115, 1792, %s117, %s104, 128, 128, 8
        $region20: #{tpu_custom_call.1} parent=15 // pred_fallthru
          _
      $region16: #{tpu_custom_call.1} parent=5 // pred_fallthru
        _
      %p123 = scmp.le.s32.totalorder 1, %s13
      %p124 = scmp.lt.s32.totalorder %s13, 3
      %p125 = pnand %p123, %p124
      %p126 = pneg %p125
      // Predicated region
      $region21: #{tpu_custom_call.1} parent=5 // pred_check
        _
      $region22: #{tpu_custom_call.1} parent=5 // pred_check_branch
        %128 = sbr.rel (%p125) target = $region24
      $region23: #{tpu_custom_call.1} parent=5 // pred_region
        %s129 = ssub.s32 %s13, 1
        %s130 = sand.u32 %s40, 1
        %s131 = scalar_lea.sflag [#allocation3], %s130
        %s132 = sand.u32 %s40, 1
        %s133 = smul.addr %s132, 112
        %s134 = scalar_lea.vmem [#allocation2], %s133
        // Predicated region
        $region25: #{tpu_custom_call.1} parent=23 // pred_check
          %p135 = pneg %p53
        $region26: #{tpu_custom_call.1} parent=23 // pred_check_branch
          %137 = sbr.rel (%p135) target = $region28
        $region27: #{tpu_custom_call.1} parent=23 // pred_region
          %138 = dma.done %s131, 1792
        $region28: #{tpu_custom_call.1} parent=23 // pred_fallthru
          _
        %s139 = sand.u32 %s40, 1
        %s140 = scalar_lea.sflag [#allocation3], %s139
        %s141 = sand.u32 %s40, 1
        %s142 = smul.addr %s141, 112
        %s143 = scalar_lea.vmem [#allocation2], %s142
        %p144 = pneg %p53
        %p145 = pneg %p50
        %p146 = pneg %p81
        %p147 = pneg %p78
        %s148 = sand.u32 %s68, 1
        %s149 = scalar_lea.sflag [#allocation4], %s148
        %s150 = sand.u32 %s68, 1
        %s151 = smul.addr %s150, 96
        %s152 = scalar_lea.vmem [#allocation5], %s151
        %s153 = smul.u32 2, %s23
        %s154 = smul.u32 2, %s23
        %s155 = scalar_lea.vmem %s134, 16 [#allocation2]
        %v156 = vld [vmem:[%s155] sm:$0xff]
        %v157 = vld [vmem:[%s155 + $0x8] sm:$0xff]
        %v158 = vld [vmem:[%s134] sm:$0xff]
        %v159 = vld [vmem:[%s134 + $0x8] sm:$0xff]
        %v160 = vsub.f32 %v156, %v158
        %v161 = vsub.f32 %v157, %v159
        %v162 = vand.u32 2147483647, %v160
        %vm163 = vcmp.le.f32.partialorder %v162, 0.7853982
        %vm164 = vcmp.lt.s32.totalorder %v160, 0
        %v165 = vand.u32 %v160, 2139095040
        %v166 = vshrl.u32 %v165, 23
        %v167 = vsub.s32 %v166, 127
        %v168 = vand.u32 2147483647, %v160
        %v169 = vand.u32 %v168, 8388607
        %v170 = vor.u32 %v169, 8388608
        %v171 = vsub.s32 0, %v170
        %v172 = vadd.s32 %v167, 1
        %vm173 = vcmp.gt.s32.totalorder %v172, 0
        %v174 = vsel %vm173, %v172, 0
        %v175 = vshrl.u32 %v174, 5
        %v176 = vand.u32 %v174, 31
        %v177 = vsub.s32 32, %v176
        %v178 = vshrl.u32 683565275, %v177
        %v179 = vshll.u32 683565275, %v176
        %v180 = vshrl.u32 2475754826, %v177
        %v181 = vor.u32 %v179, %v180
        %v182 = vshll.u32 2475754826, %v176
        %v183 = vshrl.u32 2131351028, %v177
        %v184 = vor.u32 %v182, %v183
        %v185 = vshll.u32 2131351028, %v176
        %v186 = vshrl.u32 2102212464, %v177
        %v187 = vor.u32 %v185, %v186
        %v188 = vshll.u32 2102212464, %v176
        %v189 = vshrl.u32 920167782, %v177
        %v190 = vor.u32 %v188, %v189
        %v191 = vshll.u32 920167782, %v176
        %v192 = vshrl.u32 1326507024, %v177
        %v193 = vor.u32 %v191, %v192
        %vm194 = vcmp.lt.s32.totalorder %v175, 1
        %vm195 = vcmp.lt.s32.totalorder %v175, 2
        %vm196 = vcmp.lt.s32.totalorder %v175, 3
        %vm197 = vcmp.lt.s32.totalorder %v175, 4
        %v198 = vsel %vm194, %v178, %v181
        %v199 = vsel %vm197, %v187, 2102212464
        %v200 = vsel %vm196, %v184, %v199
        %v201 = vsel %vm195, %v198, %v200
        %v202 = vsel %vm194, %v181, %v184
        %v203 = vsel %vm197, %v190, 920167782
        %v204 = vsel %vm196, %v187, %v203
        %v205 = vsel %vm195, %v202, %v204
        %v206 = vsel %vm194, %v184, %v187
        %v207 = vsel %vm197, %v193, 1326507024
        %v208 = vsel %vm196, %v190, %v207
        %v209 = vsel %vm195, %v206, %v208
        %v210 = vshll.u32 %v170, 8
        %v211 = vmul.u32.u64.compose %v210, %v209
        %v212 = vextract.low.u32 %v211
        %v213 = vextract.high.u32 %v211
        %v214 = vmul.u32.u64.compose %v210, %v205
        %v215 = vextract.low.u32 %v214
        %v216 = vextract.high.u32 %v214
        %v217 = vmul.u32 %v210, %v201
        %v218 = vadd.s32 %v213, %v215
        %vm219 = vc.u32 %v213, %v215
        %v220 = vadd.s32 %v216, 1
        %v221 = vsel %vm219, %v220, %v216
        %v222 = vadd.s32 %v217, %v221
        %v223 = vadd.s32 %v222, 536870912
        %v224 = vshrl.u32 %v223, 30
        %v225 = vshll.u32 %v224, 30
        %v226 = vsub.s32 %v222, %v225
        %vm227 = vcmp.lt.s32.totalorder %v226, 0
        %v228 = vsub.s32 0, %v226
        %v229 = vsel %vm227, %v228, %v226
        %v230 = vclz %v229
        %v231 = vsub.s32 %v230, 2
        %vm232 = vcmp.gt.s32.totalorder 0, %v231
        %v233 = vsel %vm232, 0, %v231
        %v234 = vsub.s32 32, %v233
        %v235 = vshll.u32 %v226, %v233
        %v236 = vshrl.u32 %v218, %v234
        %v237 = vor.u32 %v235, %v236
        %v238 = vsub.s32 4294967266, %v233
        %v239 = vadd.s32 %v238, 127
        %v240 = vshll.u32 %v239, 23
        %v241 = vor.u32 4788187, %v240
        %v242 = vand.u32 2147483647, %v241
        %v244 = vcvt.s32.f32 %v237
        %v245 = vmul.f32 %v244, %v242
        %v246 = vxor.u32 %v245, 2147483648
        %v247 = vsel %vm164, %v246, %v245
        %v248 = vsub.s32 4, %v224
        %v249 = vsel %vm164, %v248, %v224
        %v250 = vsel %vm163, %v160, %v247
        %v251 = vsel %vm163, 0, %v249
        %v252 = vcosq.f32.pop %v250
        %v253 = vsinq.f32.pop %v250
        %vm254 = vweird.f32 %v160
        %v255 = vand.u32 %v251, 3
        %vm256 = vcmp.lt.s32.totalorder %v255, 2
        %vm257 = vcmp.eq.s32.totalorder %v255, 0
        %v258 = vxor.u32 %v253, 2147483648
        %v259 = vsel %vm257, %v252, %v258
        %vm260 = vcmp.eq.s32.totalorder %v255, 2
        %v261 = vxor.u32 %v252, 2147483648
        %v262 = vsel %vm260, %v261, %v253
        %v263 = vsel %vm256, %v259, %v262
        %v264 = vsel %vm254, nan, %v263
        %v265 = vand.u32 2147483647, %v161
        %vm266 = vcmp.le.f32.partialorder %v265, 0.7853982
        %vm267 = vcmp.lt.s32.totalorder %v161, 0
        %v268 = vand.u32 %v161, 2139095040
        %v269 = vshrl.u32 %v268, 23
        %v270 = vsub.s32 %v269, 127
        %v271 = vand.u32 2147483647, %v161
        %v272 = vand.u32 %v271, 8388607
        %v273 = vor.u32 %v272, 8388608
        %v274 = vsub.s32 0, %v273
        %v275 = vadd.s32 %v270, 1
        %vm276 = vcmp.gt.s32.totalorder %v275, 0
        %v277 = vsel %vm276, %v275, 0
        %v278 = vshrl.u32 %v277, 5
        %v279 = vand.u32 %v277, 31
        %v280 = vsub.s32 32, %v279
        %v281 = vshrl.u32 683565275, %v280
        %v282 = vshll.u32 683565275, %v279
        %v283 = vshrl.u32 2475754826, %v280
        %v284 = vor.u32 %v282, %v283
        %v285 = vshll.u32 2475754826, %v279
        %v286 = vshrl.u32 2131351028, %v280
        %v287 = vor.u32 %v285, %v286
        %v288 = vshll.u32 2131351028, %v279
        %v289 = vshrl.u32 2102212464, %v280
        %v290 = vor.u32 %v288, %v289
        %v291 = vshll.u32 2102212464, %v279
        %v292 = vshrl.u32 920167782, %v280
        %v293 = vor.u32 %v291, %v292
        %v294 = vshll.u32 920167782, %v279
        %v295 = vshrl.u32 1326507024, %v280
        %v296 = vor.u32 %v294, %v295
        %vm297 = vcmp.lt.s32.totalorder %v278, 1
        %vm298 = vcmp.lt.s32.totalorder %v278, 2
        %vm299 = vcmp.lt.s32.totalorder %v278, 3
        %vm300 = vcmp.lt.s32.totalorder %v278, 4
        %v301 = vsel %vm297, %v281, %v284
        %v302 = vsel %vm300, %v290, 2102212464
        %v303 = vsel %vm299, %v287, %v302
        %v304 = vsel %vm298, %v301, %v303
        %v305 = vsel %vm297, %v284, %v287
        %v306 = vsel %vm300, %v293, 920167782
        %v307 = vsel %vm299, %v290, %v306
        %v308 = vsel %vm298, %v305, %v307
        %v309 = vsel %vm297, %v287, %v290
        %v310 = vsel %vm300, %v296, 1326507024
        %v311 = vsel %vm299, %v293, %v310
        %v312 = vsel %vm298, %v309, %v311
        %v313 = vshll.u32 %v273, 8
        %v314 = vmul.u32.u64.compose %v313, %v312
        %v315 = vextract.low.u32 %v314
        %v316 = vextract.high.u32 %v314
        %v317 = vmul.u32.u64.compose %v313, %v308
        %v318 = vextract.low.u32 %v317
        %v319 = vextract.high.u32 %v317
        %v320 = vmul.u32 %v313, %v304
        %v321 = vadd.s32 %v316, %v318
        %vm322 = vc.u32 %v316, %v318
        %v323 = vadd.s32 %v319, 1
        %v324 = vsel %vm322, %v323, %v319
        %v325 = vadd.s32 %v320, %v324
        %v326 = vadd.s32 %v325, 536870912
        %v327 = vshrl.u32 %v326, 30
        %v328 = vshll.u32 %v327, 30
        %v329 = vsub.s32 %v325, %v328
        %vm330 = vcmp.lt.s32.totalorder %v329, 0
        %v331 = vsub.s32 0, %v329
        %v332 = vsel %vm330, %v331, %v329
        %v333 = vclz %v332
        %v334 = vsub.s32 %v333, 2
        %vm335 = vcmp.gt.s32.totalorder 0, %v334
        %v336 = vsel %vm335, 0, %v334
        %v337 = vsub.s32 32, %v336
        %v338 = vshll.u32 %v329, %v336
        %v339 = vshrl.u32 %v321, %v337
        %v340 = vor.u32 %v338, %v339
        %v341 = vsub.s32 4294967266, %v336
        %v342 = vadd.s32 %v341, 127
        %v343 = vshll.u32 %v342, 23
        %v344 = vor.u32 4788187, %v343
        %v345 = vand.u32 2147483647, %v344
        %v347 = vcvt.s32.f32 %v340
        %v348 = vmul.f32 %v347, %v345
        %v349 = vxor.u32 %v348, 2147483648
        %v350 = vsel %vm267, %v349, %v348
        %v351 = vsub.s32 4, %v327
        %v352 = vsel %vm267, %v351, %v327
        %v353 = vsel %vm266, %v161, %v350
        %v354 = vsel %vm266, 0, %v352
        %v355 = vcosq.f32.pop %v353
        %v356 = vsinq.f32.pop %v353
        %vm357 = vweird.f32 %v161
        %v358 = vand.u32 %v354, 3
        %vm359 = vcmp.lt.s32.totalorder %v358, 2
        %vm360 = vcmp.eq.s32.totalorder %v358, 0
        %v361 = vxor.u32 %v356, 2147483648
        %v362 = vsel %vm360, %v355, %v361
        %vm363 = vcmp.eq.s32.totalorder %v358, 2
        %v364 = vxor.u32 %v355, 2147483648
        %v365 = vsel %vm363, %v364, %v356
        %v366 = vsel %vm359, %v362, %v365
        %v367 = vsel %vm357, nan, %v366
        %v368 = vand.u32 2147483647, %v160
        %vm369 = vcmp.le.f32.partialorder %v368, 0.7853982
        %vm370 = vcmp.lt.s32.totalorder %v160, 0
        %v371 = vand.u32 %v160, 2139095040
        %v372 = vshrl.u32 %v371, 23
        %v373 = vsub.s32 %v372, 127
        %v374 = vand.u32 2147483647, %v160
        %v375 = vand.u32 %v374, 8388607
        %v376 = vor.u32 %v375, 8388608
        %v377 = vsub.s32 0, %v376
        %v378 = vadd.s32 %v373, 1
        %vm379 = vcmp.gt.s32.totalorder %v378, 0
        %v380 = vsel %vm379, %v378, 0
        %v381 = vshrl.u32 %v380, 5
        %v382 = vand.u32 %v380, 31
        %v383 = vsub.s32 32, %v382
        %v384 = vshrl.u32 683565275, %v383
        %v385 = vshll.u32 683565275, %v382
        %v386 = vshrl.u32 2475754826, %v383
        %v387 = vor.u32 %v385, %v386
        %v388 = vshll.u32 2475754826, %v382
        %v389 = vshrl.u32 2131351028, %v383
        %v390 = vor.u32 %v388, %v389
        %v391 = vshll.u32 2131351028, %v382
        %v392 = vshrl.u32 2102212464, %v383
        %v393 = vor.u32 %v391, %v392
        %v394 = vshll.u32 2102212464, %v382
        %v395 = vshrl.u32 920167782, %v383
        %v396 = vor.u32 %v394, %v395
        %v397 = vshll.u32 920167782, %v382
        %v398 = vshrl.u32 1326507024, %v383
        %v399 = vor.u32 %v397, %v398
        %vm400 = vcmp.lt.s32.totalorder %v381, 1
        %vm401 = vcmp.lt.s32.totalorder %v381, 2
        %vm402 = vcmp.lt.s32.totalorder %v381, 3
        %vm403 = vcmp.lt.s32.totalorder %v381, 4
        %v404 = vsel %vm400, %v384, %v387
        %v405 = vsel %vm403, %v393, 2102212464
        %v406 = vsel %vm402, %v390, %v405
        %v407 = vsel %vm401, %v404, %v406
        %v408 = vsel %vm400, %v387, %v390
        %v409 = vsel %vm403, %v396, 920167782
        %v410 = vsel %vm402, %v393, %v409
        %v411 = vsel %vm401, %v408, %v410
        %v412 = vsel %vm400, %v390, %v393
        %v413 = vsel %vm403, %v399, 1326507024
        %v414 = vsel %vm402, %v396, %v413
        %v415 = vsel %vm401, %v412, %v414
        %v416 = vshll.u32 %v376, 8
        %v417 = vmul.u32.u64.compose %v416, %v415
        %v418 = vextract.low.u32 %v417
        %v419 = vextract.high.u32 %v417
        %v420 = vmul.u32.u64.compose %v416, %v411
        %v421 = vextract.low.u32 %v420
        %v422 = vextract.high.u32 %v420
        %v423 = vmul.u32 %v416, %v407
        %v424 = vadd.s32 %v419, %v421
        %vm425 = vc.u32 %v419, %v421
        %v426 = vadd.s32 %v422, 1
        %v427 = vsel %vm425, %v426, %v422
        %v428 = vadd.s32 %v423, %v427
        %v429 = vadd.s32 %v428, 536870912
        %v430 = vshrl.u32 %v429, 30
        %v431 = vshll.u32 %v430, 30
        %v432 = vsub.s32 %v428, %v431
        %vm433 = vcmp.lt.s32.totalorder %v432, 0
        %v434 = vsub.s32 0, %v432
        %v435 = vsel %vm433, %v434, %v432
        %v436 = vclz %v435
        %v437 = vsub.s32 %v436, 2
        %vm438 = vcmp.gt.s32.totalorder 0, %v437
        %v439 = vsel %vm438, 0, %v437
        %v440 = vsub.s32 32, %v439
        %v441 = vshll.u32 %v432, %v439
        %v442 = vshrl.u32 %v424, %v440
        %v443 = vor.u32 %v441, %v442
        %v444 = vsub.s32 4294967266, %v439
        %v445 = vadd.s32 %v444, 127
        %v446 = vshll.u32 %v445, 23
        %v447 = vor.u32 4788187, %v446
        %v448 = vand.u32 2147483647, %v447
        %v450 = vcvt.s32.f32 %v443
        %v451 = vmul.f32 %v450, %v448
        %v452 = vxor.u32 %v451, 2147483648
        %v453 = vsel %vm370, %v452, %v451
        %v454 = vsub.s32 4, %v430
        %v455 = vsel %vm370, %v454, %v430
        %v456 = vsel %vm369, %v160, %v453
        %v457 = vsel %vm369, 0, %v455
        %v458 = vcosq.f32.pop %v456
        %v459 = vsinq.f32.pop %v456
        %vm460 = vweird.f32 %v160
        %v461 = vadd.s32 %v457, 3
        %v462 = vand.u32 %v461, 3
        %vm463 = vcmp.lt.s32.totalorder %v462, 2
        %vm464 = vcmp.eq.s32.totalorder %v462, 0
        %v465 = vxor.u32 %v459, 2147483648
        %v466 = vsel %vm464, %v458, %v465
        %vm467 = vcmp.eq.s32.totalorder %v462, 2
        %v468 = vxor.u32 %v458, 2147483648
        %v469 = vsel %vm467, %v468, %v459
        %v470 = vsel %vm463, %v466, %v469
        %v471 = vsel %vm460, nan, %v470
        %v472 = vand.u32 2147483647, %v161
        %vm473 = vcmp.le.f32.partialorder %v472, 0.7853982
        %vm474 = vcmp.lt.s32.totalorder %v161, 0
        %v475 = vand.u32 %v161, 2139095040
        %v476 = vshrl.u32 %v475, 23
        %v477 = vsub.s32 %v476, 127
        %v478 = vand.u32 2147483647, %v161
        %v479 = vand.u32 %v478, 8388607
        %v480 = vor.u32 %v479, 8388608
        %v481 = vsub.s32 0, %v480
        %v482 = vadd.s32 %v477, 1
        %vm483 = vcmp.gt.s32.totalorder %v482, 0
        %v484 = vsel %vm483, %v482, 0
        %v485 = vshrl.u32 %v484, 5
        %v486 = vand.u32 %v484, 31
        %v487 = vsub.s32 32, %v486
        %v488 = vshrl.u32 683565275, %v487
        %v489 = vshll.u32 683565275, %v486
        %v490 = vshrl.u32 2475754826, %v487
        %v491 = vor.u32 %v489, %v490
        %v492 = vshll.u32 2475754826, %v486
        %v493 = vshrl.u32 2131351028, %v487
        %v494 = vor.u32 %v492, %v493
        %v495 = vshll.u32 2131351028, %v486
        %v496 = vshrl.u32 2102212464, %v487
        %v497 = vor.u32 %v495, %v496
        %v498 = vshll.u32 2102212464, %v486
        %v499 = vshrl.u32 920167782, %v487
        %v500 = vor.u32 %v498, %v499
        %v501 = vshll.u32 920167782, %v486
        %v502 = vshrl.u32 1326507024, %v487
        %v503 = vor.u32 %v501, %v502
        %vm504 = vcmp.lt.s32.totalorder %v485, 1
        %vm505 = vcmp.lt.s32.totalorder %v485, 2
        %vm506 = vcmp.lt.s32.totalorder %v485, 3
        %vm507 = vcmp.lt.s32.totalorder %v485, 4
        %v508 = vsel %vm504, %v488, %v491
        %v509 = vsel %vm507, %v497, 2102212464
        %v510 = vsel %vm506, %v494, %v509
        %v511 = vsel %vm505, %v508, %v510
        %v512 = vsel %vm504, %v491, %v494
        %v513 = vsel %vm507, %v500, 920167782
        %v514 = vsel %vm506, %v497, %v513
        %v515 = vsel %vm505, %v512, %v514
        %v516 = vsel %vm504, %v494, %v497
        %v517 = vsel %vm507, %v503, 1326507024
        %v518 = vsel %vm506, %v500, %v517
        %v519 = vsel %vm505, %v516, %v518
        %v520 = vshll.u32 %v480, 8
        %v521 = vmul.u32.u64.compose %v520, %v519
        %v522 = vextract.low.u32 %v521
        %v523 = vextract.high.u32 %v521
        %v524 = vmul.u32.u64.compose %v520, %v515
        %v525 = vextract.low.u32 %v524
        %v526 = vextract.high.u32 %v524
        %v527 = vmul.u32 %v520, %v511
        %v528 = vadd.s32 %v523, %v525
        %vm529 = vc.u32 %v523, %v525
        %v530 = vadd.s32 %v526, 1
        %v531 = vsel %vm529, %v530, %v526
        %v532 = vadd.s32 %v527, %v531
        %v533 = vadd.s32 %v532, 536870912
        %v534 = vshrl.u32 %v533, 30
        %v535 = vshll.u32 %v534, 30
        %v536 = vsub.s32 %v532, %v535
        %vm537 = vcmp.lt.s32.totalorder %v536, 0
        %v538 = vsub.s32 0, %v536
        %v539 = vsel %vm537, %v538, %v536
        %v540 = vclz %v539
        %v541 = vsub.s32 %v540, 2
        %vm542 = vcmp.gt.s32.totalorder 0, %v541
        %v543 = vsel %vm542, 0, %v541
        %v544 = vsub.s32 32, %v543
        %v545 = vshll.u32 %v536, %v543
        %v546 = vshrl.u32 %v528, %v544
        %v547 = vor.u32 %v545, %v546
        %v548 = vsub.s32 4294967266, %v543
        %v549 = vadd.s32 %v548, 127
        %v550 = vshll.u32 %v549, 23
        %v551 = vor.u32 4788187, %v550
        %v552 = vand.u32 2147483647, %v551
        %v554 = vcvt.s32.f32 %v547
        %v555 = vmul.f32 %v554, %v552
        %v556 = vxor.u32 %v555, 2147483648
        %v557 = vsel %vm474, %v556, %v555
        %v558 = vsub.s32 4, %v534
        %v559 = vsel %vm474, %v558, %v534
        %v560 = vsel %vm473, %v161, %v557
        %v561 = vsel %vm473, 0, %v559
        %v562 = vcosq.f32.pop %v560
        %v563 = vsinq.f32.pop %v560
        %vm564 = vweird.f32 %v161
        %v565 = vadd.s32 %v561, 3
        %v566 = vand.u32 %v565, 3
        %vm567 = vcmp.lt.s32.totalorder %v566, 2
        %vm568 = vcmp.eq.s32.totalorder %v566, 0
        %v569 = vxor.u32 %v563, 2147483648
        %v570 = vsel %vm568, %v562, %v569
        %vm571 = vcmp.eq.s32.totalorder %v566, 2
        %v572 = vxor.u32 %v562, 2147483648
        %v573 = vsel %vm571, %v572, %v563
        %v574 = vsel %vm567, %v570, %v573
        %v575 = vsel %vm564, nan, %v574
        %576 = vadd.xlane.f32.xlu0 %v264
        %v577 = vpop.xlane.xlu0 %576
        %578 = vadd.xlane.f32.xlu0 %v367
        %v579 = vpop.xlane.xlu0 %578
        %580 = vadd.xlane.f32.xlu0 %v471
        %v581 = vpop.xlane.xlu0 %580
        %582 = vadd.xlane.f32.xlu0 %v575
        %v583 = vpop.xlane.xlu0 %582
        %v584 = vmul.f32 %v581, 0.0078125
        %v585 = vmul.f32 %v583, 0.0078125
        %v586 = vsub.f32 %v471, %v584
        %v587 = vsub.f32 %v575, %v585
        %v588 = vmul.f32 %v577, 0.0078125
        %v589 = vmul.f32 %v579, 0.0078125
        %v590 = vsub.f32 %v264, %v588
        %v591 = vsub.f32 %v367, %v589
        %v592 = vand.u32 2147483647, %v590
        %v593 = vand.u32 2147483647, %v586
        %v594 = vmin.f32 %v592, %v593
        %v595 = vmax.f32 %v592, %v593
        %v596 = vrcp.pop %v595
        %v597 = vmul.f32 %v594, %v596
        %v598 = vmul.f32 %v597, %v597
        %v599 = vmul.f32 0.002785687, %v598
        %v600 = vadd.f32 %v599, -0.015866
        %v601 = vmul.f32 %v600, %v598
        %v602 = vadd.f32 %v601, 0.04247222
        %v603 = vmul.f32 %v602, %v598
        %v604 = vadd.f32 %v603, -0.074975304
        %v605 = vmul.f32 %v604, %v598
        %v606 = vadd.f32 %v605, 0.1064488
        %v607 = vmul.f32 %v606, %v598
        %v608 = vadd.f32 %v607, -0.14207031
        %v609 = vmul.f32 %v608, %v598
        %v610 = vadd.f32 %v609, 0.19993454
        %v611 = vmul.f32 %v610, %v598
        %v612 = vadd.f32 %v611, -0.33333147
        %v613 = vmul.f32 %v612, %v598
        %v614 = vmul.f32 %v613, %v597
        %v615 = vadd.f32 %v614, %v597
        %vm616 = vcmp.gt.f32.partialorder %v593, %v592
        %v617 = vsub.f32 1.5707964, %v615
        %v618 = vsel %vm616, %v617, %v615
        %vm619 = vcmp.lt.f32.partialorder %v590, 0.0
        %v620 = vsub.f32 3.1415927, %v618
        %v621 = vsel %vm619, %v620, %v618
        %vm622 = vcmp.lt.s32.totalorder %v590, 0
        %v623 = vsel %vm622, 3.1415927, 0.0
        %vm624 = vcmp.eq.f32.partialorder %v586, 0.0
        %v625 = vsel %vm624, %v623, %v621
        %vm626 = vcmp.ne.f32.partialorder %v590, %v590
        %vm627 = vcmp.ne.f32.partialorder %v586, %v586
        %vm628 = vmor %vm626, %vm627
        %v629 = vsel %vm628, nan, %v625
        %vm630 = vcmp.lt.f32.partialorder %v590, 0.0
        %v631 = vsel %vm630, 2.3561945, 0.7853982
        %vm632 = vcmp.eq.s32.totalorder %v592, inf
        %vm633 = vcmp.eq.s32.totalorder %v593, inf
        %vm634 = vmand %vm632, %vm633
        %v635 = vsel %vm634, %v631, %v629
        %v636 = vand.u32 2147483647, %v635
        %v637 = vand.u32 %v586, 2147483648
        %v638 = vor.u32 %v636, %v637
        %v639 = vand.u32 2147483647, %v591
        %v640 = vand.u32 2147483647, %v587
        %v641 = vmin.f32 %v639, %v640
        %v642 = vmax.f32 %v639, %v640
        %v643 = vrcp.pop %v642
        %v644 = vmul.f32 %v641, %v643
        %v645 = vmul.f32 %v644, %v644
        %v646 = vmul.f32 0.002785687, %v645
        %v647 = vadd.f32 %v646, -0.015866
        %v648 = vmul.f32 %v647, %v645
        %v649 = vadd.f32 %v648, 0.04247222
        %v650 = vmul.f32 %v649, %v645
        %v651 = vadd.f32 %v650, -0.074975304
        %v652 = vmul.f32 %v651, %v645
        %v653 = vadd.f32 %v652, 0.1064488
        %v654 = vmul.f32 %v653, %v645
        %v655 = vadd.f32 %v654, -0.14207031
        %v656 = vmul.f32 %v655, %v645
        %v657 = vadd.f32 %v656, 0.19993454
        %v658 = vmul.f32 %v657, %v645
        %v659 = vadd.f32 %v658, -0.33333147
        %v660 = vmul.f32 %v659, %v645
        %v661 = vmul.f32 %v660, %v644
        %v662 = vadd.f32 %v661, %v644
        %vm663 = vcmp.gt.f32.partialorder %v640, %v639
        %v664 = vsub.f32 1.5707964, %v662
        %v665 = vsel %vm663, %v664, %v662
        %vm666 = vcmp.lt.f32.partialorder %v591, 0.0
        %v667 = vsub.f32 3.1415927, %v665
        %v668 = vsel %vm666, %v667, %v665
        %vm669 = vcmp.lt.s32.totalorder %v591, 0
        %v670 = vsel %vm669, 3.1415927, 0.0
        %vm671 = vcmp.eq.f32.partialorder %v587, 0.0
        %v672 = vsel %vm671, %v670, %v668
        %vm673 = vcmp.ne.f32.partialorder %v591, %v591
        %vm674 = vcmp.ne.f32.partialorder %v587, %v587
        %vm675 = vmor %vm673, %vm674
        %v676 = vsel %vm675, nan, %v672
        %vm677 = vcmp.lt.f32.partialorder %v591, 0.0
        %v678 = vsel %vm677, 2.3561945, 0.7853982
        %vm679 = vcmp.eq.s32.totalorder %v639, inf
        %vm680 = vcmp.eq.s32.totalorder %v640, inf
        %vm681 = vmand %vm679, %vm680
        %v682 = vsel %vm681, %v678, %v676
        %v683 = vand.u32 2147483647, %v682
        %v684 = vand.u32 %v587, 2147483648
        %v685 = vor.u32 %v683, %v684
        %686 = vst [vmem:[%s152] sm:$0xff] %v638
        %687 = vst [vmem:[%s152 + $0x8] sm:$0xff] %v685
        %s688 = scalar_lea.vmem %s134, 32 [#allocation2]
        %v689 = vld [vmem:[%s688] sm:$0xff]
        %v690 = vld [vmem:[%s688 + $0x8] sm:$0xff]
        %v691 = vld [vmem:[%s134] sm:$0xff]
        %v692 = vld [vmem:[%s134 + $0x8] sm:$0xff]
        %v693 = vsub.f32 %v689, %v691
        %v694 = vsub.f32 %v690, %v692
        %v695 = vand.u32 2147483647, %v693
        %vm696 = vcmp.le.f32.partialorder %v695, 0.7853982
        %vm697 = vcmp.lt.s32.totalorder %v693, 0
        %v698 = vand.u32 %v693, 2139095040
        %v699 = vshrl.u32 %v698, 23
        %v700 = vsub.s32 %v699, 127
        %v701 = vand.u32 2147483647, %v693
        %v702 = vand.u32 %v701, 8388607
        %v703 = vor.u32 %v702, 8388608
        %v704 = vsub.s32 0, %v703
        %v705 = vadd.s32 %v700, 1
        %vm706 = vcmp.gt.s32.totalorder %v705, 0
        %v707 = vsel %vm706, %v705, 0
        %v708 = vshrl.u32 %v707, 5
        %v709 = vand.u32 %v707, 31
        %v710 = vsub.s32 32, %v709
        %v711 = vshrl.u32 683565275, %v710
        %v712 = vshll.u32 683565275, %v709
        %v713 = vshrl.u32 2475754826, %v710
        %v714 = vor.u32 %v712, %v713
        %v715 = vshll.u32 2475754826, %v709
        %v716 = vshrl.u32 2131351028, %v710
        %v717 = vor.u32 %v715, %v716
        %v718 = vshll.u32 2131351028, %v709
        %v719 = vshrl.u32 2102212464, %v710
        %v720 = vor.u32 %v718, %v719
        %v721 = vshll.u32 2102212464, %v709
        %v722 = vshrl.u32 920167782, %v710
        %v723 = vor.u32 %v721, %v722
        %v724 = vshll.u32 920167782, %v709
        %v725 = vshrl.u32 1326507024, %v710
        %v726 = vor.u32 %v724, %v725
        %vm727 = vcmp.lt.s32.totalorder %v708, 1
        %vm728 = vcmp.lt.s32.totalorder %v708, 2
        %vm729 = vcmp.lt.s32.totalorder %v708, 3
        %vm730 = vcmp.lt.s32.totalorder %v708, 4
        %v731 = vsel %vm727, %v711, %v714
        %v732 = vsel %vm730, %v720, 2102212464
        %v733 = vsel %vm729, %v717, %v732
        %v734 = vsel %vm728, %v731, %v733
        %v735 = vsel %vm727, %v714, %v717
        %v736 = vsel %vm730, %v723, 920167782
        %v737 = vsel %vm729, %v720, %v736
        %v738 = vsel %vm728, %v735, %v737
        %v739 = vsel %vm727, %v717, %v720
        %v740 = vsel %vm730, %v726, 1326507024
        %v741 = vsel %vm729, %v723, %v740
        %v742 = vsel %vm728, %v739, %v741
        %v743 = vshll.u32 %v703, 8
        %v744 = vmul.u32.u64.compose %v743, %v742
        %v745 = vextract.low.u32 %v744
        %v746 = vextract.high.u32 %v744
        %v747 = vmul.u32.u64.compose %v743, %v738
        %v748 = vextract.low.u32 %v747
        %v749 = vextract.high.u32 %v747
        %v750 = vmul.u32 %v743, %v734
        %v751 = vadd.s32 %v746, %v748
        %vm752 = vc.u32 %v746, %v748
        %v753 = vadd.s32 %v749, 1
        %v754 = vsel %vm752, %v753, %v749
        %v755 = vadd.s32 %v750, %v754
        %v756 = vadd.s32 %v755, 536870912
        %v757 = vshrl.u32 %v756, 30
        %v758 = vshll.u32 %v757, 30
        %v759 = vsub.s32 %v755, %v758
        %vm760 = vcmp.lt.s32.totalorder %v759, 0
        %v761 = vsub.s32 0, %v759
        %v762 = vsel %vm760, %v761, %v759
        %v763 = vclz %v762
        %v764 = vsub.s32 %v763, 2
        %vm765 = vcmp.gt.s32.totalorder 0, %v764
        %v766 = vsel %vm765, 0, %v764
        %v767 = vsub.s32 32, %v766
        %v768 = vshll.u32 %v759, %v766
        %v769 = vshrl.u32 %v751, %v767
        %v770 = vor.u32 %v768, %v769
        %v771 = vsub.s32 4294967266, %v766
        %v772 = vadd.s32 %v771, 127
        %v773 = vshll.u32 %v772, 23
        %v774 = vor.u32 4788187, %v773
        %v775 = vand.u32 2147483647, %v774
        %v777 = vcvt.s32.f32 %v770
        %v778 = vmul.f32 %v777, %v775
        %v779 = vxor.u32 %v778, 2147483648
        %v780 = vsel %vm697, %v779, %v778
        %v781 = vsub.s32 4, %v757
        %v782 = vsel %vm697, %v781, %v757
        %v783 = vsel %vm696, %v693, %v780
        %v784 = vsel %vm696, 0, %v782
        %v785 = vcosq.f32.pop %v783
        %v786 = vsinq.f32.pop %v783
        %vm787 = vweird.f32 %v693
        %v788 = vand.u32 %v784, 3
        %vm789 = vcmp.lt.s32.totalorder %v788, 2
        %vm790 = vcmp.eq.s32.totalorder %v788, 0
        %v791 = vxor.u32 %v786, 2147483648
        %v792 = vsel %vm790, %v785, %v791
        %vm793 = vcmp.eq.s32.totalorder %v788, 2
        %v794 = vxor.u32 %v785, 2147483648
        %v795 = vsel %vm793, %v794, %v786
        %v796 = vsel %vm789, %v792, %v795
        %v797 = vsel %vm787, nan, %v796
        %v798 = vand.u32 2147483647, %v694
        %vm799 = vcmp.le.f32.partialorder %v798, 0.7853982
        %vm800 = vcmp.lt.s32.totalorder %v694, 0
        %v801 = vand.u32 %v694, 2139095040
        %v802 = vshrl.u32 %v801, 23
        %v803 = vsub.s32 %v802, 127
        %v804 = vand.u32 2147483647, %v694
        %v805 = vand.u32 %v804, 8388607
        %v806 = vor.u32 %v805, 8388608
        %v807 = vsub.s32 0, %v806
        %v808 = vadd.s32 %v803, 1
        %vm809 = vcmp.gt.s32.totalorder %v808, 0
        %v810 = vsel %vm809, %v808, 0
        %v811 = vshrl.u32 %v810, 5
        %v812 = vand.u32 %v810, 31
        %v813 = vsub.s32 32, %v812
        %v814 = vshrl.u32 683565275, %v813
        %v815 = vshll.u32 683565275, %v812
        %v816 = vshrl.u32 2475754826, %v813
        %v817 = vor.u32 %v815, %v816
        %v818 = vshll.u32 2475754826, %v812
        %v819 = vshrl.u32 2131351028, %v813
        %v820 = vor.u32 %v818, %v819
        %v821 = vshll.u32 2131351028, %v812
        %v822 = vshrl.u32 2102212464, %v813
        %v823 = vor.u32 %v821, %v822
        %v824 = vshll.u32 2102212464, %v812
        %v825 = vshrl.u32 920167782, %v813
        %v826 = vor.u32 %v824, %v825
        %v827 = vshll.u32 920167782, %v812
        %v828 = vshrl.u32 1326507024, %v813
        %v829 = vor.u32 %v827, %v828
        %vm830 = vcmp.lt.s32.totalorder %v811, 1
        %vm831 = vcmp.lt.s32.totalorder %v811, 2
        %vm832 = vcmp.lt.s32.totalorder %v811, 3
        %vm833 = vcmp.lt.s32.totalorder %v811, 4
        %v834 = vsel %vm830, %v814, %v817
        %v835 = vsel %vm833, %v823, 2102212464
        %v836 = vsel %vm832, %v820, %v835
        %v837 = vsel %vm831, %v834, %v836
        %v838 = vsel %vm830, %v817, %v820
        %v839 = vsel %vm833, %v826, 920167782
        %v840 = vsel %vm832, %v823, %v839
        %v841 = vsel %vm831, %v838, %v840
        %v842 = vsel %vm830, %v820, %v823
        %v843 = vsel %vm833, %v829, 1326507024
        %v844 = vsel %vm832, %v826, %v843
        %v845 = vsel %vm831, %v842, %v844
        %v846 = vshll.u32 %v806, 8
        %v847 = vmul.u32.u64.compose %v846, %v845
        %v848 = vextract.low.u32 %v847
        %v849 = vextract.high.u32 %v847
        %v850 = vmul.u32.u64.compose %v846, %v841
        %v851 = vextract.low.u32 %v850
        %v852 = vextract.high.u32 %v850
        %v853 = vmul.u32 %v846, %v837
        %v854 = vadd.s32 %v849, %v851
        %vm855 = vc.u32 %v849, %v851
        %v856 = vadd.s32 %v852, 1
        %v857 = vsel %vm855, %v856, %v852
        %v858 = vadd.s32 %v853, %v857
        %v859 = vadd.s32 %v858, 536870912
        %v860 = vshrl.u32 %v859, 30
        %v861 = vshll.u32 %v860, 30
        %v862 = vsub.s32 %v858, %v861
        %vm863 = vcmp.lt.s32.totalorder %v862, 0
        %v864 = vsub.s32 0, %v862
        %v865 = vsel %vm863, %v864, %v862
        %v866 = vclz %v865
        %v867 = vsub.s32 %v866, 2
        %vm868 = vcmp.gt.s32.totalorder 0, %v867
        %v869 = vsel %vm868, 0, %v867
        %v870 = vsub.s32 32, %v869
        %v871 = vshll.u32 %v862, %v869
        %v872 = vshrl.u32 %v854, %v870
        %v873 = vor.u32 %v871, %v872
        %v874 = vsub.s32 4294967266, %v869
        %v875 = vadd.s32 %v874, 127
        %v876 = vshll.u32 %v875, 23
        %v877 = vor.u32 4788187, %v876
        %v878 = vand.u32 2147483647, %v877
        %v880 = vcvt.s32.f32 %v873
        %v881 = vmul.f32 %v880, %v878
        %v882 = vxor.u32 %v881, 2147483648
        %v883 = vsel %vm800, %v882, %v881
        %v884 = vsub.s32 4, %v860
        %v885 = vsel %vm800, %v884, %v860
        %v886 = vsel %vm799, %v694, %v883
        %v887 = vsel %vm799, 0, %v885
        %v888 = vcosq.f32.pop %v886
        %v889 = vsinq.f32.pop %v886
        %vm890 = vweird.f32 %v694
        %v891 = vand.u32 %v887, 3
        %vm892 = vcmp.lt.s32.totalorder %v891, 2
        %vm893 = vcmp.eq.s32.totalorder %v891, 0
        %v894 = vxor.u32 %v889, 2147483648
        %v895 = vsel %vm893, %v888, %v894
        %vm896 = vcmp.eq.s32.totalorder %v891, 2
        %v897 = vxor.u32 %v888, 2147483648
        %v898 = vsel %vm896, %v897, %v889
        %v899 = vsel %vm892, %v895, %v898
        %v900 = vsel %vm890, nan, %v899
        %v901 = vand.u32 2147483647, %v693
        %vm902 = vcmp.le.f32.partialorder %v901, 0.7853982
        %vm903 = vcmp.lt.s32.totalorder %v693, 0
        %v904 = vand.u32 %v693, 2139095040
        %v905 = vshrl.u32 %v904, 23
        %v906 = vsub.s32 %v905, 127
        %v907 = vand.u32 2147483647, %v693
        %v908 = vand.u32 %v907, 8388607
        %v909 = vor.u32 %v908, 8388608
        %v910 = vsub.s32 0, %v909
        %v911 = vadd.s32 %v906, 1
        %vm912 = vcmp.gt.s32.totalorder %v911, 0
        %v913 = vsel %vm912, %v911, 0
        %v914 = vshrl.u32 %v913, 5
        %v915 = vand.u32 %v913, 31
        %v916 = vsub.s32 32, %v915
        %v917 = vshrl.u32 683565275, %v916
        %v918 = vshll.u32 683565275, %v915
        %v919 = vshrl.u32 2475754826, %v916
        %v920 = vor.u32 %v918, %v919
        %v921 = vshll.u32 2475754826, %v915
        %v922 = vshrl.u32 2131351028, %v916
        %v923 = vor.u32 %v921, %v922
        %v924 = vshll.u32 2131351028, %v915
        %v925 = vshrl.u32 2102212464, %v916
        %v926 = vor.u32 %v924, %v925
        %v927 = vshll.u32 2102212464, %v915
        %v928 = vshrl.u32 920167782, %v916
        %v929 = vor.u32 %v927, %v928
        %v930 = vshll.u32 920167782, %v915
        %v931 = vshrl.u32 1326507024, %v916
        %v932 = vor.u32 %v930, %v931
        %vm933 = vcmp.lt.s32.totalorder %v914, 1
        %vm934 = vcmp.lt.s32.totalorder %v914, 2
        %vm935 = vcmp.lt.s32.totalorder %v914, 3
        %vm936 = vcmp.lt.s32.totalorder %v914, 4
        %v937 = vsel %vm933, %v917, %v920
        %v938 = vsel %vm936, %v926, 2102212464
        %v939 = vsel %vm935, %v923, %v938
        %v940 = vsel %vm934, %v937, %v939
        %v941 = vsel %vm933, %v920, %v923
        %v942 = vsel %vm936, %v929, 920167782
        %v943 = vsel %vm935, %v926, %v942
        %v944 = vsel %vm934, %v941, %v943
        %v945 = vsel %vm933, %v923, %v926
        %v946 = vsel %vm936, %v932, 1326507024
        %v947 = vsel %vm935, %v929, %v946
        %v948 = vsel %vm934, %v945, %v947
        %v949 = vshll.u32 %v909, 8
        %v950 = vmul.u32.u64.compose %v949, %v948
        %v951 = vextract.low.u32 %v950
        %v952 = vextract.high.u32 %v950
        %v953 = vmul.u32.u64.compose %v949, %v944
        %v954 = vextract.low.u32 %v953
        %v955 = vextract.high.u32 %v953
        %v956 = vmul.u32 %v949, %v940
        %v957 = vadd.s32 %v952, %v954
        %vm958 = vc.u32 %v952, %v954
        %v959 = vadd.s32 %v955, 1
        %v960 = vsel %vm958, %v959, %v955
        %v961 = vadd.s32 %v956, %v960
        %v962 = vadd.s32 %v961, 536870912
        %v963 = vshrl.u32 %v962, 30
        %v964 = vshll.u32 %v963, 30
        %v965 = vsub.s32 %v961, %v964
        %vm966 = vcmp.lt.s32.totalorder %v965, 0
        %v967 = vsub.s32 0, %v965
        %v968 = vsel %vm966, %v967, %v965
        %v969 = vclz %v968
        %v970 = vsub.s32 %v969, 2
        %vm971 = vcmp.gt.s32.totalorder 0, %v970
        %v972 = vsel %vm971, 0, %v970
        %v973 = vsub.s32 32, %v972
        %v974 = vshll.u32 %v965, %v972
        %v975 = vshrl.u32 %v957, %v973
        %v976 = vor.u32 %v974, %v975
        %v977 = vsub.s32 4294967266, %v972
        %v978 = vadd.s32 %v977, 127
        %v979 = vshll.u32 %v978, 23
        %v980 = vor.u32 4788187, %v979
        %v981 = vand.u32 2147483647, %v980
        %v983 = vcvt.s32.f32 %v976
        %v984 = vmul.f32 %v983, %v981
        %v985 = vxor.u32 %v984, 2147483648
        %v986 = vsel %vm903, %v985, %v984
        %v987 = vsub.s32 4, %v963
        %v988 = vsel %vm903, %v987, %v963
        %v989 = vsel %vm902, %v693, %v986
        %v990 = vsel %vm902, 0, %v988
        %v991 = vcosq.f32.pop %v989
        %v992 = vsinq.f32.pop %v989
        %vm993 = vweird.f32 %v693
        %v994 = vadd.s32 %v990, 3
        %v995 = vand.u32 %v994, 3
        %vm996 = vcmp.lt.s32.totalorder %v995, 2
        %vm997 = vcmp.eq.s32.totalorder %v995, 0
        %v998 = vxor.u32 %v992, 2147483648
        %v999 = vsel %vm997, %v991, %v998
        %vm1000 = vcmp.eq.s32.totalorder %v995, 2
        %v1001 = vxor.u32 %v991, 2147483648
        %v1002 = vsel %vm1000, %v1001, %v992
        %v1003 = vsel %vm996, %v999, %v1002
        %v1004 = vsel %vm993, nan, %v1003
        %v1005 = vand.u32 2147483647, %v694
        %vm1006 = vcmp.le.f32.partialorder %v1005, 0.7853982
        %vm1007 = vcmp.lt.s32.totalorder %v694, 0
        %v1008 = vand.u32 %v694, 2139095040
        %v1009 = vshrl.u32 %v1008, 23
        %v1010 = vsub.s32 %v1009, 127
        %v1011 = vand.u32 2147483647, %v694
        %v1012 = vand.u32 %v1011, 8388607
        %v1013 = vor.u32 %v1012, 8388608
        %v1014 = vsub.s32 0, %v1013
        %v1015 = vadd.s32 %v1010, 1
        %vm1016 = vcmp.gt.s32.totalorder %v1015, 0
        %v1017 = vsel %vm1016, %v1015, 0
        %v1018 = vshrl.u32 %v1017, 5
        %v1019 = vand.u32 %v1017, 31
        %v1020 = vsub.s32 32, %v1019
        %v1021 = vshrl.u32 683565275, %v1020
        %v1022 = vshll.u32 683565275, %v1019
        %v1023 = vshrl.u32 2475754826, %v1020
        %v1024 = vor.u32 %v1022, %v1023
        %v1025 = vshll.u32 2475754826, %v1019
        %v1026 = vshrl.u32 2131351028, %v1020
        %v1027 = vor.u32 %v1025, %v1026
        %v1028 = vshll.u32 2131351028, %v1019
        %v1029 = vshrl.u32 2102212464, %v1020
        %v1030 = vor.u32 %v1028, %v1029
        %v1031 = vshll.u32 2102212464, %v1019
        %v1032 = vshrl.u32 920167782, %v1020
        %v1033 = vor.u32 %v1031, %v1032
        %v1034 = vshll.u32 920167782, %v1019
        %v1035 = vshrl.u32 1326507024, %v1020
        %v1036 = vor.u32 %v1034, %v1035
        %vm1037 = vcmp.lt.s32.totalorder %v1018, 1
        %vm1038 = vcmp.lt.s32.totalorder %v1018, 2
        %vm1039 = vcmp.lt.s32.totalorder %v1018, 3
        %vm1040 = vcmp.lt.s32.totalorder %v1018, 4
        %v1041 = vsel %vm1037, %v1021, %v1024
        %v1042 = vsel %vm1040, %v1030, 2102212464
        %v1043 = vsel %vm1039, %v1027, %v1042
        %v1044 = vsel %vm1038, %v1041, %v1043
        %v1045 = vsel %vm1037, %v1024, %v1027
        %v1046 = vsel %vm1040, %v1033, 920167782
        %v1047 = vsel %vm1039, %v1030, %v1046
        %v1048 = vsel %vm1038, %v1045, %v1047
        %v1049 = vsel %vm1037, %v1027, %v1030
        %v1050 = vsel %vm1040, %v1036, 1326507024
        %v1051 = vsel %vm1039, %v1033, %v1050
        %v1052 = vsel %vm1038, %v1049, %v1051
        %v1053 = vshll.u32 %v1013, 8
        %v1054 = vmul.u32.u64.compose %v1053, %v1052
        %v1055 = vextract.low.u32 %v1054
        %v1056 = vextract.high.u32 %v1054
        %v1057 = vmul.u32.u64.compose %v1053, %v1048
        %v1058 = vextract.low.u32 %v1057
        %v1059 = vextract.high.u32 %v1057
        %v1060 = vmul.u32 %v1053, %v1044
        %v1061 = vadd.s32 %v1056, %v1058
        %vm1062 = vc.u32 %v1056, %v1058
        %v1063 = vadd.s32 %v1059, 1
        %v1064 = vsel %vm1062, %v1063, %v1059
        %v1065 = vadd.s32 %v1060, %v1064
        %v1066 = vadd.s32 %v1065, 536870912
        %v1067 = vshrl.u32 %v1066, 30
        %v1068 = vshll.u32 %v1067, 30
        %v1069 = vsub.s32 %v1065, %v1068
        %vm1070 = vcmp.lt.s32.totalorder %v1069, 0
        %v1071 = vsub.s32 0, %v1069
        %v1072 = vsel %vm1070, %v1071, %v1069
        %v1073 = vclz %v1072
        %v1074 = vsub.s32 %v1073, 2
        %vm1075 = vcmp.gt.s32.totalorder 0, %v1074
        %v1076 = vsel %vm1075, 0, %v1074
        %v1077 = vsub.s32 32, %v1076
        %v1078 = vshll.u32 %v1069, %v1076
        %v1079 = vshrl.u32 %v1061, %v1077
        %v1080 = vor.u32 %v1078, %v1079
        %v1081 = vsub.s32 4294967266, %v1076
        %v1082 = vadd.s32 %v1081, 127
        %v1083 = vshll.u32 %v1082, 23
        %v1084 = vor.u32 4788187, %v1083
        %v1085 = vand.u32 2147483647, %v1084
        %v1087 = vcvt.s32.f32 %v1080
        %v1088 = vmul.f32 %v1087, %v1085
        %v1089 = vxor.u32 %v1088, 2147483648
        %v1090 = vsel %vm1007, %v1089, %v1088
        %v1091 = vsub.s32 4, %v1067
        %v1092 = vsel %vm1007, %v1091, %v1067
        %v1093 = vsel %vm1006, %v694, %v1090
        %v1094 = vsel %vm1006, 0, %v1092
        %v1095 = vcosq.f32.pop %v1093
        %v1096 = vsinq.f32.pop %v1093
        %vm1097 = vweird.f32 %v694
        %v1098 = vadd.s32 %v1094, 3
        %v1099 = vand.u32 %v1098, 3
        %vm1100 = vcmp.lt.s32.totalorder %v1099, 2
        %vm1101 = vcmp.eq.s32.totalorder %v1099, 0
        %v1102 = vxor.u32 %v1096, 2147483648
        %v1103 = vsel %vm1101, %v1095, %v1102
        %vm1104 = vcmp.eq.s32.totalorder %v1099, 2
        %v1105 = vxor.u32 %v1095, 2147483648
        %v1106 = vsel %vm1104, %v1105, %v1096
        %v1107 = vsel %vm1100, %v1103, %v1106
        %v1108 = vsel %vm1097, nan, %v1107
        %1109 = vadd.xlane.f32.xlu0 %v797
        %v1110 = vpop.xlane.xlu0 %1109
        %1111 = vadd.xlane.f32.xlu0 %v900
        %v1112 = vpop.xlane.xlu0 %1111
        %1113 = vadd.xlane.f32.xlu0 %v1004
        %v1114 = vpop.xlane.xlu0 %1113
        %1115 = vadd.xlane.f32.xlu0 %v1108
        %v1116 = vpop.xlane.xlu0 %1115
        %v1117 = vmul.f32 %v1114, 0.0078125
        %v1118 = vmul.f32 %v1116, 0.0078125
        %v1119 = vsub.f32 %v1004, %v1117
        %v1120 = vsub.f32 %v1108, %v1118
        %v1121 = vmul.f32 %v1110, 0.0078125
        %v1122 = vmul.f32 %v1112, 0.0078125
        %v1123 = vsub.f32 %v797, %v1121
        %v1124 = vsub.f32 %v900, %v1122
        %v1125 = vand.u32 2147483647, %v1123
        %v1126 = vand.u32 2147483647, %v1119
        %v1127 = vmin.f32 %v1125, %v1126
        %v1128 = vmax.f32 %v1125, %v1126
        %v1129 = vrcp.pop %v1128
        %v1130 = vmul.f32 %v1127, %v1129
        %v1131 = vmul.f32 %v1130, %v1130
        %v1132 = vmul.f32 0.002785687, %v1131
        %v1133 = vadd.f32 %v1132, -0.015866
        %v1134 = vmul.f32 %v1133, %v1131
        %v1135 = vadd.f32 %v1134, 0.04247222
        %v1136 = vmul.f32 %v1135, %v1131
        %v1137 = vadd.f32 %v1136, -0.074975304
        %v1138 = vmul.f32 %v1137, %v1131
        %v1139 = vadd.f32 %v1138, 0.1064488
        %v1140 = vmul.f32 %v1139, %v1131
        %v1141 = vadd.f32 %v1140, -0.14207031
        %v1142 = vmul.f32 %v1141, %v1131
        %v1143 = vadd.f32 %v1142, 0.19993454
        %v1144 = vmul.f32 %v1143, %v1131
        %v1145 = vadd.f32 %v1144, -0.33333147
        %v1146 = vmul.f32 %v1145, %v1131
        %v1147 = vmul.f32 %v1146, %v1130
        %v1148 = vadd.f32 %v1147, %v1130
        %vm1149 = vcmp.gt.f32.partialorder %v1126, %v1125
        %v1150 = vsub.f32 1.5707964, %v1148
        %v1151 = vsel %vm1149, %v1150, %v1148
        %vm1152 = vcmp.lt.f32.partialorder %v1123, 0.0
        %v1153 = vsub.f32 3.1415927, %v1151
        %v1154 = vsel %vm1152, %v1153, %v1151
        %vm1155 = vcmp.lt.s32.totalorder %v1123, 0
        %v1156 = vsel %vm1155, 3.1415927, 0.0
        %vm1157 = vcmp.eq.f32.partialorder %v1119, 0.0
        %v1158 = vsel %vm1157, %v1156, %v1154
        %vm1159 = vcmp.ne.f32.partialorder %v1123, %v1123
        %vm1160 = vcmp.ne.f32.partialorder %v1119, %v1119
        %vm1161 = vmor %vm1159, %vm1160
        %v1162 = vsel %vm1161, nan, %v1158
        %vm1163 = vcmp.lt.f32.partialorder %v1123, 0.0
        %v1164 = vsel %vm1163, 2.3561945, 0.7853982
        %vm1165 = vcmp.eq.s32.totalorder %v1125, inf
        %vm1166 = vcmp.eq.s32.totalorder %v1126, inf
        %vm1167 = vmand %vm1165, %vm1166
        %v1168 = vsel %vm1167, %v1164, %v1162
        %v1169 = vand.u32 2147483647, %v1168
        %v1170 = vand.u32 %v1119, 2147483648
        %v1171 = vor.u32 %v1169, %v1170
        %v1172 = vand.u32 2147483647, %v1124
        %v1173 = vand.u32 2147483647, %v1120
        %v1174 = vmin.f32 %v1172, %v1173
        %v1175 = vmax.f32 %v1172, %v1173
        %v1176 = vrcp.pop %v1175
        %v1177 = vmul.f32 %v1174, %v1176
        %v1178 = vmul.f32 %v1177, %v1177
        %v1179 = vmul.f32 0.002785687, %v1178
        %v1180 = vadd.f32 %v1179, -0.015866
        %v1181 = vmul.f32 %v1180, %v1178
        %v1182 = vadd.f32 %v1181, 0.04247222
        %v1183 = vmul.f32 %v1182, %v1178
        %v1184 = vadd.f32 %v1183, -0.074975304
        %v1185 = vmul.f32 %v1184, %v1178
        %v1186 = vadd.f32 %v1185, 0.1064488
        %v1187 = vmul.f32 %v1186, %v1178
        %v1188 = vadd.f32 %v1187, -0.14207031
        %v1189 = vmul.f32 %v1188, %v1178
        %v1190 = vadd.f32 %v1189, 0.19993454
        %v1191 = vmul.f32 %v1190, %v1178
        %v1192 = vadd.f32 %v1191, -0.33333147
        %v1193 = vmul.f32 %v1192, %v1178
        %v1194 = vmul.f32 %v1193, %v1177
        %v1195 = vadd.f32 %v1194, %v1177
        %vm1196 = vcmp.gt.f32.partialorder %v1173, %v1172
        %v1197 = vsub.f32 1.5707964, %v1195
        %v1198 = vsel %vm1196, %v1197, %v1195
        %vm1199 = vcmp.lt.f32.partialorder %v1124, 0.0
        %v1200 = vsub.f32 3.1415927, %v1198
        %v1201 = vsel %vm1199, %v1200, %v1198
        %vm1202 = vcmp.lt.s32.totalorder %v1124, 0
        %v1203 = vsel %vm1202, 3.1415927, 0.0
        %vm1204 = vcmp.eq.f32.partialorder %v1120, 0.0
        %v1205 = vsel %vm1204, %v1203, %v1201
        %vm1206 = vcmp.ne.f32.partialorder %v1124, %v1124
        %vm1207 = vcmp.ne.f32.partialorder %v1120, %v1120
        %vm1208 = vmor %vm1206, %vm1207
        %v1209 = vsel %vm1208, nan, %v1205
        %vm1210 = vcmp.lt.f32.partialorder %v1124, 0.0
        %v1211 = vsel %vm1210, 2.3561945, 0.7853982
        %vm1212 = vcmp.eq.s32.totalorder %v1172, inf
        %vm1213 = vcmp.eq.s32.totalorder %v1173, inf
        %vm1214 = vmand %vm1212, %vm1213
        %v1215 = vsel %vm1214, %v1211, %v1209
        %v1216 = vand.u32 2147483647, %v1215
        %v1217 = vand.u32 %v1120, 2147483648
        %v1218 = vor.u32 %v1216, %v1217
        %s1219 = scalar_lea.vmem %s152, 16 [#allocation5]
        %1220 = vst [vmem:[%s1219] sm:$0xff] %v1171
        %1221 = vst [vmem:[%s1219 + $0x8] sm:$0xff] %v1218
        %s1222 = scalar_lea.vmem %s134, 48 [#allocation2]
        %v1223 = vld [vmem:[%s1222] sm:$0xff]
        %v1224 = vld [vmem:[%s1222 + $0x8] sm:$0xff]
        %v1225 = vld [vmem:[%s134] sm:$0xff]
        %v1226 = vld [vmem:[%s134 + $0x8] sm:$0xff]
        %v1227 = vsub.f32 %v1223, %v1225
        %v1228 = vsub.f32 %v1224, %v1226
        %v1229 = vand.u32 2147483647, %v1227
        %vm1230 = vcmp.le.f32.partialorder %v1229, 0.7853982
        %vm1231 = vcmp.lt.s32.totalorder %v1227, 0
        %v1232 = vand.u32 %v1227, 2139095040
        %v1233 = vshrl.u32 %v1232, 23
        %v1234 = vsub.s32 %v1233, 127
        %v1235 = vand.u32 2147483647, %v1227
        %v1236 = vand.u32 %v1235, 8388607
        %v1237 = vor.u32 %v1236, 8388608
        %v1238 = vsub.s32 0, %v1237
        %v1239 = vadd.s32 %v1234, 1
        %vm1240 = vcmp.gt.s32.totalorder %v1239, 0
        %v1241 = vsel %vm1240, %v1239, 0
        %v1242 = vshrl.u32 %v1241, 5
        %v1243 = vand.u32 %v1241, 31
        %v1244 = vsub.s32 32, %v1243
        %v1245 = vshrl.u32 683565275, %v1244
        %v1246 = vshll.u32 683565275, %v1243
        %v1247 = vshrl.u32 2475754826, %v1244
        %v1248 = vor.u32 %v1246, %v1247
        %v1249 = vshll.u32 2475754826, %v1243
        %v1250 = vshrl.u32 2131351028, %v1244
        %v1251 = vor.u32 %v1249, %v1250
        %v1252 = vshll.u32 2131351028, %v1243
        %v1253 = vshrl.u32 2102212464, %v1244
        %v1254 = vor.u32 %v1252, %v1253
        %v1255 = vshll.u32 2102212464, %v1243
        %v1256 = vshrl.u32 920167782, %v1244
        %v1257 = vor.u32 %v1255, %v1256
        %v1258 = vshll.u32 920167782, %v1243
        %v1259 = vshrl.u32 1326507024, %v1244
        %v1260 = vor.u32 %v1258, %v1259
        %vm1261 = vcmp.lt.s32.totalorder %v1242, 1
        %vm1262 = vcmp.lt.s32.totalorder %v1242, 2
        %vm1263 = vcmp.lt.s32.totalorder %v1242, 3
        %vm1264 = vcmp.lt.s32.totalorder %v1242, 4
        %v1265 = vsel %vm1261, %v1245, %v1248
        %v1266 = vsel %vm1264, %v1254, 2102212464
        %v1267 = vsel %vm1263, %v1251, %v1266
        %v1268 = vsel %vm1262, %v1265, %v1267
        %v1269 = vsel %vm1261, %v1248, %v1251
        %v1270 = vsel %vm1264, %v1257, 920167782
        %v1271 = vsel %vm1263, %v1254, %v1270
        %v1272 = vsel %vm1262, %v1269, %v1271
        %v1273 = vsel %vm1261, %v1251, %v1254
        %v1274 = vsel %vm1264, %v1260, 1326507024
        %v1275 = vsel %vm1263, %v1257, %v1274
        %v1276 = vsel %vm1262, %v1273, %v1275
        %v1277 = vshll.u32 %v1237, 8
        %v1278 = vmul.u32.u64.compose %v1277, %v1276
        %v1279 = vextract.low.u32 %v1278
        %v1280 = vextract.high.u32 %v1278
        %v1281 = vmul.u32.u64.compose %v1277, %v1272
        %v1282 = vextract.low.u32 %v1281
        %v1283 = vextract.high.u32 %v1281
        %v1284 = vmul.u32 %v1277, %v1268
        %v1285 = vadd.s32 %v1280, %v1282
        %vm1286 = vc.u32 %v1280, %v1282
        %v1287 = vadd.s32 %v1283, 1
        %v1288 = vsel %vm1286, %v1287, %v1283
        %v1289 = vadd.s32 %v1284, %v1288
        %v1290 = vadd.s32 %v1289, 536870912
        %v1291 = vshrl.u32 %v1290, 30
        %v1292 = vshll.u32 %v1291, 30
        %v1293 = vsub.s32 %v1289, %v1292
        %vm1294 = vcmp.lt.s32.totalorder %v1293, 0
        %v1295 = vsub.s32 0, %v1293
        %v1296 = vsel %vm1294, %v1295, %v1293
        %v1297 = vclz %v1296
        %v1298 = vsub.s32 %v1297, 2
        %vm1299 = vcmp.gt.s32.totalorder 0, %v1298
        %v1300 = vsel %vm1299, 0, %v1298
        %v1301 = vsub.s32 32, %v1300
        %v1302 = vshll.u32 %v1293, %v1300
        %v1303 = vshrl.u32 %v1285, %v1301
        %v1304 = vor.u32 %v1302, %v1303
        %v1305 = vsub.s32 4294967266, %v1300
        %v1306 = vadd.s32 %v1305, 127
        %v1307 = vshll.u32 %v1306, 23
        %v1308 = vor.u32 4788187, %v1307
        %v1309 = vand.u32 2147483647, %v1308
        %v1311 = vcvt.s32.f32 %v1304
        %v1312 = vmul.f32 %v1311, %v1309
        %v1313 = vxor.u32 %v1312, 2147483648
        %v1314 = vsel %vm1231, %v1313, %v1312
        %v1315 = vsub.s32 4, %v1291
        %v1316 = vsel %vm1231, %v1315, %v1291
        %v1317 = vsel %vm1230, %v1227, %v1314
        %v1318 = vsel %vm1230, 0, %v1316
        %v1319 = vcosq.f32.pop %v1317
        %v1320 = vsinq.f32.pop %v1317
        %vm1321 = vweird.f32 %v1227
        %v1322 = vand.u32 %v1318, 3
        %vm1323 = vcmp.lt.s32.totalorder %v1322, 2
        %vm1324 = vcmp.eq.s32.totalorder %v1322, 0
        %v1325 = vxor.u32 %v1320, 2147483648
        %v1326 = vsel %vm1324, %v1319, %v1325
        %vm1327 = vcmp.eq.s32.totalorder %v1322, 2
        %v1328 = vxor.u32 %v1319, 2147483648
        %v1329 = vsel %vm1327, %v1328, %v1320
        %v1330 = vsel %vm1323, %v1326, %v1329
        %v1331 = vsel %vm1321, nan, %v1330
        %v1332 = vand.u32 2147483647, %v1228
        %vm1333 = vcmp.le.f32.partialorder %v1332, 0.7853982
        %vm1334 = vcmp.lt.s32.totalorder %v1228, 0
        %v1335 = vand.u32 %v1228, 2139095040
        %v1336 = vshrl.u32 %v1335, 23
        %v1337 = vsub.s32 %v1336, 127
        %v1338 = vand.u32 2147483647, %v1228
        %v1339 = vand.u32 %v1338, 8388607
        %v1340 = vor.u32 %v1339, 8388608
        %v1341 = vsub.s32 0, %v1340
        %v1342 = vadd.s32 %v1337, 1
        %vm1343 = vcmp.gt.s32.totalorder %v1342, 0
        %v1344 = vsel %vm1343, %v1342, 0
        %v1345 = vshrl.u32 %v1344, 5
        %v1346 = vand.u32 %v1344, 31
        %v1347 = vsub.s32 32, %v1346
        %v1348 = vshrl.u32 683565275, %v1347
        %v1349 = vshll.u32 683565275, %v1346
        %v1350 = vshrl.u32 2475754826, %v1347
        %v1351 = vor.u32 %v1349, %v1350
        %v1352 = vshll.u32 2475754826, %v1346
        %v1353 = vshrl.u32 2131351028, %v1347
        %v1354 = vor.u32 %v1352, %v1353
        %v1355 = vshll.u32 2131351028, %v1346
        %v1356 = vshrl.u32 2102212464, %v1347
        %v1357 = vor.u32 %v1355, %v1356
        %v1358 = vshll.u32 2102212464, %v1346
        %v1359 = vshrl.u32 920167782, %v1347
        %v1360 = vor.u32 %v1358, %v1359
        %v1361 = vshll.u32 920167782, %v1346
        %v1362 = vshrl.u32 1326507024, %v1347
        %v1363 = vor.u32 %v1361, %v1362
        %vm1364 = vcmp.lt.s32.totalorder %v1345, 1
        %vm1365 = vcmp.lt.s32.totalorder %v1345, 2
        %vm1366 = vcmp.lt.s32.totalorder %v1345, 3
        %vm1367 = vcmp.lt.s32.totalorder %v1345, 4
        %v1368 = vsel %vm1364, %v1348, %v1351
        %v1369 = vsel %vm1367, %v1357, 2102212464
        %v1370 = vsel %vm1366, %v1354, %v1369
        %v1371 = vsel %vm1365, %v1368, %v1370
        %v1372 = vsel %vm1364, %v1351, %v1354
        %v1373 = vsel %vm1367, %v1360, 920167782
        %v1374 = vsel %vm1366, %v1357, %v1373
        %v1375 = vsel %vm1365, %v1372, %v1374
        %v1376 = vsel %vm1364, %v1354, %v1357
        %v1377 = vsel %vm1367, %v1363, 1326507024
        %v1378 = vsel %vm1366, %v1360, %v1377
        %v1379 = vsel %vm1365, %v1376, %v1378
        %v1380 = vshll.u32 %v1340, 8
        %v1381 = vmul.u32.u64.compose %v1380, %v1379
        %v1382 = vextract.low.u32 %v1381
        %v1383 = vextract.high.u32 %v1381
        %v1384 = vmul.u32.u64.compose %v1380, %v1375
        %v1385 = vextract.low.u32 %v1384
        %v1386 = vextract.high.u32 %v1384
        %v1387 = vmul.u32 %v1380, %v1371
        %v1388 = vadd.s32 %v1383, %v1385
        %vm1389 = vc.u32 %v1383, %v1385
        %v1390 = vadd.s32 %v1386, 1
        %v1391 = vsel %vm1389, %v1390, %v1386
        %v1392 = vadd.s32 %v1387, %v1391
        %v1393 = vadd.s32 %v1392, 536870912
        %v1394 = vshrl.u32 %v1393, 30
        %v1395 = vshll.u32 %v1394, 30
        %v1396 = vsub.s32 %v1392, %v1395
        %vm1397 = vcmp.lt.s32.totalorder %v1396, 0
        %v1398 = vsub.s32 0, %v1396
        %v1399 = vsel %vm1397, %v1398, %v1396
        %v1400 = vclz %v1399
        %v1401 = vsub.s32 %v1400, 2
        %vm1402 = vcmp.gt.s32.totalorder 0, %v1401
        %v1403 = vsel %vm1402, 0, %v1401
        %v1404 = vsub.s32 32, %v1403
        %v1405 = vshll.u32 %v1396, %v1403
        %v1406 = vshrl.u32 %v1388, %v1404
        %v1407 = vor.u32 %v1405, %v1406
        %v1408 = vsub.s32 4294967266, %v1403
        %v1409 = vadd.s32 %v1408, 127
        %v1410 = vshll.u32 %v1409, 23
        %v1411 = vor.u32 4788187, %v1410
        %v1412 = vand.u32 2147483647, %v1411
        %v1414 = vcvt.s32.f32 %v1407
        %v1415 = vmul.f32 %v1414, %v1412
        %v1416 = vxor.u32 %v1415, 2147483648
        %v1417 = vsel %vm1334, %v1416, %v1415
        %v1418 = vsub.s32 4, %v1394
        %v1419 = vsel %vm1334, %v1418, %v1394
        %v1420 = vsel %vm1333, %v1228, %v1417
        %v1421 = vsel %vm1333, 0, %v1419
        %v1422 = vcosq.f32.pop %v1420
        %v1423 = vsinq.f32.pop %v1420
        %vm1424 = vweird.f32 %v1228
        %v1425 = vand.u32 %v1421, 3
        %vm1426 = vcmp.lt.s32.totalorder %v1425, 2
        %vm1427 = vcmp.eq.s32.totalorder %v1425, 0
        %v1428 = vxor.u32 %v1423, 2147483648
        %v1429 = vsel %vm1427, %v1422, %v1428
        %vm1430 = vcmp.eq.s32.totalorder %v1425, 2
        %v1431 = vxor.u32 %v1422, 2147483648
        %v1432 = vsel %vm1430, %v1431, %v1423
        %v1433 = vsel %vm1426, %v1429, %v1432
        %v1434 = vsel %vm1424, nan, %v1433
        %v1435 = vand.u32 2147483647, %v1227
        %vm1436 = vcmp.le.f32.partialorder %v1435, 0.7853982
        %vm1437 = vcmp.lt.s32.totalorder %v1227, 0
        %v1438 = vand.u32 %v1227, 2139095040
        %v1439 = vshrl.u32 %v1438, 23
        %v1440 = vsub.s32 %v1439, 127
        %v1441 = vand.u32 2147483647, %v1227
        %v1442 = vand.u32 %v1441, 8388607
        %v1443 = vor.u32 %v1442, 8388608
        %v1444 = vsub.s32 0, %v1443
        %v1445 = vadd.s32 %v1440, 1
        %vm1446 = vcmp.gt.s32.totalorder %v1445, 0
        %v1447 = vsel %vm1446, %v1445, 0
        %v1448 = vshrl.u32 %v1447, 5
        %v1449 = vand.u32 %v1447, 31
        %v1450 = vsub.s32 32, %v1449
        %v1451 = vshrl.u32 683565275, %v1450
        %v1452 = vshll.u32 683565275, %v1449
        %v1453 = vshrl.u32 2475754826, %v1450
        %v1454 = vor.u32 %v1452, %v1453
        %v1455 = vshll.u32 2475754826, %v1449
        %v1456 = vshrl.u32 2131351028, %v1450
        %v1457 = vor.u32 %v1455, %v1456
        %v1458 = vshll.u32 2131351028, %v1449
        %v1459 = vshrl.u32 2102212464, %v1450
        %v1460 = vor.u32 %v1458, %v1459
        %v1461 = vshll.u32 2102212464, %v1449
        %v1462 = vshrl.u32 920167782, %v1450
        %v1463 = vor.u32 %v1461, %v1462
        %v1464 = vshll.u32 920167782, %v1449
        %v1465 = vshrl.u32 1326507024, %v1450
        %v1466 = vor.u32 %v1464, %v1465
        %vm1467 = vcmp.lt.s32.totalorder %v1448, 1
        %vm1468 = vcmp.lt.s32.totalorder %v1448, 2
        %vm1469 = vcmp.lt.s32.totalorder %v1448, 3
        %vm1470 = vcmp.lt.s32.totalorder %v1448, 4
        %v1471 = vsel %vm1467, %v1451, %v1454
        %v1472 = vsel %vm1470, %v1460, 2102212464
        %v1473 = vsel %vm1469, %v1457, %v1472
        %v1474 = vsel %vm1468, %v1471, %v1473
        %v1475 = vsel %vm1467, %v1454, %v1457
        %v1476 = vsel %vm1470, %v1463, 920167782
        %v1477 = vsel %vm1469, %v1460, %v1476
        %v1478 = vsel %vm1468, %v1475, %v1477
        %v1479 = vsel %vm1467, %v1457, %v1460
        %v1480 = vsel %vm1470, %v1466, 1326507024
        %v1481 = vsel %vm1469, %v1463, %v1480
        %v1482 = vsel %vm1468, %v1479, %v1481
        %v1483 = vshll.u32 %v1443, 8
        %v1484 = vmul.u32.u64.compose %v1483, %v1482
        %v1485 = vextract.low.u32 %v1484
        %v1486 = vextract.high.u32 %v1484
        %v1487 = vmul.u32.u64.compose %v1483, %v1478
        %v1488 = vextract.low.u32 %v1487
        %v1489 = vextract.high.u32 %v1487
        %v1490 = vmul.u32 %v1483, %v1474
        %v1491 = vadd.s32 %v1486, %v1488
        %vm1492 = vc.u32 %v1486, %v1488
        %v1493 = vadd.s32 %v1489, 1
        %v1494 = vsel %vm1492, %v1493, %v1489
        %v1495 = vadd.s32 %v1490, %v1494
        %v1496 = vadd.s32 %v1495, 536870912
        %v1497 = vshrl.u32 %v1496, 30
        %v1498 = vshll.u32 %v1497, 30
        %v1499 = vsub.s32 %v1495, %v1498
        %vm1500 = vcmp.lt.s32.totalorder %v1499, 0
        %v1501 = vsub.s32 0, %v1499
        %v1502 = vsel %vm1500, %v1501, %v1499
        %v1503 = vclz %v1502
        %v1504 = vsub.s32 %v1503, 2
        %vm1505 = vcmp.gt.s32.totalorder 0, %v1504
        %v1506 = vsel %vm1505, 0, %v1504
        %v1507 = vsub.s32 32, %v1506
        %v1508 = vshll.u32 %v1499, %v1506
        %v1509 = vshrl.u32 %v1491, %v1507
        %v1510 = vor.u32 %v1508, %v1509
        %v1511 = vsub.s32 4294967266, %v1506
        %v1512 = vadd.s32 %v1511, 127
        %v1513 = vshll.u32 %v1512, 23
        %v1514 = vor.u32 4788187, %v1513
        %v1515 = vand.u32 2147483647, %v1514
        %v1517 = vcvt.s32.f32 %v1510
        %v1518 = vmul.f32 %v1517, %v1515
        %v1519 = vxor.u32 %v1518, 2147483648
        %v1520 = vsel %vm1437, %v1519, %v1518
        %v1521 = vsub.s32 4, %v1497
        %v1522 = vsel %vm1437, %v1521, %v1497
        %v1523 = vsel %vm1436, %v1227, %v1520
        %v1524 = vsel %vm1436, 0, %v1522
        %v1525 = vcosq.f32.pop %v1523
        %v1526 = vsinq.f32.pop %v1523
        %vm1527 = vweird.f32 %v1227
        %v1528 = vadd.s32 %v1524, 3
        %v1529 = vand.u32 %v1528, 3
        %vm1530 = vcmp.lt.s32.totalorder %v1529, 2
        %vm1531 = vcmp.eq.s32.totalorder %v1529, 0
        %v1532 = vxor.u32 %v1526, 2147483648
        %v1533 = vsel %vm1531, %v1525, %v1532
        %vm1534 = vcmp.eq.s32.totalorder %v1529, 2
        %v1535 = vxor.u32 %v1525, 2147483648
        %v1536 = vsel %vm1534, %v1535, %v1526
        %v1537 = vsel %vm1530, %v1533, %v1536
        %v1538 = vsel %vm1527, nan, %v1537
        %v1539 = vand.u32 2147483647, %v1228
        %vm1540 = vcmp.le.f32.partialorder %v1539, 0.7853982
        %vm1541 = vcmp.lt.s32.totalorder %v1228, 0
        %v1542 = vand.u32 %v1228, 2139095040
        %v1543 = vshrl.u32 %v1542, 23
        %v1544 = vsub.s32 %v1543, 127
        %v1545 = vand.u32 2147483647, %v1228
        %v1546 = vand.u32 %v1545, 8388607
        %v1547 = vor.u32 %v1546, 8388608
        %v1548 = vsub.s32 0, %v1547
        %v1549 = vadd.s32 %v1544, 1
        %vm1550 = vcmp.gt.s32.totalorder %v1549, 0
        %v1551 = vsel %vm1550, %v1549, 0
        %v1552 = vshrl.u32 %v1551, 5
        %v1553 = vand.u32 %v1551, 31
        %v1554 = vsub.s32 32, %v1553
        %v1555 = vshrl.u32 683565275, %v1554
        %v1556 = vshll.u32 683565275, %v1553
        %v1557 = vshrl.u32 2475754826, %v1554
        %v1558 = vor.u32 %v1556, %v1557
        %v1559 = vshll.u32 2475754826, %v1553
        %v1560 = vshrl.u32 2131351028, %v1554
        %v1561 = vor.u32 %v1559, %v1560
        %v1562 = vshll.u32 2131351028, %v1553
        %v1563 = vshrl.u32 2102212464, %v1554
        %v1564 = vor.u32 %v1562, %v1563
        %v1565 = vshll.u32 2102212464, %v1553
        %v1566 = vshrl.u32 920167782, %v1554
        %v1567 = vor.u32 %v1565, %v1566
        %v1568 = vshll.u32 920167782, %v1553
        %v1569 = vshrl.u32 1326507024, %v1554
        %v1570 = vor.u32 %v1568, %v1569
        %vm1571 = vcmp.lt.s32.totalorder %v1552, 1
        %vm1572 = vcmp.lt.s32.totalorder %v1552, 2
        %vm1573 = vcmp.lt.s32.totalorder %v1552, 3
        %vm1574 = vcmp.lt.s32.totalorder %v1552, 4
        %v1575 = vsel %vm1571, %v1555, %v1558
        %v1576 = vsel %vm1574, %v1564, 2102212464
        %v1577 = vsel %vm1573, %v1561, %v1576
        %v1578 = vsel %vm1572, %v1575, %v1577
        %v1579 = vsel %vm1571, %v1558, %v1561
        %v1580 = vsel %vm1574, %v1567, 920167782
        %v1581 = vsel %vm1573, %v1564, %v1580
        %v1582 = vsel %vm1572, %v1579, %v1581
        %v1583 = vsel %vm1571, %v1561, %v1564
        %v1584 = vsel %vm1574, %v1570, 1326507024
        %v1585 = vsel %vm1573, %v1567, %v1584
        %v1586 = vsel %vm1572, %v1583, %v1585
        %v1587 = vshll.u32 %v1547, 8
        %v1588 = vmul.u32.u64.compose %v1587, %v1586
        %v1589 = vextract.low.u32 %v1588
        %v1590 = vextract.high.u32 %v1588
        %v1591 = vmul.u32.u64.compose %v1587, %v1582
        %v1592 = vextract.low.u32 %v1591
        %v1593 = vextract.high.u32 %v1591
        %v1594 = vmul.u32 %v1587, %v1578
        %v1595 = vadd.s32 %v1590, %v1592
        %vm1596 = vc.u32 %v1590, %v1592
        %v1597 = vadd.s32 %v1593, 1
        %v1598 = vsel %vm1596, %v1597, %v1593
        %v1599 = vadd.s32 %v1594, %v1598
        %v1600 = vadd.s32 %v1599, 536870912
        %v1601 = vshrl.u32 %v1600, 30
        %v1602 = vshll.u32 %v1601, 30
        %v1603 = vsub.s32 %v1599, %v1602
        %vm1604 = vcmp.lt.s32.totalorder %v1603, 0
        %v1605 = vsub.s32 0, %v1603
        %v1606 = vsel %vm1604, %v1605, %v1603
        %v1607 = vclz %v1606
        %v1608 = vsub.s32 %v1607, 2
        %vm1609 = vcmp.gt.s32.totalorder 0, %v1608
        %v1610 = vsel %vm1609, 0, %v1608
        %v1611 = vsub.s32 32, %v1610
        %v1612 = vshll.u32 %v1603, %v1610
        %v1613 = vshrl.u32 %v1595, %v1611
        %v1614 = vor.u32 %v1612, %v1613
        %v1615 = vsub.s32 4294967266, %v1610
        %v1616 = vadd.s32 %v1615, 127
        %v1617 = vshll.u32 %v1616, 23
        %v1618 = vor.u32 4788187, %v1617
        %v1619 = vand.u32 2147483647, %v1618
        %v1621 = vcvt.s32.f32 %v1614
        %v1622 = vmul.f32 %v1621, %v1619
        %v1623 = vxor.u32 %v1622, 2147483648
        %v1624 = vsel %vm1541, %v1623, %v1622
        %v1625 = vsub.s32 4, %v1601
        %v1626 = vsel %vm1541, %v1625, %v1601
        %v1627 = vsel %vm1540, %v1228, %v1624
        %v1628 = vsel %vm1540, 0, %v1626
        %v1629 = vcosq.f32.pop %v1627
        %v1630 = vsinq.f32.pop %v1627
        %vm1631 = vweird.f32 %v1228
        %v1632 = vadd.s32 %v1628, 3
        %v1633 = vand.u32 %v1632, 3
        %vm1634 = vcmp.lt.s32.totalorder %v1633, 2
        %vm1635 = vcmp.eq.s32.totalorder %v1633, 0
        %v1636 = vxor.u32 %v1630, 2147483648
        %v1637 = vsel %vm1635, %v1629, %v1636
        %vm1638 = vcmp.eq.s32.totalorder %v1633, 2
        %v1639 = vxor.u32 %v1629, 2147483648
        %v1640 = vsel %vm1638, %v1639, %v1630
        %v1641 = vsel %vm1634, %v1637, %v1640
        %v1642 = vsel %vm1631, nan, %v1641
        %1643 = vadd.xlane.f32.xlu0 %v1331
        %v1644 = vpop.xlane.xlu0 %1643
        %1645 = vadd.xlane.f32.xlu0 %v1434
        %v1646 = vpop.xlane.xlu0 %1645
        %1647 = vadd.xlane.f32.xlu0 %v1538
        %v1648 = vpop.xlane.xlu0 %1647
        %1649 = vadd.xlane.f32.xlu0 %v1642
        %v1650 = vpop.xlane.xlu0 %1649
        %v1651 = vmul.f32 %v1648, 0.0078125
        %v1652 = vmul.f32 %v1650, 0.0078125
        %v1653 = vsub.f32 %v1538, %v1651
        %v1654 = vsub.f32 %v1642, %v1652
        %v1655 = vmul.f32 %v1644, 0.0078125
        %v1656 = vmul.f32 %v1646, 0.0078125
        %v1657 = vsub.f32 %v1331, %v1655
        %v1658 = vsub.f32 %v1434, %v1656
        %v1659 = vand.u32 2147483647, %v1657
        %v1660 = vand.u32 2147483647, %v1653
        %v1661 = vmin.f32 %v1659, %v1660
        %v1662 = vmax.f32 %v1659, %v1660
        %v1663 = vrcp.pop %v1662
        %v1664 = vmul.f32 %v1661, %v1663
        %v1665 = vmul.f32 %v1664, %v1664
        %v1666 = vmul.f32 0.002785687, %v1665
        %v1667 = vadd.f32 %v1666, -0.015866
        %v1668 = vmul.f32 %v1667, %v1665
        %v1669 = vadd.f32 %v1668, 0.04247222
        %v1670 = vmul.f32 %v1669, %v1665
        %v1671 = vadd.f32 %v1670, -0.074975304
        %v1672 = vmul.f32 %v1671, %v1665
        %v1673 = vadd.f32 %v1672, 0.1064488
        %v1674 = vmul.f32 %v1673, %v1665
        %v1675 = vadd.f32 %v1674, -0.14207031
        %v1676 = vmul.f32 %v1675, %v1665
        %v1677 = vadd.f32 %v1676, 0.19993454
        %v1678 = vmul.f32 %v1677, %v1665
        %v1679 = vadd.f32 %v1678, -0.33333147
        %v1680 = vmul.f32 %v1679, %v1665
        %v1681 = vmul.f32 %v1680, %v1664
        %v1682 = vadd.f32 %v1681, %v1664
        %vm1683 = vcmp.gt.f32.partialorder %v1660, %v1659
        %v1684 = vsub.f32 1.5707964, %v1682
        %v1685 = vsel %vm1683, %v1684, %v1682
        %vm1686 = vcmp.lt.f32.partialorder %v1657, 0.0
        %v1687 = vsub.f32 3.1415927, %v1685
        %v1688 = vsel %vm1686, %v1687, %v1685
        %vm1689 = vcmp.lt.s32.totalorder %v1657, 0
        %v1690 = vsel %vm1689, 3.1415927, 0.0
        %vm1691 = vcmp.eq.f32.partialorder %v1653, 0.0
        %v1692 = vsel %vm1691, %v1690, %v1688
        %vm1693 = vcmp.ne.f32.partialorder %v1657, %v1657
        %vm1694 = vcmp.ne.f32.partialorder %v1653, %v1653
        %vm1695 = vmor %vm1693, %vm1694
        %v1696 = vsel %vm1695, nan, %v1692
        %vm1697 = vcmp.lt.f32.partialorder %v1657, 0.0
        %v1698 = vsel %vm1697, 2.3561945, 0.7853982
        %vm1699 = vcmp.eq.s32.totalorder %v1659, inf
        %vm1700 = vcmp.eq.s32.totalorder %v1660, inf
        %vm1701 = vmand %vm1699, %vm1700
        %v1702 = vsel %vm1701, %v1698, %v1696
        %v1703 = vand.u32 2147483647, %v1702
        %v1704 = vand.u32 %v1653, 2147483648
        %v1705 = vor.u32 %v1703, %v1704
        %v1706 = vand.u32 2147483647, %v1658
        %v1707 = vand.u32 2147483647, %v1654
        %v1708 = vmin.f32 %v1706, %v1707
        %v1709 = vmax.f32 %v1706, %v1707
        %v1710 = vrcp.pop %v1709
        %v1711 = vmul.f32 %v1708, %v1710
        %v1712 = vmul.f32 %v1711, %v1711
        %v1713 = vmul.f32 0.002785687, %v1712
        %v1714 = vadd.f32 %v1713, -0.015866
        %v1715 = vmul.f32 %v1714, %v1712
        %v1716 = vadd.f32 %v1715, 0.04247222
        %v1717 = vmul.f32 %v1716, %v1712
        %v1718 = vadd.f32 %v1717, -0.074975304
        %v1719 = vmul.f32 %v1718, %v1712
        %v1720 = vadd.f32 %v1719, 0.1064488
        %v1721 = vmul.f32 %v1720, %v1712
        %v1722 = vadd.f32 %v1721, -0.14207031
        %v1723 = vmul.f32 %v1722, %v1712
        %v1724 = vadd.f32 %v1723, 0.19993454
        %v1725 = vmul.f32 %v1724, %v1712
        %v1726 = vadd.f32 %v1725, -0.33333147
        %v1727 = vmul.f32 %v1726, %v1712
        %v1728 = vmul.f32 %v1727, %v1711
        %v1729 = vadd.f32 %v1728, %v1711
        %vm1730 = vcmp.gt.f32.partialorder %v1707, %v1706
        %v1731 = vsub.f32 1.5707964, %v1729
        %v1732 = vsel %vm1730, %v1731, %v1729
        %vm1733 = vcmp.lt.f32.partialorder %v1658, 0.0
        %v1734 = vsub.f32 3.1415927, %v1732
        %v1735 = vsel %vm1733, %v1734, %v1732
        %vm1736 = vcmp.lt.s32.totalorder %v1658, 0
        %v1737 = vsel %vm1736, 3.1415927, 0.0
        %vm1738 = vcmp.eq.f32.partialorder %v1654, 0.0
        %v1739 = vsel %vm1738, %v1737, %v1735
        %vm1740 = vcmp.ne.f32.partialorder %v1658, %v1658
        %vm1741 = vcmp.ne.f32.partialorder %v1654, %v1654
        %vm1742 = vmor %vm1740, %vm1741
        %v1743 = vsel %vm1742, nan, %v1739
        %vm1744 = vcmp.lt.f32.partialorder %v1658, 0.0
        %v1745 = vsel %vm1744, 2.3561945, 0.7853982
        %vm1746 = vcmp.eq.s32.totalorder %v1706, inf
        %vm1747 = vcmp.eq.s32.totalorder %v1707, inf
        %vm1748 = vmand %vm1746, %vm1747
        %v1749 = vsel %vm1748, %v1745, %v1743
        %v1750 = vand.u32 2147483647, %v1749
        %v1751 = vand.u32 %v1654, 2147483648
        %v1752 = vor.u32 %v1750, %v1751
        %s1753 = scalar_lea.vmem %s152, 32 [#allocation5]
        %1754 = vst [vmem:[%s1753] sm:$0xff] %v1705
        %1755 = vst [vmem:[%s1753 + $0x8] sm:$0xff] %v1752
        %s1756 = scalar_lea.vmem %s134, 64 [#allocation2]
        %v1757 = vld [vmem:[%s1756] sm:$0xff]
        %v1758 = vld [vmem:[%s1756 + $0x8] sm:$0xff]
        %v1759 = vld [vmem:[%s134] sm:$0xff]
        %v1760 = vld [vmem:[%s134 + $0x8] sm:$0xff]
        %v1761 = vsub.f32 %v1757, %v1759
        %v1762 = vsub.f32 %v1758, %v1760
        %v1763 = vand.u32 2147483647, %v1761
        %vm1764 = vcmp.le.f32.partialorder %v1763, 0.7853982
        %vm1765 = vcmp.lt.s32.totalorder %v1761, 0
        %v1766 = vand.u32 %v1761, 2139095040
        %v1767 = vshrl.u32 %v1766, 23
        %v1768 = vsub.s32 %v1767, 127
        %v1769 = vand.u32 2147483647, %v1761
        %v1770 = vand.u32 %v1769, 8388607
        %v1771 = vor.u32 %v1770, 8388608
        %v1772 = vsub.s32 0, %v1771
        %v1773 = vadd.s32 %v1768, 1
        %vm1774 = vcmp.gt.s32.totalorder %v1773, 0
        %v1775 = vsel %vm1774, %v1773, 0
        %v1776 = vshrl.u32 %v1775, 5
        %v1777 = vand.u32 %v1775, 31
        %v1778 = vsub.s32 32, %v1777
        %v1779 = vshrl.u32 683565275, %v1778
        %v1780 = vshll.u32 683565275, %v1777
        %v1781 = vshrl.u32 2475754826, %v1778
        %v1782 = vor.u32 %v1780, %v1781
        %v1783 = vshll.u32 2475754826, %v1777
        %v1784 = vshrl.u32 2131351028, %v1778
        %v1785 = vor.u32 %v1783, %v1784
        %v1786 = vshll.u32 2131351028, %v1777
        %v1787 = vshrl.u32 2102212464, %v1778
        %v1788 = vor.u32 %v1786, %v1787
        %v1789 = vshll.u32 2102212464, %v1777
        %v1790 = vshrl.u32 920167782, %v1778
        %v1791 = vor.u32 %v1789, %v1790
        %v1792 = vshll.u32 920167782, %v1777
        %v1793 = vshrl.u32 1326507024, %v1778
        %v1794 = vor.u32 %v1792, %v1793
        %vm1795 = vcmp.lt.s32.totalorder %v1776, 1
        %vm1796 = vcmp.lt.s32.totalorder %v1776, 2
        %vm1797 = vcmp.lt.s32.totalorder %v1776, 3
        %vm1798 = vcmp.lt.s32.totalorder %v1776, 4
        %v1799 = vsel %vm1795, %v1779, %v1782
        %v1800 = vsel %vm1798, %v1788, 2102212464
        %v1801 = vsel %vm1797, %v1785, %v1800
        %v1802 = vsel %vm1796, %v1799, %v1801
        %v1803 = vsel %vm1795, %v1782, %v1785
        %v1804 = vsel %vm1798, %v1791, 920167782
        %v1805 = vsel %vm1797, %v1788, %v1804
        %v1806 = vsel %vm1796, %v1803, %v1805
        %v1807 = vsel %vm1795, %v1785, %v1788
        %v1808 = vsel %vm1798, %v1794, 1326507024
        %v1809 = vsel %vm1797, %v1791, %v1808
        %v1810 = vsel %vm1796, %v1807, %v1809
        %v1811 = vshll.u32 %v1771, 8
        %v1812 = vmul.u32.u64.compose %v1811, %v1810
        %v1813 = vextract.low.u32 %v1812
        %v1814 = vextract.high.u32 %v1812
        %v1815 = vmul.u32.u64.compose %v1811, %v1806
        %v1816 = vextract.low.u32 %v1815
        %v1817 = vextract.high.u32 %v1815
        %v1818 = vmul.u32 %v1811, %v1802
        %v1819 = vadd.s32 %v1814, %v1816
        %vm1820 = vc.u32 %v1814, %v1816
        %v1821 = vadd.s32 %v1817, 1
        %v1822 = vsel %vm1820, %v1821, %v1817
        %v1823 = vadd.s32 %v1818, %v1822
        %v1824 = vadd.s32 %v1823, 536870912
        %v1825 = vshrl.u32 %v1824, 30
        %v1826 = vshll.u32 %v1825, 30
        %v1827 = vsub.s32 %v1823, %v1826
        %vm1828 = vcmp.lt.s32.totalorder %v1827, 0
        %v1829 = vsub.s32 0, %v1827
        %v1830 = vsel %vm1828, %v1829, %v1827
        %v1831 = vclz %v1830
        %v1832 = vsub.s32 %v1831, 2
        %vm1833 = vcmp.gt.s32.totalorder 0, %v1832
        %v1834 = vsel %vm1833, 0, %v1832
        %v1835 = vsub.s32 32, %v1834
        %v1836 = vshll.u32 %v1827, %v1834
        %v1837 = vshrl.u32 %v1819, %v1835
        %v1838 = vor.u32 %v1836, %v1837
        %v1839 = vsub.s32 4294967266, %v1834
        %v1840 = vadd.s32 %v1839, 127
        %v1841 = vshll.u32 %v1840, 23
        %v1842 = vor.u32 4788187, %v1841
        %v1843 = vand.u32 2147483647, %v1842
        %v1845 = vcvt.s32.f32 %v1838
        %v1846 = vmul.f32 %v1845, %v1843
        %v1847 = vxor.u32 %v1846, 2147483648
        %v1848 = vsel %vm1765, %v1847, %v1846
        %v1849 = vsub.s32 4, %v1825
        %v1850 = vsel %vm1765, %v1849, %v1825
        %v1851 = vsel %vm1764, %v1761, %v1848
        %v1852 = vsel %vm1764, 0, %v1850
        %v1853 = vcosq.f32.pop %v1851
        %v1854 = vsinq.f32.pop %v1851
        %vm1855 = vweird.f32 %v1761
        %v1856 = vand.u32 %v1852, 3
        %vm1857 = vcmp.lt.s32.totalorder %v1856, 2
        %vm1858 = vcmp.eq.s32.totalorder %v1856, 0
        %v1859 = vxor.u32 %v1854, 2147483648
        %v1860 = vsel %vm1858, %v1853, %v1859
        %vm1861 = vcmp.eq.s32.totalorder %v1856, 2
        %v1862 = vxor.u32 %v1853, 2147483648
        %v1863 = vsel %vm1861, %v1862, %v1854
        %v1864 = vsel %vm1857, %v1860, %v1863
        %v1865 = vsel %vm1855, nan, %v1864
        %v1866 = vand.u32 2147483647, %v1762
        %vm1867 = vcmp.le.f32.partialorder %v1866, 0.7853982
        %vm1868 = vcmp.lt.s32.totalorder %v1762, 0
        %v1869 = vand.u32 %v1762, 2139095040
        %v1870 = vshrl.u32 %v1869, 23
        %v1871 = vsub.s32 %v1870, 127
        %v1872 = vand.u32 2147483647, %v1762
        %v1873 = vand.u32 %v1872, 8388607
        %v1874 = vor.u32 %v1873, 8388608
        %v1875 = vsub.s32 0, %v1874
        %v1876 = vadd.s32 %v1871, 1
        %vm1877 = vcmp.gt.s32.totalorder %v1876, 0
        %v1878 = vsel %vm1877, %v1876, 0
        %v1879 = vshrl.u32 %v1878, 5
        %v1880 = vand.u32 %v1878, 31
        %v1881 = vsub.s32 32, %v1880
        %v1882 = vshrl.u32 683565275, %v1881
        %v1883 = vshll.u32 683565275, %v1880
        %v1884 = vshrl.u32 2475754826, %v1881
        %v1885 = vor.u32 %v1883, %v1884
        %v1886 = vshll.u32 2475754826, %v1880
        %v1887 = vshrl.u32 2131351028, %v1881
        %v1888 = vor.u32 %v1886, %v1887
        %v1889 = vshll.u32 2131351028, %v1880
        %v1890 = vshrl.u32 2102212464, %v1881
        %v1891 = vor.u32 %v1889, %v1890
        %v1892 = vshll.u32 2102212464, %v1880
        %v1893 = vshrl.u32 920167782, %v1881
        %v1894 = vor.u32 %v1892, %v1893
        %v1895 = vshll.u32 920167782, %v1880
        %v1896 = vshrl.u32 1326507024, %v1881
        %v1897 = vor.u32 %v1895, %v1896
        %vm1898 = vcmp.lt.s32.totalorder %v1879, 1
        %vm1899 = vcmp.lt.s32.totalorder %v1879, 2
        %vm1900 = vcmp.lt.s32.totalorder %v1879, 3
        %vm1901 = vcmp.lt.s32.totalorder %v1879, 4
        %v1902 = vsel %vm1898, %v1882, %v1885
        %v1903 = vsel %vm1901, %v1891, 2102212464
        %v1904 = vsel %vm1900, %v1888, %v1903
        %v1905 = vsel %vm1899, %v1902, %v1904
        %v1906 = vsel %vm1898, %v1885, %v1888
        %v1907 = vsel %vm1901, %v1894, 920167782
        %v1908 = vsel %vm1900, %v1891, %v1907
        %v1909 = vsel %vm1899, %v1906, %v1908
        %v1910 = vsel %vm1898, %v1888, %v1891
        %v1911 = vsel %vm1901, %v1897, 1326507024
        %v1912 = vsel %vm1900, %v1894, %v1911
        %v1913 = vsel %vm1899, %v1910, %v1912
        %v1914 = vshll.u32 %v1874, 8
        %v1915 = vmul.u32.u64.compose %v1914, %v1913
        %v1916 = vextract.low.u32 %v1915
        %v1917 = vextract.high.u32 %v1915
        %v1918 = vmul.u32.u64.compose %v1914, %v1909
        %v1919 = vextract.low.u32 %v1918
        %v1920 = vextract.high.u32 %v1918
        %v1921 = vmul.u32 %v1914, %v1905
        %v1922 = vadd.s32 %v1917, %v1919
        %vm1923 = vc.u32 %v1917, %v1919
        %v1924 = vadd.s32 %v1920, 1
        %v1925 = vsel %vm1923, %v1924, %v1920
        %v1926 = vadd.s32 %v1921, %v1925
        %v1927 = vadd.s32 %v1926, 536870912
        %v1928 = vshrl.u32 %v1927, 30
        %v1929 = vshll.u32 %v1928, 30
        %v1930 = vsub.s32 %v1926, %v1929
        %vm1931 = vcmp.lt.s32.totalorder %v1930, 0
        %v1932 = vsub.s32 0, %v1930
        %v1933 = vsel %vm1931, %v1932, %v1930
        %v1934 = vclz %v1933
        %v1935 = vsub.s32 %v1934, 2
        %vm1936 = vcmp.gt.s32.totalorder 0, %v1935
        %v1937 = vsel %vm1936, 0, %v1935
        %v1938 = vsub.s32 32, %v1937
        %v1939 = vshll.u32 %v1930, %v1937
        %v1940 = vshrl.u32 %v1922, %v1938
        %v1941 = vor.u32 %v1939, %v1940
        %v1942 = vsub.s32 4294967266, %v1937
        %v1943 = vadd.s32 %v1942, 127
        %v1944 = vshll.u32 %v1943, 23
        %v1945 = vor.u32 4788187, %v1944
        %v1946 = vand.u32 2147483647, %v1945
        %v1948 = vcvt.s32.f32 %v1941
        %v1949 = vmul.f32 %v1948, %v1946
        %v1950 = vxor.u32 %v1949, 2147483648
        %v1951 = vsel %vm1868, %v1950, %v1949
        %v1952 = vsub.s32 4, %v1928
        %v1953 = vsel %vm1868, %v1952, %v1928
        %v1954 = vsel %vm1867, %v1762, %v1951
        %v1955 = vsel %vm1867, 0, %v1953
        %v1956 = vcosq.f32.pop %v1954
        %v1957 = vsinq.f32.pop %v1954
        %vm1958 = vweird.f32 %v1762
        %v1959 = vand.u32 %v1955, 3
        %vm1960 = vcmp.lt.s32.totalorder %v1959, 2
        %vm1961 = vcmp.eq.s32.totalorder %v1959, 0
        %v1962 = vxor.u32 %v1957, 2147483648
        %v1963 = vsel %vm1961, %v1956, %v1962
        %vm1964 = vcmp.eq.s32.totalorder %v1959, 2
        %v1965 = vxor.u32 %v1956, 2147483648
        %v1966 = vsel %vm1964, %v1965, %v1957
        %v1967 = vsel %vm1960, %v1963, %v1966
        %v1968 = vsel %vm1958, nan, %v1967
        %v1969 = vand.u32 2147483647, %v1761
        %vm1970 = vcmp.le.f32.partialorder %v1969, 0.7853982
        %vm1971 = vcmp.lt.s32.totalorder %v1761, 0
        %v1972 = vand.u32 %v1761, 2139095040
        %v1973 = vshrl.u32 %v1972, 23
        %v1974 = vsub.s32 %v1973, 127
        %v1975 = vand.u32 2147483647, %v1761
        %v1976 = vand.u32 %v1975, 8388607
        %v1977 = vor.u32 %v1976, 8388608
        %v1978 = vsub.s32 0, %v1977
        %v1979 = vadd.s32 %v1974, 1
        %vm1980 = vcmp.gt.s32.totalorder %v1979, 0
        %v1981 = vsel %vm1980, %v1979, 0
        %v1982 = vshrl.u32 %v1981, 5
        %v1983 = vand.u32 %v1981, 31
        %v1984 = vsub.s32 32, %v1983
        %v1985 = vshrl.u32 683565275, %v1984
        %v1986 = vshll.u32 683565275, %v1983
        %v1987 = vshrl.u32 2475754826, %v1984
        %v1988 = vor.u32 %v1986, %v1987
        %v1989 = vshll.u32 2475754826, %v1983
        %v1990 = vshrl.u32 2131351028, %v1984
        %v1991 = vor.u32 %v1989, %v1990
        %v1992 = vshll.u32 2131351028, %v1983
        %v1993 = vshrl.u32 2102212464, %v1984
        %v1994 = vor.u32 %v1992, %v1993
        %v1995 = vshll.u32 2102212464, %v1983
        %v1996 = vshrl.u32 920167782, %v1984
        %v1997 = vor.u32 %v1995, %v1996
        %v1998 = vshll.u32 920167782, %v1983
        %v1999 = vshrl.u32 1326507024, %v1984
        %v2000 = vor.u32 %v1998, %v1999
        %vm2001 = vcmp.lt.s32.totalorder %v1982, 1
        %vm2002 = vcmp.lt.s32.totalorder %v1982, 2
        %vm2003 = vcmp.lt.s32.totalorder %v1982, 3
        %vm2004 = vcmp.lt.s32.totalorder %v1982, 4
        %v2005 = vsel %vm2001, %v1985, %v1988
        %v2006 = vsel %vm2004, %v1994, 2102212464
        %v2007 = vsel %vm2003, %v1991, %v2006
        %v2008 = vsel %vm2002, %v2005, %v2007
        %v2009 = vsel %vm2001, %v1988, %v1991
        %v2010 = vsel %vm2004, %v1997, 920167782
        %v2011 = vsel %vm2003, %v1994, %v2010
        %v2012 = vsel %vm2002, %v2009, %v2011
        %v2013 = vsel %vm2001, %v1991, %v1994
        %v2014 = vsel %vm2004, %v2000, 1326507024
        %v2015 = vsel %vm2003, %v1997, %v2014
        %v2016 = vsel %vm2002, %v2013, %v2015
        %v2017 = vshll.u32 %v1977, 8
        %v2018 = vmul.u32.u64.compose %v2017, %v2016
        %v2019 = vextract.low.u32 %v2018
        %v2020 = vextract.high.u32 %v2018
        %v2021 = vmul.u32.u64.compose %v2017, %v2012
        %v2022 = vextract.low.u32 %v2021
        %v2023 = vextract.high.u32 %v2021
        %v2024 = vmul.u32 %v2017, %v2008
        %v2025 = vadd.s32 %v2020, %v2022
        %vm2026 = vc.u32 %v2020, %v2022
        %v2027 = vadd.s32 %v2023, 1
        %v2028 = vsel %vm2026, %v2027, %v2023
        %v2029 = vadd.s32 %v2024, %v2028
        %v2030 = vadd.s32 %v2029, 536870912
        %v2031 = vshrl.u32 %v2030, 30
        %v2032 = vshll.u32 %v2031, 30
        %v2033 = vsub.s32 %v2029, %v2032
        %vm2034 = vcmp.lt.s32.totalorder %v2033, 0
        %v2035 = vsub.s32 0, %v2033
        %v2036 = vsel %vm2034, %v2035, %v2033
        %v2037 = vclz %v2036
        %v2038 = vsub.s32 %v2037, 2
        %vm2039 = vcmp.gt.s32.totalorder 0, %v2038
        %v2040 = vsel %vm2039, 0, %v2038
        %v2041 = vsub.s32 32, %v2040
        %v2042 = vshll.u32 %v2033, %v2040
        %v2043 = vshrl.u32 %v2025, %v2041
        %v2044 = vor.u32 %v2042, %v2043
        %v2045 = vsub.s32 4294967266, %v2040
        %v2046 = vadd.s32 %v2045, 127
        %v2047 = vshll.u32 %v2046, 23
        %v2048 = vor.u32 4788187, %v2047
        %v2049 = vand.u32 2147483647, %v2048
        %v2051 = vcvt.s32.f32 %v2044
        %v2052 = vmul.f32 %v2051, %v2049
        %v2053 = vxor.u32 %v2052, 2147483648
        %v2054 = vsel %vm1971, %v2053, %v2052
        %v2055 = vsub.s32 4, %v2031
        %v2056 = vsel %vm1971, %v2055, %v2031
        %v2057 = vsel %vm1970, %v1761, %v2054
        %v2058 = vsel %vm1970, 0, %v2056
        %v2059 = vcosq.f32.pop %v2057
        %v2060 = vsinq.f32.pop %v2057
        %vm2061 = vweird.f32 %v1761
        %v2062 = vadd.s32 %v2058, 3
        %v2063 = vand.u32 %v2062, 3
        %vm2064 = vcmp.lt.s32.totalorder %v2063, 2
        %vm2065 = vcmp.eq.s32.totalorder %v2063, 0
        %v2066 = vxor.u32 %v2060, 2147483648
        %v2067 = vsel %vm2065, %v2059, %v2066
        %vm2068 = vcmp.eq.s32.totalorder %v2063, 2
        %v2069 = vxor.u32 %v2059, 2147483648
        %v2070 = vsel %vm2068, %v2069, %v2060
        %v2071 = vsel %vm2064, %v2067, %v2070
        %v2072 = vsel %vm2061, nan, %v2071
        %v2073 = vand.u32 2147483647, %v1762
        %vm2074 = vcmp.le.f32.partialorder %v2073, 0.7853982
        %vm2075 = vcmp.lt.s32.totalorder %v1762, 0
        %v2076 = vand.u32 %v1762, 2139095040
        %v2077 = vshrl.u32 %v2076, 23
        %v2078 = vsub.s32 %v2077, 127
        %v2079 = vand.u32 2147483647, %v1762
        %v2080 = vand.u32 %v2079, 8388607
        %v2081 = vor.u32 %v2080, 8388608
        %v2082 = vsub.s32 0, %v2081
        %v2083 = vadd.s32 %v2078, 1
        %vm2084 = vcmp.gt.s32.totalorder %v2083, 0
        %v2085 = vsel %vm2084, %v2083, 0
        %v2086 = vshrl.u32 %v2085, 5
        %v2087 = vand.u32 %v2085, 31
        %v2088 = vsub.s32 32, %v2087
        %v2089 = vshrl.u32 683565275, %v2088
        %v2090 = vshll.u32 683565275, %v2087
        %v2091 = vshrl.u32 2475754826, %v2088
        %v2092 = vor.u32 %v2090, %v2091
        %v2093 = vshll.u32 2475754826, %v2087
        %v2094 = vshrl.u32 2131351028, %v2088
        %v2095 = vor.u32 %v2093, %v2094
        %v2096 = vshll.u32 2131351028, %v2087
        %v2097 = vshrl.u32 2102212464, %v2088
        %v2098 = vor.u32 %v2096, %v2097
        %v2099 = vshll.u32 2102212464, %v2087
        %v2100 = vshrl.u32 920167782, %v2088
        %v2101 = vor.u32 %v2099, %v2100
        %v2102 = vshll.u32 920167782, %v2087
        %v2103 = vshrl.u32 1326507024, %v2088
        %v2104 = vor.u32 %v2102, %v2103
        %vm2105 = vcmp.lt.s32.totalorder %v2086, 1
        %vm2106 = vcmp.lt.s32.totalorder %v2086, 2
        %vm2107 = vcmp.lt.s32.totalorder %v2086, 3
        %vm2108 = vcmp.lt.s32.totalorder %v2086, 4
        %v2109 = vsel %vm2105, %v2089, %v2092
        %v2110 = vsel %vm2108, %v2098, 2102212464
        %v2111 = vsel %vm2107, %v2095, %v2110
        %v2112 = vsel %vm2106, %v2109, %v2111
        %v2113 = vsel %vm2105, %v2092, %v2095
        %v2114 = vsel %vm2108, %v2101, 920167782
        %v2115 = vsel %vm2107, %v2098, %v2114
        %v2116 = vsel %vm2106, %v2113, %v2115
        %v2117 = vsel %vm2105, %v2095, %v2098
        %v2118 = vsel %vm2108, %v2104, 1326507024
        %v2119 = vsel %vm2107, %v2101, %v2118
        %v2120 = vsel %vm2106, %v2117, %v2119
        %v2121 = vshll.u32 %v2081, 8
        %v2122 = vmul.u32.u64.compose %v2121, %v2120
        %v2123 = vextract.low.u32 %v2122
        %v2124 = vextract.high.u32 %v2122
        %v2125 = vmul.u32.u64.compose %v2121, %v2116
        %v2126 = vextract.low.u32 %v2125
        %v2127 = vextract.high.u32 %v2125
        %v2128 = vmul.u32 %v2121, %v2112
        %v2129 = vadd.s32 %v2124, %v2126
        %vm2130 = vc.u32 %v2124, %v2126
        %v2131 = vadd.s32 %v2127, 1
        %v2132 = vsel %vm2130, %v2131, %v2127
        %v2133 = vadd.s32 %v2128, %v2132
        %v2134 = vadd.s32 %v2133, 536870912
        %v2135 = vshrl.u32 %v2134, 30
        %v2136 = vshll.u32 %v2135, 30
        %v2137 = vsub.s32 %v2133, %v2136
        %vm2138 = vcmp.lt.s32.totalorder %v2137, 0
        %v2139 = vsub.s32 0, %v2137
        %v2140 = vsel %vm2138, %v2139, %v2137
        %v2141 = vclz %v2140
        %v2142 = vsub.s32 %v2141, 2
        %vm2143 = vcmp.gt.s32.totalorder 0, %v2142
        %v2144 = vsel %vm2143, 0, %v2142
        %v2145 = vsub.s32 32, %v2144
        %v2146 = vshll.u32 %v2137, %v2144
        %v2147 = vshrl.u32 %v2129, %v2145
        %v2148 = vor.u32 %v2146, %v2147
        %v2149 = vsub.s32 4294967266, %v2144
        %v2150 = vadd.s32 %v2149, 127
        %v2151 = vshll.u32 %v2150, 23
        %v2152 = vor.u32 4788187, %v2151
        %v2153 = vand.u32 2147483647, %v2152
        %v2155 = vcvt.s32.f32 %v2148
        %v2156 = vmul.f32 %v2155, %v2153
        %v2157 = vxor.u32 %v2156, 2147483648
        %v2158 = vsel %vm2075, %v2157, %v2156
        %v2159 = vsub.s32 4, %v2135
        %v2160 = vsel %vm2075, %v2159, %v2135
        %v2161 = vsel %vm2074, %v1762, %v2158
        %v2162 = vsel %vm2074, 0, %v2160
        %v2163 = vcosq.f32.pop %v2161
        %v2164 = vsinq.f32.pop %v2161
        %vm2165 = vweird.f32 %v1762
        %v2166 = vadd.s32 %v2162, 3
        %v2167 = vand.u32 %v2166, 3
        %vm2168 = vcmp.lt.s32.totalorder %v2167, 2
        %vm2169 = vcmp.eq.s32.totalorder %v2167, 0
        %v2170 = vxor.u32 %v2164, 2147483648
        %v2171 = vsel %vm2169, %v2163, %v2170
        %vm2172 = vcmp.eq.s32.totalorder %v2167, 2
        %v2173 = vxor.u32 %v2163, 2147483648
        %v2174 = vsel %vm2172, %v2173, %v2164
        %v2175 = vsel %vm2168, %v2171, %v2174
        %v2176 = vsel %vm2165, nan, %v2175
        %2177 = vadd.xlane.f32.xlu0 %v1865
        %v2178 = vpop.xlane.xlu0 %2177
        %2179 = vadd.xlane.f32.xlu0 %v1968
        %v2180 = vpop.xlane.xlu0 %2179
        %2181 = vadd.xlane.f32.xlu0 %v2072
        %v2182 = vpop.xlane.xlu0 %2181
        %2183 = vadd.xlane.f32.xlu0 %v2176
        %v2184 = vpop.xlane.xlu0 %2183
        %v2185 = vmul.f32 %v2182, 0.0078125
        %v2186 = vmul.f32 %v2184, 0.0078125
        %v2187 = vsub.f32 %v2072, %v2185
        %v2188 = vsub.f32 %v2176, %v2186
        %v2189 = vmul.f32 %v2178, 0.0078125
        %v2190 = vmul.f32 %v2180, 0.0078125
        %v2191 = vsub.f32 %v1865, %v2189
        %v2192 = vsub.f32 %v1968, %v2190
        %v2193 = vand.u32 2147483647, %v2191
        %v2194 = vand.u32 2147483647, %v2187
        %v2195 = vmin.f32 %v2193, %v2194
        %v2196 = vmax.f32 %v2193, %v2194
        %v2197 = vrcp.pop %v2196
        %v2198 = vmul.f32 %v2195, %v2197
        %v2199 = vmul.f32 %v2198, %v2198
        %v2200 = vmul.f32 0.002785687, %v2199
        %v2201 = vadd.f32 %v2200, -0.015866
        %v2202 = vmul.f32 %v2201, %v2199
        %v2203 = vadd.f32 %v2202, 0.04247222
        %v2204 = vmul.f32 %v2203, %v2199
        %v2205 = vadd.f32 %v2204, -0.074975304
        %v2206 = vmul.f32 %v2205, %v2199
        %v2207 = vadd.f32 %v2206, 0.1064488
        %v2208 = vmul.f32 %v2207, %v2199
        %v2209 = vadd.f32 %v2208, -0.14207031
        %v2210 = vmul.f32 %v2209, %v2199
        %v2211 = vadd.f32 %v2210, 0.19993454
        %v2212 = vmul.f32 %v2211, %v2199
        %v2213 = vadd.f32 %v2212, -0.33333147
        %v2214 = vmul.f32 %v2213, %v2199
        %v2215 = vmul.f32 %v2214, %v2198
        %v2216 = vadd.f32 %v2215, %v2198
        %vm2217 = vcmp.gt.f32.partialorder %v2194, %v2193
        %v2218 = vsub.f32 1.5707964, %v2216
        %v2219 = vsel %vm2217, %v2218, %v2216
        %vm2220 = vcmp.lt.f32.partialorder %v2191, 0.0
        %v2221 = vsub.f32 3.1415927, %v2219
        %v2222 = vsel %vm2220, %v2221, %v2219
        %vm2223 = vcmp.lt.s32.totalorder %v2191, 0
        %v2224 = vsel %vm2223, 3.1415927, 0.0
        %vm2225 = vcmp.eq.f32.partialorder %v2187, 0.0
        %v2226 = vsel %vm2225, %v2224, %v2222
        %vm2227 = vcmp.ne.f32.partialorder %v2191, %v2191
        %vm2228 = vcmp.ne.f32.partialorder %v2187, %v2187
        %vm2229 = vmor %vm2227, %vm2228
        %v2230 = vsel %vm2229, nan, %v2226
        %vm2231 = vcmp.lt.f32.partialorder %v2191, 0.0
        %v2232 = vsel %vm2231, 2.3561945, 0.7853982
        %vm2233 = vcmp.eq.s32.totalorder %v2193, inf
        %vm2234 = vcmp.eq.s32.totalorder %v2194, inf
        %vm2235 = vmand %vm2233, %vm2234
        %v2236 = vsel %vm2235, %v2232, %v2230
        %v2237 = vand.u32 2147483647, %v2236
        %v2238 = vand.u32 %v2187, 2147483648
        %v2239 = vor.u32 %v2237, %v2238
        %v2240 = vand.u32 2147483647, %v2192
        %v2241 = vand.u32 2147483647, %v2188
        %v2242 = vmin.f32 %v2240, %v2241
        %v2243 = vmax.f32 %v2240, %v2241
        %v2244 = vrcp.pop %v2243
        %v2245 = vmul.f32 %v2242, %v2244
        %v2246 = vmul.f32 %v2245, %v2245
        %v2247 = vmul.f32 0.002785687, %v2246
        %v2248 = vadd.f32 %v2247, -0.015866
        %v2249 = vmul.f32 %v2248, %v2246
        %v2250 = vadd.f32 %v2249, 0.04247222
        %v2251 = vmul.f32 %v2250, %v2246
        %v2252 = vadd.f32 %v2251, -0.074975304
        %v2253 = vmul.f32 %v2252, %v2246
        %v2254 = vadd.f32 %v2253, 0.1064488
        %v2255 = vmul.f32 %v2254, %v2246
        %v2256 = vadd.f32 %v2255, -0.14207031
        %v2257 = vmul.f32 %v2256, %v2246
        %v2258 = vadd.f32 %v2257, 0.19993454
        %v2259 = vmul.f32 %v2258, %v2246
        %v2260 = vadd.f32 %v2259, -0.33333147
        %v2261 = vmul.f32 %v2260, %v2246
        %v2262 = vmul.f32 %v2261, %v2245
        %v2263 = vadd.f32 %v2262, %v2245
        %vm2264 = vcmp.gt.f32.partialorder %v2241, %v2240
        %v2265 = vsub.f32 1.5707964, %v2263
        %v2266 = vsel %vm2264, %v2265, %v2263
        %vm2267 = vcmp.lt.f32.partialorder %v2192, 0.0
        %v2268 = vsub.f32 3.1415927, %v2266
        %v2269 = vsel %vm2267, %v2268, %v2266
        %vm2270 = vcmp.lt.s32.totalorder %v2192, 0
        %v2271 = vsel %vm2270, 3.1415927, 0.0
        %vm2272 = vcmp.eq.f32.partialorder %v2188, 0.0
        %v2273 = vsel %vm2272, %v2271, %v2269
        %vm2274 = vcmp.ne.f32.partialorder %v2192, %v2192
        %vm2275 = vcmp.ne.f32.partialorder %v2188, %v2188
        %vm2276 = vmor %vm2274, %vm2275
        %v2277 = vsel %vm2276, nan, %v2273
        %vm2278 = vcmp.lt.f32.partialorder %v2192, 0.0
        %v2279 = vsel %vm2278, 2.3561945, 0.7853982
        %vm2280 = vcmp.eq.s32.totalorder %v2240, inf
        %vm2281 = vcmp.eq.s32.totalorder %v2241, inf
        %vm2282 = vmand %vm2280, %vm2281
        %v2283 = vsel %vm2282, %v2279, %v2277
        %v2284 = vand.u32 2147483647, %v2283
        %v2285 = vand.u32 %v2188, 2147483648
        %v2286 = vor.u32 %v2284, %v2285
        %s2287 = scalar_lea.vmem %s152, 48 [#allocation5]
        %2288 = vst [vmem:[%s2287] sm:$0xff] %v2239
        %2289 = vst [vmem:[%s2287 + $0x8] sm:$0xff] %v2286
        %s2290 = scalar_lea.vmem %s134, 80 [#allocation2]
        %v2291 = vld [vmem:[%s2290] sm:$0xff]
        %v2292 = vld [vmem:[%s2290 + $0x8] sm:$0xff]
        %v2293 = vld [vmem:[%s134] sm:$0xff]
        %v2294 = vld [vmem:[%s134 + $0x8] sm:$0xff]
        %v2295 = vsub.f32 %v2291, %v2293
        %v2296 = vsub.f32 %v2292, %v2294
        %v2297 = vand.u32 2147483647, %v2295
        %vm2298 = vcmp.le.f32.partialorder %v2297, 0.7853982
        %vm2299 = vcmp.lt.s32.totalorder %v2295, 0
        %v2300 = vand.u32 %v2295, 2139095040
        %v2301 = vshrl.u32 %v2300, 23
        %v2302 = vsub.s32 %v2301, 127
        %v2303 = vand.u32 2147483647, %v2295
        %v2304 = vand.u32 %v2303, 8388607
        %v2305 = vor.u32 %v2304, 8388608
        %v2306 = vsub.s32 0, %v2305
        %v2307 = vadd.s32 %v2302, 1
        %vm2308 = vcmp.gt.s32.totalorder %v2307, 0
        %v2309 = vsel %vm2308, %v2307, 0
        %v2310 = vshrl.u32 %v2309, 5
        %v2311 = vand.u32 %v2309, 31
        %v2312 = vsub.s32 32, %v2311
        %v2313 = vshrl.u32 683565275, %v2312
        %v2314 = vshll.u32 683565275, %v2311
        %v2315 = vshrl.u32 2475754826, %v2312
        %v2316 = vor.u32 %v2314, %v2315
        %v2317 = vshll.u32 2475754826, %v2311
        %v2318 = vshrl.u32 2131351028, %v2312
        %v2319 = vor.u32 %v2317, %v2318
        %v2320 = vshll.u32 2131351028, %v2311
        %v2321 = vshrl.u32 2102212464, %v2312
        %v2322 = vor.u32 %v2320, %v2321
        %v2323 = vshll.u32 2102212464, %v2311
        %v2324 = vshrl.u32 920167782, %v2312
        %v2325 = vor.u32 %v2323, %v2324
        %v2326 = vshll.u32 920167782, %v2311
        %v2327 = vshrl.u32 1326507024, %v2312
        %v2328 = vor.u32 %v2326, %v2327
        %vm2329 = vcmp.lt.s32.totalorder %v2310, 1
        %vm2330 = vcmp.lt.s32.totalorder %v2310, 2
        %vm2331 = vcmp.lt.s32.totalorder %v2310, 3
        %vm2332 = vcmp.lt.s32.totalorder %v2310, 4
        %v2333 = vsel %vm2329, %v2313, %v2316
        %v2334 = vsel %vm2332, %v2322, 2102212464
        %v2335 = vsel %vm2331, %v2319, %v2334
        %v2336 = vsel %vm2330, %v2333, %v2335
        %v2337 = vsel %vm2329, %v2316, %v2319
        %v2338 = vsel %vm2332, %v2325, 920167782
        %v2339 = vsel %vm2331, %v2322, %v2338
        %v2340 = vsel %vm2330, %v2337, %v2339
        %v2341 = vsel %vm2329, %v2319, %v2322
        %v2342 = vsel %vm2332, %v2328, 1326507024
        %v2343 = vsel %vm2331, %v2325, %v2342
        %v2344 = vsel %vm2330, %v2341, %v2343
        %v2345 = vshll.u32 %v2305, 8
        %v2346 = vmul.u32.u64.compose %v2345, %v2344
        %v2347 = vextract.low.u32 %v2346
        %v2348 = vextract.high.u32 %v2346
        %v2349 = vmul.u32.u64.compose %v2345, %v2340
        %v2350 = vextract.low.u32 %v2349
        %v2351 = vextract.high.u32 %v2349
        %v2352 = vmul.u32 %v2345, %v2336
        %v2353 = vadd.s32 %v2348, %v2350
        %vm2354 = vc.u32 %v2348, %v2350
        %v2355 = vadd.s32 %v2351, 1
        %v2356 = vsel %vm2354, %v2355, %v2351
        %v2357 = vadd.s32 %v2352, %v2356
        %v2358 = vadd.s32 %v2357, 536870912
        %v2359 = vshrl.u32 %v2358, 30
        %v2360 = vshll.u32 %v2359, 30
        %v2361 = vsub.s32 %v2357, %v2360
        %vm2362 = vcmp.lt.s32.totalorder %v2361, 0
        %v2363 = vsub.s32 0, %v2361
        %v2364 = vsel %vm2362, %v2363, %v2361
        %v2365 = vclz %v2364
        %v2366 = vsub.s32 %v2365, 2
        %vm2367 = vcmp.gt.s32.totalorder 0, %v2366
        %v2368 = vsel %vm2367, 0, %v2366
        %v2369 = vsub.s32 32, %v2368
        %v2370 = vshll.u32 %v2361, %v2368
        %v2371 = vshrl.u32 %v2353, %v2369
        %v2372 = vor.u32 %v2370, %v2371
        %v2373 = vsub.s32 4294967266, %v2368
        %v2374 = vadd.s32 %v2373, 127
        %v2375 = vshll.u32 %v2374, 23
        %v2376 = vor.u32 4788187, %v2375
        %v2377 = vand.u32 2147483647, %v2376
        %v2379 = vcvt.s32.f32 %v2372
        %v2380 = vmul.f32 %v2379, %v2377
        %v2381 = vxor.u32 %v2380, 2147483648
        %v2382 = vsel %vm2299, %v2381, %v2380
        %v2383 = vsub.s32 4, %v2359
        %v2384 = vsel %vm2299, %v2383, %v2359
        %v2385 = vsel %vm2298, %v2295, %v2382
        %v2386 = vsel %vm2298, 0, %v2384
        %v2387 = vcosq.f32.pop %v2385
        %v2388 = vsinq.f32.pop %v2385
        %vm2389 = vweird.f32 %v2295
        %v2390 = vand.u32 %v2386, 3
        %vm2391 = vcmp.lt.s32.totalorder %v2390, 2
        %vm2392 = vcmp.eq.s32.totalorder %v2390, 0
        %v2393 = vxor.u32 %v2388, 2147483648
        %v2394 = vsel %vm2392, %v2387, %v2393
        %vm2395 = vcmp.eq.s32.totalorder %v2390, 2
        %v2396 = vxor.u32 %v2387, 2147483648
        %v2397 = vsel %vm2395, %v2396, %v2388
        %v2398 = vsel %vm2391, %v2394, %v2397
        %v2399 = vsel %vm2389, nan, %v2398
        %v2400 = vand.u32 2147483647, %v2296
        %vm2401 = vcmp.le.f32.partialorder %v2400, 0.7853982
        %vm2402 = vcmp.lt.s32.totalorder %v2296, 0
        %v2403 = vand.u32 %v2296, 2139095040
        %v2404 = vshrl.u32 %v2403, 23
        %v2405 = vsub.s32 %v2404, 127
        %v2406 = vand.u32 2147483647, %v2296
        %v2407 = vand.u32 %v2406, 8388607
        %v2408 = vor.u32 %v2407, 8388608
        %v2409 = vsub.s32 0, %v2408
        %v2410 = vadd.s32 %v2405, 1
        %vm2411 = vcmp.gt.s32.totalorder %v2410, 0
        %v2412 = vsel %vm2411, %v2410, 0
        %v2413 = vshrl.u32 %v2412, 5
        %v2414 = vand.u32 %v2412, 31
        %v2415 = vsub.s32 32, %v2414
        %v2416 = vshrl.u32 683565275, %v2415
        %v2417 = vshll.u32 683565275, %v2414
        %v2418 = vshrl.u32 2475754826, %v2415
        %v2419 = vor.u32 %v2417, %v2418
        %v2420 = vshll.u32 2475754826, %v2414
        %v2421 = vshrl.u32 2131351028, %v2415
        %v2422 = vor.u32 %v2420, %v2421
        %v2423 = vshll.u32 2131351028, %v2414
        %v2424 = vshrl.u32 2102212464, %v2415
        %v2425 = vor.u32 %v2423, %v2424
        %v2426 = vshll.u32 2102212464, %v2414
        %v2427 = vshrl.u32 920167782, %v2415
        %v2428 = vor.u32 %v2426, %v2427
        %v2429 = vshll.u32 920167782, %v2414
        %v2430 = vshrl.u32 1326507024, %v2415
        %v2431 = vor.u32 %v2429, %v2430
        %vm2432 = vcmp.lt.s32.totalorder %v2413, 1
        %vm2433 = vcmp.lt.s32.totalorder %v2413, 2
        %vm2434 = vcmp.lt.s32.totalorder %v2413, 3
        %vm2435 = vcmp.lt.s32.totalorder %v2413, 4
        %v2436 = vsel %vm2432, %v2416, %v2419
        %v2437 = vsel %vm2435, %v2425, 2102212464
        %v2438 = vsel %vm2434, %v2422, %v2437
        %v2439 = vsel %vm2433, %v2436, %v2438
        %v2440 = vsel %vm2432, %v2419, %v2422
        %v2441 = vsel %vm2435, %v2428, 920167782
        %v2442 = vsel %vm2434, %v2425, %v2441
        %v2443 = vsel %vm2433, %v2440, %v2442
        %v2444 = vsel %vm2432, %v2422, %v2425
        %v2445 = vsel %vm2435, %v2431, 1326507024
        %v2446 = vsel %vm2434, %v2428, %v2445
        %v2447 = vsel %vm2433, %v2444, %v2446
        %v2448 = vshll.u32 %v2408, 8
        %v2449 = vmul.u32.u64.compose %v2448, %v2447
        %v2450 = vextract.low.u32 %v2449
        %v2451 = vextract.high.u32 %v2449
        %v2452 = vmul.u32.u64.compose %v2448, %v2443
        %v2453 = vextract.low.u32 %v2452
        %v2454 = vextract.high.u32 %v2452
        %v2455 = vmul.u32 %v2448, %v2439
        %v2456 = vadd.s32 %v2451, %v2453
        %vm2457 = vc.u32 %v2451, %v2453
        %v2458 = vadd.s32 %v2454, 1
        %v2459 = vsel %vm2457, %v2458, %v2454
        %v2460 = vadd.s32 %v2455, %v2459
        %v2461 = vadd.s32 %v2460, 536870912
        %v2462 = vshrl.u32 %v2461, 30
        %v2463 = vshll.u32 %v2462, 30
        %v2464 = vsub.s32 %v2460, %v2463
        %vm2465 = vcmp.lt.s32.totalorder %v2464, 0
        %v2466 = vsub.s32 0, %v2464
        %v2467 = vsel %vm2465, %v2466, %v2464
        %v2468 = vclz %v2467
        %v2469 = vsub.s32 %v2468, 2
        %vm2470 = vcmp.gt.s32.totalorder 0, %v2469
        %v2471 = vsel %vm2470, 0, %v2469
        %v2472 = vsub.s32 32, %v2471
        %v2473 = vshll.u32 %v2464, %v2471
        %v2474 = vshrl.u32 %v2456, %v2472
        %v2475 = vor.u32 %v2473, %v2474
        %v2476 = vsub.s32 4294967266, %v2471
        %v2477 = vadd.s32 %v2476, 127
        %v2478 = vshll.u32 %v2477, 23
        %v2479 = vor.u32 4788187, %v2478
        %v2480 = vand.u32 2147483647, %v2479
        %v2482 = vcvt.s32.f32 %v2475
        %v2483 = vmul.f32 %v2482, %v2480
        %v2484 = vxor.u32 %v2483, 2147483648
        %v2485 = vsel %vm2402, %v2484, %v2483
        %v2486 = vsub.s32 4, %v2462
        %v2487 = vsel %vm2402, %v2486, %v2462
        %v2488 = vsel %vm2401, %v2296, %v2485
        %v2489 = vsel %vm2401, 0, %v2487
        %v2490 = vcosq.f32.pop %v2488
        %v2491 = vsinq.f32.pop %v2488
        %vm2492 = vweird.f32 %v2296
        %v2493 = vand.u32 %v2489, 3
        %vm2494 = vcmp.lt.s32.totalorder %v2493, 2
        %vm2495 = vcmp.eq.s32.totalorder %v2493, 0
        %v2496 = vxor.u32 %v2491, 2147483648
        %v2497 = vsel %vm2495, %v2490, %v2496
        %vm2498 = vcmp.eq.s32.totalorder %v2493, 2
        %v2499 = vxor.u32 %v2490, 2147483648
        %v2500 = vsel %vm2498, %v2499, %v2491
        %v2501 = vsel %vm2494, %v2497, %v2500
        %v2502 = vsel %vm2492, nan, %v2501
        %v2503 = vand.u32 2147483647, %v2295
        %vm2504 = vcmp.le.f32.partialorder %v2503, 0.7853982
        %vm2505 = vcmp.lt.s32.totalorder %v2295, 0
        %v2506 = vand.u32 %v2295, 2139095040
        %v2507 = vshrl.u32 %v2506, 23
        %v2508 = vsub.s32 %v2507, 127
        %v2509 = vand.u32 2147483647, %v2295
        %v2510 = vand.u32 %v2509, 8388607
        %v2511 = vor.u32 %v2510, 8388608
        %v2512 = vsub.s32 0, %v2511
        %v2513 = vadd.s32 %v2508, 1
        %vm2514 = vcmp.gt.s32.totalorder %v2513, 0
        %v2515 = vsel %vm2514, %v2513, 0
        %v2516 = vshrl.u32 %v2515, 5
        %v2517 = vand.u32 %v2515, 31
        %v2518 = vsub.s32 32, %v2517
        %v2519 = vshrl.u32 683565275, %v2518
        %v2520 = vshll.u32 683565275, %v2517
        %v2521 = vshrl.u32 2475754826, %v2518
        %v2522 = vor.u32 %v2520, %v2521
        %v2523 = vshll.u32 2475754826, %v2517
        %v2524 = vshrl.u32 2131351028, %v2518
        %v2525 = vor.u32 %v2523, %v2524
        %v2526 = vshll.u32 2131351028, %v2517
        %v2527 = vshrl.u32 2102212464, %v2518
        %v2528 = vor.u32 %v2526, %v2527
        %v2529 = vshll.u32 2102212464, %v2517
        %v2530 = vshrl.u32 920167782, %v2518
        %v2531 = vor.u32 %v2529, %v2530
        %v2532 = vshll.u32 920167782, %v2517
        %v2533 = vshrl.u32 1326507024, %v2518
        %v2534 = vor.u32 %v2532, %v2533
        %vm2535 = vcmp.lt.s32.totalorder %v2516, 1
        %vm2536 = vcmp.lt.s32.totalorder %v2516, 2
        %vm2537 = vcmp.lt.s32.totalorder %v2516, 3
        %vm2538 = vcmp.lt.s32.totalorder %v2516, 4
        %v2539 = vsel %vm2535, %v2519, %v2522
        %v2540 = vsel %vm2538, %v2528, 2102212464
        %v2541 = vsel %vm2537, %v2525, %v2540
        %v2542 = vsel %vm2536, %v2539, %v2541
        %v2543 = vsel %vm2535, %v2522, %v2525
        %v2544 = vsel %vm2538, %v2531, 920167782
        %v2545 = vsel %vm2537, %v2528, %v2544
        %v2546 = vsel %vm2536, %v2543, %v2545
        %v2547 = vsel %vm2535, %v2525, %v2528
        %v2548 = vsel %vm2538, %v2534, 1326507024
        %v2549 = vsel %vm2537, %v2531, %v2548
        %v2550 = vsel %vm2536, %v2547, %v2549
        %v2551 = vshll.u32 %v2511, 8
        %v2552 = vmul.u32.u64.compose %v2551, %v2550
        %v2553 = vextract.low.u32 %v2552
        %v2554 = vextract.high.u32 %v2552
        %v2555 = vmul.u32.u64.compose %v2551, %v2546
        %v2556 = vextract.low.u32 %v2555
        %v2557 = vextract.high.u32 %v2555
        %v2558 = vmul.u32 %v2551, %v2542
        %v2559 = vadd.s32 %v2554, %v2556
        %vm2560 = vc.u32 %v2554, %v2556
        %v2561 = vadd.s32 %v2557, 1
        %v2562 = vsel %vm2560, %v2561, %v2557
        %v2563 = vadd.s32 %v2558, %v2562
        %v2564 = vadd.s32 %v2563, 536870912
        %v2565 = vshrl.u32 %v2564, 30
        %v2566 = vshll.u32 %v2565, 30
        %v2567 = vsub.s32 %v2563, %v2566
        %vm2568 = vcmp.lt.s32.totalorder %v2567, 0
        %v2569 = vsub.s32 0, %v2567
        %v2570 = vsel %vm2568, %v2569, %v2567
        %v2571 = vclz %v2570
        %v2572 = vsub.s32 %v2571, 2
        %vm2573 = vcmp.gt.s32.totalorder 0, %v2572
        %v2574 = vsel %vm2573, 0, %v2572
        %v2575 = vsub.s32 32, %v2574
        %v2576 = vshll.u32 %v2567, %v2574
        %v2577 = vshrl.u32 %v2559, %v2575
        %v2578 = vor.u32 %v2576, %v2577
        %v2579 = vsub.s32 4294967266, %v2574
        %v2580 = vadd.s32 %v2579, 127
        %v2581 = vshll.u32 %v2580, 23
        %v2582 = vor.u32 4788187, %v2581
        %v2583 = vand.u32 2147483647, %v2582
        %v2585 = vcvt.s32.f32 %v2578
        %v2586 = vmul.f32 %v2585, %v2583
        %v2587 = vxor.u32 %v2586, 2147483648
        %v2588 = vsel %vm2505, %v2587, %v2586
        %v2589 = vsub.s32 4, %v2565
        %v2590 = vsel %vm2505, %v2589, %v2565
        %v2591 = vsel %vm2504, %v2295, %v2588
        %v2592 = vsel %vm2504, 0, %v2590
        %v2593 = vcosq.f32.pop %v2591
        %v2594 = vsinq.f32.pop %v2591
        %vm2595 = vweird.f32 %v2295
        %v2596 = vadd.s32 %v2592, 3
        %v2597 = vand.u32 %v2596, 3
        %vm2598 = vcmp.lt.s32.totalorder %v2597, 2
        %vm2599 = vcmp.eq.s32.totalorder %v2597, 0
        %v2600 = vxor.u32 %v2594, 2147483648
        %v2601 = vsel %vm2599, %v2593, %v2600
        %vm2602 = vcmp.eq.s32.totalorder %v2597, 2
        %v2603 = vxor.u32 %v2593, 2147483648
        %v2604 = vsel %vm2602, %v2603, %v2594
        %v2605 = vsel %vm2598, %v2601, %v2604
        %v2606 = vsel %vm2595, nan, %v2605
        %v2607 = vand.u32 2147483647, %v2296
        %vm2608 = vcmp.le.f32.partialorder %v2607, 0.7853982
        %vm2609 = vcmp.lt.s32.totalorder %v2296, 0
        %v2610 = vand.u32 %v2296, 2139095040
        %v2611 = vshrl.u32 %v2610, 23
        %v2612 = vsub.s32 %v2611, 127
        %v2613 = vand.u32 2147483647, %v2296
        %v2614 = vand.u32 %v2613, 8388607
        %v2615 = vor.u32 %v2614, 8388608
        %v2616 = vsub.s32 0, %v2615
        %v2617 = vadd.s32 %v2612, 1
        %vm2618 = vcmp.gt.s32.totalorder %v2617, 0
        %v2619 = vsel %vm2618, %v2617, 0
        %v2620 = vshrl.u32 %v2619, 5
        %v2621 = vand.u32 %v2619, 31
        %v2622 = vsub.s32 32, %v2621
        %v2623 = vshrl.u32 683565275, %v2622
        %v2624 = vshll.u32 683565275, %v2621
        %v2625 = vshrl.u32 2475754826, %v2622
        %v2626 = vor.u32 %v2624, %v2625
        %v2627 = vshll.u32 2475754826, %v2621
        %v2628 = vshrl.u32 2131351028, %v2622
        %v2629 = vor.u32 %v2627, %v2628
        %v2630 = vshll.u32 2131351028, %v2621
        %v2631 = vshrl.u32 2102212464, %v2622
        %v2632 = vor.u32 %v2630, %v2631
        %v2633 = vshll.u32 2102212464, %v2621
        %v2634 = vshrl.u32 920167782, %v2622
        %v2635 = vor.u32 %v2633, %v2634
        %v2636 = vshll.u32 920167782, %v2621
        %v2637 = vshrl.u32 1326507024, %v2622
        %v2638 = vor.u32 %v2636, %v2637
        %vm2639 = vcmp.lt.s32.totalorder %v2620, 1
        %vm2640 = vcmp.lt.s32.totalorder %v2620, 2
        %vm2641 = vcmp.lt.s32.totalorder %v2620, 3
        %vm2642 = vcmp.lt.s32.totalorder %v2620, 4
        %v2643 = vsel %vm2639, %v2623, %v2626
        %v2644 = vsel %vm2642, %v2632, 2102212464
        %v2645 = vsel %vm2641, %v2629, %v2644
        %v2646 = vsel %vm2640, %v2643, %v2645
        %v2647 = vsel %vm2639, %v2626, %v2629
        %v2648 = vsel %vm2642, %v2635, 920167782
        %v2649 = vsel %vm2641, %v2632, %v2648
        %v2650 = vsel %vm2640, %v2647, %v2649
        %v2651 = vsel %vm2639, %v2629, %v2632
        %v2652 = vsel %vm2642, %v2638, 1326507024
        %v2653 = vsel %vm2641, %v2635, %v2652
        %v2654 = vsel %vm2640, %v2651, %v2653
        %v2655 = vshll.u32 %v2615, 8
        %v2656 = vmul.u32.u64.compose %v2655, %v2654
        %v2657 = vextract.low.u32 %v2656
        %v2658 = vextract.high.u32 %v2656
        %v2659 = vmul.u32.u64.compose %v2655, %v2650
        %v2660 = vextract.low.u32 %v2659
        %v2661 = vextract.high.u32 %v2659
        %v2662 = vmul.u32 %v2655, %v2646
        %v2663 = vadd.s32 %v2658, %v2660
        %vm2664 = vc.u32 %v2658, %v2660
        %v2665 = vadd.s32 %v2661, 1
        %v2666 = vsel %vm2664, %v2665, %v2661
        %v2667 = vadd.s32 %v2662, %v2666
        %v2668 = vadd.s32 %v2667, 536870912
        %v2669 = vshrl.u32 %v2668, 30
        %v2670 = vshll.u32 %v2669, 30
        %v2671 = vsub.s32 %v2667, %v2670
        %vm2672 = vcmp.lt.s32.totalorder %v2671, 0
        %v2673 = vsub.s32 0, %v2671
        %v2674 = vsel %vm2672, %v2673, %v2671
        %v2675 = vclz %v2674
        %v2676 = vsub.s32 %v2675, 2
        %vm2677 = vcmp.gt.s32.totalorder 0, %v2676
        %v2678 = vsel %vm2677, 0, %v2676
        %v2679 = vsub.s32 32, %v2678
        %v2680 = vshll.u32 %v2671, %v2678
        %v2681 = vshrl.u32 %v2663, %v2679
        %v2682 = vor.u32 %v2680, %v2681
        %v2683 = vsub.s32 4294967266, %v2678
        %v2684 = vadd.s32 %v2683, 127
        %v2685 = vshll.u32 %v2684, 23
        %v2686 = vor.u32 4788187, %v2685
        %v2687 = vand.u32 2147483647, %v2686
        %v2689 = vcvt.s32.f32 %v2682
        %v2690 = vmul.f32 %v2689, %v2687
        %v2691 = vxor.u32 %v2690, 2147483648
        %v2692 = vsel %vm2609, %v2691, %v2690
        %v2693 = vsub.s32 4, %v2669
        %v2694 = vsel %vm2609, %v2693, %v2669
        %v2695 = vsel %vm2608, %v2296, %v2692
        %v2696 = vsel %vm2608, 0, %v2694
        %v2697 = vcosq.f32.pop %v2695
        %v2698 = vsinq.f32.pop %v2695
        %vm2699 = vweird.f32 %v2296
        %v2700 = vadd.s32 %v2696, 3
        %v2701 = vand.u32 %v2700, 3
        %vm2702 = vcmp.lt.s32.totalorder %v2701, 2
        %vm2703 = vcmp.eq.s32.totalorder %v2701, 0
        %v2704 = vxor.u32 %v2698, 2147483648
        %v2705 = vsel %vm2703, %v2697, %v2704
        %vm2706 = vcmp.eq.s32.totalorder %v2701, 2
        %v2707 = vxor.u32 %v2697, 2147483648
        %v2708 = vsel %vm2706, %v2707, %v2698
        %v2709 = vsel %vm2702, %v2705, %v2708
        %v2710 = vsel %vm2699, nan, %v2709
        %2711 = vadd.xlane.f32.xlu0 %v2399
        %v2712 = vpop.xlane.xlu0 %2711
        %2713 = vadd.xlane.f32.xlu0 %v2502
        %v2714 = vpop.xlane.xlu0 %2713
        %2715 = vadd.xlane.f32.xlu0 %v2606
        %v2716 = vpop.xlane.xlu0 %2715
        %2717 = vadd.xlane.f32.xlu0 %v2710
        %v2718 = vpop.xlane.xlu0 %2717
        %v2719 = vmul.f32 %v2716, 0.0078125
        %v2720 = vmul.f32 %v2718, 0.0078125
        %v2721 = vsub.f32 %v2606, %v2719
        %v2722 = vsub.f32 %v2710, %v2720
        %v2723 = vmul.f32 %v2712, 0.0078125
        %v2724 = vmul.f32 %v2714, 0.0078125
        %v2725 = vsub.f32 %v2399, %v2723
        %v2726 = vsub.f32 %v2502, %v2724
        %v2727 = vand.u32 2147483647, %v2725
        %v2728 = vand.u32 2147483647, %v2721
        %v2729 = vmin.f32 %v2727, %v2728
        %v2730 = vmax.f32 %v2727, %v2728
        %v2731 = vrcp.pop %v2730
        %v2732 = vmul.f32 %v2729, %v2731
        %v2733 = vmul.f32 %v2732, %v2732
        %v2734 = vmul.f32 0.002785687, %v2733
        %v2735 = vadd.f32 %v2734, -0.015866
        %v2736 = vmul.f32 %v2735, %v2733
        %v2737 = vadd.f32 %v2736, 0.04247222
        %v2738 = vmul.f32 %v2737, %v2733
        %v2739 = vadd.f32 %v2738, -0.074975304
        %v2740 = vmul.f32 %v2739, %v2733
        %v2741 = vadd.f32 %v2740, 0.1064488
        %v2742 = vmul.f32 %v2741, %v2733
        %v2743 = vadd.f32 %v2742, -0.14207031
        %v2744 = vmul.f32 %v2743, %v2733
        %v2745 = vadd.f32 %v2744, 0.19993454
        %v2746 = vmul.f32 %v2745, %v2733
        %v2747 = vadd.f32 %v2746, -0.33333147
        %v2748 = vmul.f32 %v2747, %v2733
        %v2749 = vmul.f32 %v2748, %v2732
        %v2750 = vadd.f32 %v2749, %v2732
        %vm2751 = vcmp.gt.f32.partialorder %v2728, %v2727
        %v2752 = vsub.f32 1.5707964, %v2750
        %v2753 = vsel %vm2751, %v2752, %v2750
        %vm2754 = vcmp.lt.f32.partialorder %v2725, 0.0
        %v2755 = vsub.f32 3.1415927, %v2753
        %v2756 = vsel %vm2754, %v2755, %v2753
        %vm2757 = vcmp.lt.s32.totalorder %v2725, 0
        %v2758 = vsel %vm2757, 3.1415927, 0.0
        %vm2759 = vcmp.eq.f32.partialorder %v2721, 0.0
        %v2760 = vsel %vm2759, %v2758, %v2756
        %vm2761 = vcmp.ne.f32.partialorder %v2725, %v2725
        %vm2762 = vcmp.ne.f32.partialorder %v2721, %v2721
        %vm2763 = vmor %vm2761, %vm2762
        %v2764 = vsel %vm2763, nan, %v2760
        %vm2765 = vcmp.lt.f32.partialorder %v2725, 0.0
        %v2766 = vsel %vm2765, 2.3561945, 0.7853982
        %vm2767 = vcmp.eq.s32.totalorder %v2727, inf
        %vm2768 = vcmp.eq.s32.totalorder %v2728, inf
        %vm2769 = vmand %vm2767, %vm2768
        %v2770 = vsel %vm2769, %v2766, %v2764
        %v2771 = vand.u32 2147483647, %v2770
        %v2772 = vand.u32 %v2721, 2147483648
        %v2773 = vor.u32 %v2771, %v2772
        %v2774 = vand.u32 2147483647, %v2726
        %v2775 = vand.u32 2147483647, %v2722
        %v2776 = vmin.f32 %v2774, %v2775
        %v2777 = vmax.f32 %v2774, %v2775
        %v2778 = vrcp.pop %v2777
        %v2779 = vmul.f32 %v2776, %v2778
        %v2780 = vmul.f32 %v2779, %v2779
        %v2781 = vmul.f32 0.002785687, %v2780
        %v2782 = vadd.f32 %v2781, -0.015866
        %v2783 = vmul.f32 %v2782, %v2780
        %v2784 = vadd.f32 %v2783, 0.04247222
        %v2785 = vmul.f32 %v2784, %v2780
        %v2786 = vadd.f32 %v2785, -0.074975304
        %v2787 = vmul.f32 %v2786, %v2780
        %v2788 = vadd.f32 %v2787, 0.1064488
        %v2789 = vmul.f32 %v2788, %v2780
        %v2790 = vadd.f32 %v2789, -0.14207031
        %v2791 = vmul.f32 %v2790, %v2780
        %v2792 = vadd.f32 %v2791, 0.19993454
        %v2793 = vmul.f32 %v2792, %v2780
        %v2794 = vadd.f32 %v2793, -0.33333147
        %v2795 = vmul.f32 %v2794, %v2780
        %v2796 = vmul.f32 %v2795, %v2779
        %v2797 = vadd.f32 %v2796, %v2779
        %vm2798 = vcmp.gt.f32.partialorder %v2775, %v2774
        %v2799 = vsub.f32 1.5707964, %v2797
        %v2800 = vsel %vm2798, %v2799, %v2797
        %vm2801 = vcmp.lt.f32.partialorder %v2726, 0.0
        %v2802 = vsub.f32 3.1415927, %v2800
        %v2803 = vsel %vm2801, %v2802, %v2800
        %vm2804 = vcmp.lt.s32.totalorder %v2726, 0
        %v2805 = vsel %vm2804, 3.1415927, 0.0
        %vm2806 = vcmp.eq.f32.partialorder %v2722, 0.0
        %v2807 = vsel %vm2806, %v2805, %v2803
        %vm2808 = vcmp.ne.f32.partialorder %v2726, %v2726
        %vm2809 = vcmp.ne.f32.partialorder %v2722, %v2722
        %vm2810 = vmor %vm2808, %vm2809
        %v2811 = vsel %vm2810, nan, %v2807
        %vm2812 = vcmp.lt.f32.partialorder %v2726, 0.0
        %v2813 = vsel %vm2812, 2.3561945, 0.7853982
        %vm2814 = vcmp.eq.s32.totalorder %v2774, inf
        %vm2815 = vcmp.eq.s32.totalorder %v2775, inf
        %vm2816 = vmand %vm2814, %vm2815
        %v2817 = vsel %vm2816, %v2813, %v2811
        %v2818 = vand.u32 2147483647, %v2817
        %v2819 = vand.u32 %v2722, 2147483648
        %v2820 = vor.u32 %v2818, %v2819
        %s2821 = scalar_lea.vmem %s152, 64 [#allocation5]
        %2822 = vst [vmem:[%s2821] sm:$0xff] %v2773
        %2823 = vst [vmem:[%s2821 + $0x8] sm:$0xff] %v2820
        %s2824 = scalar_lea.vmem %s134, 96 [#allocation2]
        %v2825 = vld [vmem:[%s2824] sm:$0xff]
        %v2826 = vld [vmem:[%s2824 + $0x8] sm:$0xff]
        %v2827 = vld [vmem:[%s134] sm:$0xff]
        %v2828 = vld [vmem:[%s134 + $0x8] sm:$0xff]
        %v2829 = vsub.f32 %v2825, %v2827
        %v2830 = vsub.f32 %v2826, %v2828
        %v2831 = vand.u32 2147483647, %v2829
        %vm2832 = vcmp.le.f32.partialorder %v2831, 0.7853982
        %vm2833 = vcmp.lt.s32.totalorder %v2829, 0
        %v2834 = vand.u32 %v2829, 2139095040
        %v2835 = vshrl.u32 %v2834, 23
        %v2836 = vsub.s32 %v2835, 127
        %v2837 = vand.u32 2147483647, %v2829
        %v2838 = vand.u32 %v2837, 8388607
        %v2839 = vor.u32 %v2838, 8388608
        %v2840 = vsub.s32 0, %v2839
        %v2841 = vadd.s32 %v2836, 1
        %vm2842 = vcmp.gt.s32.totalorder %v2841, 0
        %v2843 = vsel %vm2842, %v2841, 0
        %v2844 = vshrl.u32 %v2843, 5
        %v2845 = vand.u32 %v2843, 31
        %v2846 = vsub.s32 32, %v2845
        %v2847 = vshrl.u32 683565275, %v2846
        %v2848 = vshll.u32 683565275, %v2845
        %v2849 = vshrl.u32 2475754826, %v2846
        %v2850 = vor.u32 %v2848, %v2849
        %v2851 = vshll.u32 2475754826, %v2845
        %v2852 = vshrl.u32 2131351028, %v2846
        %v2853 = vor.u32 %v2851, %v2852
        %v2854 = vshll.u32 2131351028, %v2845
        %v2855 = vshrl.u32 2102212464, %v2846
        %v2856 = vor.u32 %v2854, %v2855
        %v2857 = vshll.u32 2102212464, %v2845
        %v2858 = vshrl.u32 920167782, %v2846
        %v2859 = vor.u32 %v2857, %v2858
        %v2860 = vshll.u32 920167782, %v2845
        %v2861 = vshrl.u32 1326507024, %v2846
        %v2862 = vor.u32 %v2860, %v2861
        %vm2863 = vcmp.lt.s32.totalorder %v2844, 1
        %vm2864 = vcmp.lt.s32.totalorder %v2844, 2
        %vm2865 = vcmp.lt.s32.totalorder %v2844, 3
        %vm2866 = vcmp.lt.s32.totalorder %v2844, 4
        %v2867 = vsel %vm2863, %v2847, %v2850
        %v2868 = vsel %vm2866, %v2856, 2102212464
        %v2869 = vsel %vm2865, %v2853, %v2868
        %v2870 = vsel %vm2864, %v2867, %v2869
        %v2871 = vsel %vm2863, %v2850, %v2853
        %v2872 = vsel %vm2866, %v2859, 920167782
        %v2873 = vsel %vm2865, %v2856, %v2872
        %v2874 = vsel %vm2864, %v2871, %v2873
        %v2875 = vsel %vm2863, %v2853, %v2856
        %v2876 = vsel %vm2866, %v2862, 1326507024
        %v2877 = vsel %vm2865, %v2859, %v2876
        %v2878 = vsel %vm2864, %v2875, %v2877
        %v2879 = vshll.u32 %v2839, 8
        %v2880 = vmul.u32.u64.compose %v2879, %v2878
        %v2881 = vextract.low.u32 %v2880
        %v2882 = vextract.high.u32 %v2880
        %v2883 = vmul.u32.u64.compose %v2879, %v2874
        %v2884 = vextract.low.u32 %v2883
        %v2885 = vextract.high.u32 %v2883
        %v2886 = vmul.u32 %v2879, %v2870
        %v2887 = vadd.s32 %v2882, %v2884
        %vm2888 = vc.u32 %v2882, %v2884
        %v2889 = vadd.s32 %v2885, 1
        %v2890 = vsel %vm2888, %v2889, %v2885
        %v2891 = vadd.s32 %v2886, %v2890
        %v2892 = vadd.s32 %v2891, 536870912
        %v2893 = vshrl.u32 %v2892, 30
        %v2894 = vshll.u32 %v2893, 30
        %v2895 = vsub.s32 %v2891, %v2894
        %vm2896 = vcmp.lt.s32.totalorder %v2895, 0
        %v2897 = vsub.s32 0, %v2895
        %v2898 = vsel %vm2896, %v2897, %v2895
        %v2899 = vclz %v2898
        %v2900 = vsub.s32 %v2899, 2
        %vm2901 = vcmp.gt.s32.totalorder 0, %v2900
        %v2902 = vsel %vm2901, 0, %v2900
        %v2903 = vsub.s32 32, %v2902
        %v2904 = vshll.u32 %v2895, %v2902
        %v2905 = vshrl.u32 %v2887, %v2903
        %v2906 = vor.u32 %v2904, %v2905
        %v2907 = vsub.s32 4294967266, %v2902
        %v2908 = vadd.s32 %v2907, 127
        %v2909 = vshll.u32 %v2908, 23
        %v2910 = vor.u32 4788187, %v2909
        %v2911 = vand.u32 2147483647, %v2910
        %v2913 = vcvt.s32.f32 %v2906
        %v2914 = vmul.f32 %v2913, %v2911
        %v2915 = vxor.u32 %v2914, 2147483648
        %v2916 = vsel %vm2833, %v2915, %v2914
        %v2917 = vsub.s32 4, %v2893
        %v2918 = vsel %vm2833, %v2917, %v2893
        %v2919 = vsel %vm2832, %v2829, %v2916
        %v2920 = vsel %vm2832, 0, %v2918
        %v2921 = vcosq.f32.pop %v2919
        %v2922 = vsinq.f32.pop %v2919
        %vm2923 = vweird.f32 %v2829
        %v2924 = vand.u32 %v2920, 3
        %vm2925 = vcmp.lt.s32.totalorder %v2924, 2
        %vm2926 = vcmp.eq.s32.totalorder %v2924, 0
        %v2927 = vxor.u32 %v2922, 2147483648
        %v2928 = vsel %vm2926, %v2921, %v2927
        %vm2929 = vcmp.eq.s32.totalorder %v2924, 2
        %v2930 = vxor.u32 %v2921, 2147483648
        %v2931 = vsel %vm2929, %v2930, %v2922
        %v2932 = vsel %vm2925, %v2928, %v2931
        %v2933 = vsel %vm2923, nan, %v2932
        %v2934 = vand.u32 2147483647, %v2830
        %vm2935 = vcmp.le.f32.partialorder %v2934, 0.7853982
        %vm2936 = vcmp.lt.s32.totalorder %v2830, 0
        %v2937 = vand.u32 %v2830, 2139095040
        %v2938 = vshrl.u32 %v2937, 23
        %v2939 = vsub.s32 %v2938, 127
        %v2940 = vand.u32 2147483647, %v2830
        %v2941 = vand.u32 %v2940, 8388607
        %v2942 = vor.u32 %v2941, 8388608
        %v2943 = vsub.s32 0, %v2942
        %v2944 = vadd.s32 %v2939, 1
        %vm2945 = vcmp.gt.s32.totalorder %v2944, 0
        %v2946 = vsel %vm2945, %v2944, 0
        %v2947 = vshrl.u32 %v2946, 5
        %v2948 = vand.u32 %v2946, 31
        %v2949 = vsub.s32 32, %v2948
        %v2950 = vshrl.u32 683565275, %v2949
        %v2951 = vshll.u32 683565275, %v2948
        %v2952 = vshrl.u32 2475754826, %v2949
        %v2953 = vor.u32 %v2951, %v2952
        %v2954 = vshll.u32 2475754826, %v2948
        %v2955 = vshrl.u32 2131351028, %v2949
        %v2956 = vor.u32 %v2954, %v2955
        %v2957 = vshll.u32 2131351028, %v2948
        %v2958 = vshrl.u32 2102212464, %v2949
        %v2959 = vor.u32 %v2957, %v2958
        %v2960 = vshll.u32 2102212464, %v2948
        %v2961 = vshrl.u32 920167782, %v2949
        %v2962 = vor.u32 %v2960, %v2961
        %v2963 = vshll.u32 920167782, %v2948
        %v2964 = vshrl.u32 1326507024, %v2949
        %v2965 = vor.u32 %v2963, %v2964
        %vm2966 = vcmp.lt.s32.totalorder %v2947, 1
        %vm2967 = vcmp.lt.s32.totalorder %v2947, 2
        %vm2968 = vcmp.lt.s32.totalorder %v2947, 3
        %vm2969 = vcmp.lt.s32.totalorder %v2947, 4
        %v2970 = vsel %vm2966, %v2950, %v2953
        %v2971 = vsel %vm2969, %v2959, 2102212464
        %v2972 = vsel %vm2968, %v2956, %v2971
        %v2973 = vsel %vm2967, %v2970, %v2972
        %v2974 = vsel %vm2966, %v2953, %v2956
        %v2975 = vsel %vm2969, %v2962, 920167782
        %v2976 = vsel %vm2968, %v2959, %v2975
        %v2977 = vsel %vm2967, %v2974, %v2976
        %v2978 = vsel %vm2966, %v2956, %v2959
        %v2979 = vsel %vm2969, %v2965, 1326507024
        %v2980 = vsel %vm2968, %v2962, %v2979
        %v2981 = vsel %vm2967, %v2978, %v2980
        %v2982 = vshll.u32 %v2942, 8
        %v2983 = vmul.u32.u64.compose %v2982, %v2981
        %v2984 = vextract.low.u32 %v2983
        %v2985 = vextract.high.u32 %v2983
        %v2986 = vmul.u32.u64.compose %v2982, %v2977
        %v2987 = vextract.low.u32 %v2986
        %v2988 = vextract.high.u32 %v2986
        %v2989 = vmul.u32 %v2982, %v2973
        %v2990 = vadd.s32 %v2985, %v2987
        %vm2991 = vc.u32 %v2985, %v2987
        %v2992 = vadd.s32 %v2988, 1
        %v2993 = vsel %vm2991, %v2992, %v2988
        %v2994 = vadd.s32 %v2989, %v2993
        %v2995 = vadd.s32 %v2994, 536870912
        %v2996 = vshrl.u32 %v2995, 30
        %v2997 = vshll.u32 %v2996, 30
        %v2998 = vsub.s32 %v2994, %v2997
        %vm2999 = vcmp.lt.s32.totalorder %v2998, 0
        %v3000 = vsub.s32 0, %v2998
        %v3001 = vsel %vm2999, %v3000, %v2998
        %v3002 = vclz %v3001
        %v3003 = vsub.s32 %v3002, 2
        %vm3004 = vcmp.gt.s32.totalorder 0, %v3003
        %v3005 = vsel %vm3004, 0, %v3003
        %v3006 = vsub.s32 32, %v3005
        %v3007 = vshll.u32 %v2998, %v3005
        %v3008 = vshrl.u32 %v2990, %v3006
        %v3009 = vor.u32 %v3007, %v3008
        %v3010 = vsub.s32 4294967266, %v3005
        %v3011 = vadd.s32 %v3010, 127
        %v3012 = vshll.u32 %v3011, 23
        %v3013 = vor.u32 4788187, %v3012
        %v3014 = vand.u32 2147483647, %v3013
        %v3016 = vcvt.s32.f32 %v3009
        %v3017 = vmul.f32 %v3016, %v3014
        %v3018 = vxor.u32 %v3017, 2147483648
        %v3019 = vsel %vm2936, %v3018, %v3017
        %v3020 = vsub.s32 4, %v2996
        %v3021 = vsel %vm2936, %v3020, %v2996
        %v3022 = vsel %vm2935, %v2830, %v3019
        %v3023 = vsel %vm2935, 0, %v3021
        %v3024 = vcosq.f32.pop %v3022
        %v3025 = vsinq.f32.pop %v3022
        %vm3026 = vweird.f32 %v2830
        %v3027 = vand.u32 %v3023, 3
        %vm3028 = vcmp.lt.s32.totalorder %v3027, 2
        %vm3029 = vcmp.eq.s32.totalorder %v3027, 0
        %v3030 = vxor.u32 %v3025, 2147483648
        %v3031 = vsel %vm3029, %v3024, %v3030
        %vm3032 = vcmp.eq.s32.totalorder %v3027, 2
        %v3033 = vxor.u32 %v3024, 2147483648
        %v3034 = vsel %vm3032, %v3033, %v3025
        %v3035 = vsel %vm3028, %v3031, %v3034
        %v3036 = vsel %vm3026, nan, %v3035
        %v3037 = vand.u32 2147483647, %v2829
        %vm3038 = vcmp.le.f32.partialorder %v3037, 0.7853982
        %vm3039 = vcmp.lt.s32.totalorder %v2829, 0
        %v3040 = vand.u32 %v2829, 2139095040
        %v3041 = vshrl.u32 %v3040, 23
        %v3042 = vsub.s32 %v3041, 127
        %v3043 = vand.u32 2147483647, %v2829
        %v3044 = vand.u32 %v3043, 8388607
        %v3045 = vor.u32 %v3044, 8388608
        %v3046 = vsub.s32 0, %v3045
        %v3047 = vadd.s32 %v3042, 1
        %vm3048 = vcmp.gt.s32.totalorder %v3047, 0
        %v3049 = vsel %vm3048, %v3047, 0
        %v3050 = vshrl.u32 %v3049, 5
        %v3051 = vand.u32 %v3049, 31
        %v3052 = vsub.s32 32, %v3051
        %v3053 = vshrl.u32 683565275, %v3052
        %v3054 = vshll.u32 683565275, %v3051
        %v3055 = vshrl.u32 2475754826, %v3052
        %v3056 = vor.u32 %v3054, %v3055
        %v3057 = vshll.u32 2475754826, %v3051
        %v3058 = vshrl.u32 2131351028, %v3052
        %v3059 = vor.u32 %v3057, %v3058
        %v3060 = vshll.u32 2131351028, %v3051
        %v3061 = vshrl.u32 2102212464, %v3052
        %v3062 = vor.u32 %v3060, %v3061
        %v3063 = vshll.u32 2102212464, %v3051
        %v3064 = vshrl.u32 920167782, %v3052
        %v3065 = vor.u32 %v3063, %v3064
        %v3066 = vshll.u32 920167782, %v3051
        %v3067 = vshrl.u32 1326507024, %v3052
        %v3068 = vor.u32 %v3066, %v3067
        %vm3069 = vcmp.lt.s32.totalorder %v3050, 1
        %vm3070 = vcmp.lt.s32.totalorder %v3050, 2
        %vm3071 = vcmp.lt.s32.totalorder %v3050, 3
        %vm3072 = vcmp.lt.s32.totalorder %v3050, 4
        %v3073 = vsel %vm3069, %v3053, %v3056
        %v3074 = vsel %vm3072, %v3062, 2102212464
        %v3075 = vsel %vm3071, %v3059, %v3074
        %v3076 = vsel %vm3070, %v3073, %v3075
        %v3077 = vsel %vm3069, %v3056, %v3059
        %v3078 = vsel %vm3072, %v3065, 920167782
        %v3079 = vsel %vm3071, %v3062, %v3078
        %v3080 = vsel %vm3070, %v3077, %v3079
        %v3081 = vsel %vm3069, %v3059, %v3062
        %v3082 = vsel %vm3072, %v3068, 1326507024
        %v3083 = vsel %vm3071, %v3065, %v3082
        %v3084 = vsel %vm3070, %v3081, %v3083
        %v3085 = vshll.u32 %v3045, 8
        %v3086 = vmul.u32.u64.compose %v3085, %v3084
        %v3087 = vextract.low.u32 %v3086
        %v3088 = vextract.high.u32 %v3086
        %v3089 = vmul.u32.u64.compose %v3085, %v3080
        %v3090 = vextract.low.u32 %v3089
        %v3091 = vextract.high.u32 %v3089
        %v3092 = vmul.u32 %v3085, %v3076
        %v3093 = vadd.s32 %v3088, %v3090
        %vm3094 = vc.u32 %v3088, %v3090
        %v3095 = vadd.s32 %v3091, 1
        %v3096 = vsel %vm3094, %v3095, %v3091
        %v3097 = vadd.s32 %v3092, %v3096
        %v3098 = vadd.s32 %v3097, 536870912
        %v3099 = vshrl.u32 %v3098, 30
        %v3100 = vshll.u32 %v3099, 30
        %v3101 = vsub.s32 %v3097, %v3100
        %vm3102 = vcmp.lt.s32.totalorder %v3101, 0
        %v3103 = vsub.s32 0, %v3101
        %v3104 = vsel %vm3102, %v3103, %v3101
        %v3105 = vclz %v3104
        %v3106 = vsub.s32 %v3105, 2
        %vm3107 = vcmp.gt.s32.totalorder 0, %v3106
        %v3108 = vsel %vm3107, 0, %v3106
        %v3109 = vsub.s32 32, %v3108
        %v3110 = vshll.u32 %v3101, %v3108
        %v3111 = vshrl.u32 %v3093, %v3109
        %v3112 = vor.u32 %v3110, %v3111
        %v3113 = vsub.s32 4294967266, %v3108
        %v3114 = vadd.s32 %v3113, 127
        %v3115 = vshll.u32 %v3114, 23
        %v3116 = vor.u32 4788187, %v3115
        %v3117 = vand.u32 2147483647, %v3116
        %v3119 = vcvt.s32.f32 %v3112
        %v3120 = vmul.f32 %v3119, %v3117
        %v3121 = vxor.u32 %v3120, 2147483648
        %v3122 = vsel %vm3039, %v3121, %v3120
        %v3123 = vsub.s32 4, %v3099
        %v3124 = vsel %vm3039, %v3123, %v3099
        %v3125 = vsel %vm3038, %v2829, %v3122
        %v3126 = vsel %vm3038, 0, %v3124
        %v3127 = vcosq.f32.pop %v3125
        %v3128 = vsinq.f32.pop %v3125
        %vm3129 = vweird.f32 %v2829
        %v3130 = vadd.s32 %v3126, 3
        %v3131 = vand.u32 %v3130, 3
        %vm3132 = vcmp.lt.s32.totalorder %v3131, 2
        %vm3133 = vcmp.eq.s32.totalorder %v3131, 0
        %v3134 = vxor.u32 %v3128, 2147483648
        %v3135 = vsel %vm3133, %v3127, %v3134
        %vm3136 = vcmp.eq.s32.totalorder %v3131, 2
        %v3137 = vxor.u32 %v3127, 2147483648
        %v3138 = vsel %vm3136, %v3137, %v3128
        %v3139 = vsel %vm3132, %v3135, %v3138
        %v3140 = vsel %vm3129, nan, %v3139
        %v3141 = vand.u32 2147483647, %v2830
        %vm3142 = vcmp.le.f32.partialorder %v3141, 0.7853982
        %vm3143 = vcmp.lt.s32.totalorder %v2830, 0
        %v3144 = vand.u32 %v2830, 2139095040
        %v3145 = vshrl.u32 %v3144, 23
        %v3146 = vsub.s32 %v3145, 127
        %v3147 = vand.u32 2147483647, %v2830
        %v3148 = vand.u32 %v3147, 8388607
        %v3149 = vor.u32 %v3148, 8388608
        %v3150 = vsub.s32 0, %v3149
        %v3151 = vadd.s32 %v3146, 1
        %vm3152 = vcmp.gt.s32.totalorder %v3151, 0
        %v3153 = vsel %vm3152, %v3151, 0
        %v3154 = vshrl.u32 %v3153, 5
        %v3155 = vand.u32 %v3153, 31
        %v3156 = vsub.s32 32, %v3155
        %v3157 = vshrl.u32 683565275, %v3156
        %v3158 = vshll.u32 683565275, %v3155
        %v3159 = vshrl.u32 2475754826, %v3156
        %v3160 = vor.u32 %v3158, %v3159
        %v3161 = vshll.u32 2475754826, %v3155
        %v3162 = vshrl.u32 2131351028, %v3156
        %v3163 = vor.u32 %v3161, %v3162
        %v3164 = vshll.u32 2131351028, %v3155
        %v3165 = vshrl.u32 2102212464, %v3156
        %v3166 = vor.u32 %v3164, %v3165
        %v3167 = vshll.u32 2102212464, %v3155
        %v3168 = vshrl.u32 920167782, %v3156
        %v3169 = vor.u32 %v3167, %v3168
        %v3170 = vshll.u32 920167782, %v3155
        %v3171 = vshrl.u32 1326507024, %v3156
        %v3172 = vor.u32 %v3170, %v3171
        %vm3173 = vcmp.lt.s32.totalorder %v3154, 1
        %vm3174 = vcmp.lt.s32.totalorder %v3154, 2
        %vm3175 = vcmp.lt.s32.totalorder %v3154, 3
        %vm3176 = vcmp.lt.s32.totalorder %v3154, 4
        %v3177 = vsel %vm3173, %v3157, %v3160
        %v3178 = vsel %vm3176, %v3166, 2102212464
        %v3179 = vsel %vm3175, %v3163, %v3178
        %v3180 = vsel %vm3174, %v3177, %v3179
        %v3181 = vsel %vm3173, %v3160, %v3163
        %v3182 = vsel %vm3176, %v3169, 920167782
        %v3183 = vsel %vm3175, %v3166, %v3182
        %v3184 = vsel %vm3174, %v3181, %v3183
        %v3185 = vsel %vm3173, %v3163, %v3166
        %v3186 = vsel %vm3176, %v3172, 1326507024
        %v3187 = vsel %vm3175, %v3169, %v3186
        %v3188 = vsel %vm3174, %v3185, %v3187
        %v3189 = vshll.u32 %v3149, 8
        %v3190 = vmul.u32.u64.compose %v3189, %v3188
        %v3191 = vextract.low.u32 %v3190
        %v3192 = vextract.high.u32 %v3190
        %v3193 = vmul.u32.u64.compose %v3189, %v3184
        %v3194 = vextract.low.u32 %v3193
        %v3195 = vextract.high.u32 %v3193
        %v3196 = vmul.u32 %v3189, %v3180
        %v3197 = vadd.s32 %v3192, %v3194
        %vm3198 = vc.u32 %v3192, %v3194
        %v3199 = vadd.s32 %v3195, 1
        %v3200 = vsel %vm3198, %v3199, %v3195
        %v3201 = vadd.s32 %v3196, %v3200
        %v3202 = vadd.s32 %v3201, 536870912
        %v3203 = vshrl.u32 %v3202, 30
        %v3204 = vshll.u32 %v3203, 30
        %v3205 = vsub.s32 %v3201, %v3204
        %vm3206 = vcmp.lt.s32.totalorder %v3205, 0
        %v3207 = vsub.s32 0, %v3205
        %v3208 = vsel %vm3206, %v3207, %v3205
        %v3209 = vclz %v3208
        %v3210 = vsub.s32 %v3209, 2
        %vm3211 = vcmp.gt.s32.totalorder 0, %v3210
        %v3212 = vsel %vm3211, 0, %v3210
        %v3213 = vsub.s32 32, %v3212
        %v3214 = vshll.u32 %v3205, %v3212
        %v3215 = vshrl.u32 %v3197, %v3213
        %v3216 = vor.u32 %v3214, %v3215
        %v3217 = vsub.s32 4294967266, %v3212
        %v3218 = vadd.s32 %v3217, 127
        %v3219 = vshll.u32 %v3218, 23
        %v3220 = vor.u32 4788187, %v3219
        %v3221 = vand.u32 2147483647, %v3220
        %v3223 = vcvt.s32.f32 %v3216
        %v3224 = vmul.f32 %v3223, %v3221
        %v3225 = vxor.u32 %v3224, 2147483648
        %v3226 = vsel %vm3143, %v3225, %v3224
        %v3227 = vsub.s32 4, %v3203
        %v3228 = vsel %vm3143, %v3227, %v3203
        %v3229 = vsel %vm3142, %v2830, %v3226
        %v3230 = vsel %vm3142, 0, %v3228
        %v3231 = vcosq.f32.pop %v3229
        %v3232 = vsinq.f32.pop %v3229
        %vm3233 = vweird.f32 %v2830
        %v3234 = vadd.s32 %v3230, 3
        %v3235 = vand.u32 %v3234, 3
        %vm3236 = vcmp.lt.s32.totalorder %v3235, 2
        %vm3237 = vcmp.eq.s32.totalorder %v3235, 0
        %v3238 = vxor.u32 %v3232, 2147483648
        %v3239 = vsel %vm3237, %v3231, %v3238
        %vm3240 = vcmp.eq.s32.totalorder %v3235, 2
        %v3241 = vxor.u32 %v3231, 2147483648
        %v3242 = vsel %vm3240, %v3241, %v3232
        %v3243 = vsel %vm3236, %v3239, %v3242
        %v3244 = vsel %vm3233, nan, %v3243
        %3245 = vadd.xlane.f32.xlu0 %v2933
        %v3246 = vpop.xlane.xlu0 %3245
        %3247 = vadd.xlane.f32.xlu0 %v3036
        %v3248 = vpop.xlane.xlu0 %3247
        %3249 = vadd.xlane.f32.xlu0 %v3140
        %v3250 = vpop.xlane.xlu0 %3249
        %3251 = vadd.xlane.f32.xlu0 %v3244
        %v3252 = vpop.xlane.xlu0 %3251
        %v3253 = vmul.f32 %v3250, 0.0078125
        %v3254 = vmul.f32 %v3252, 0.0078125
        %v3255 = vsub.f32 %v3140, %v3253
        %v3256 = vsub.f32 %v3244, %v3254
        %v3257 = vmul.f32 %v3246, 0.0078125
        %v3258 = vmul.f32 %v3248, 0.0078125
        %v3259 = vsub.f32 %v2933, %v3257
        %v3260 = vsub.f32 %v3036, %v3258
        %v3261 = vand.u32 2147483647, %v3259
        %v3262 = vand.u32 2147483647, %v3255
        %v3263 = vmin.f32 %v3261, %v3262
        %v3264 = vmax.f32 %v3261, %v3262
        %v3265 = vrcp.pop %v3264
        %v3266 = vmul.f32 %v3263, %v3265
        %v3267 = vmul.f32 %v3266, %v3266
        %v3268 = vmul.f32 0.002785687, %v3267
        %v3269 = vadd.f32 %v3268, -0.015866
        %v3270 = vmul.f32 %v3269, %v3267
        %v3271 = vadd.f32 %v3270, 0.04247222
        %v3272 = vmul.f32 %v3271, %v3267
        %v3273 = vadd.f32 %v3272, -0.074975304
        %v3274 = vmul.f32 %v3273, %v3267
        %v3275 = vadd.f32 %v3274, 0.1064488
        %v3276 = vmul.f32 %v3275, %v3267
        %v3277 = vadd.f32 %v3276, -0.14207031
        %v3278 = vmul.f32 %v3277, %v3267
        %v3279 = vadd.f32 %v3278, 0.19993454
        %v3280 = vmul.f32 %v3279, %v3267
        %v3281 = vadd.f32 %v3280, -0.33333147
        %v3282 = vmul.f32 %v3281, %v3267
        %v3283 = vmul.f32 %v3282, %v3266
        %v3284 = vadd.f32 %v3283, %v3266
        %vm3285 = vcmp.gt.f32.partialorder %v3262, %v3261
        %v3286 = vsub.f32 1.5707964, %v3284
        %v3287 = vsel %vm3285, %v3286, %v3284
        %vm3288 = vcmp.lt.f32.partialorder %v3259, 0.0
        %v3289 = vsub.f32 3.1415927, %v3287
        %v3290 = vsel %vm3288, %v3289, %v3287
        %vm3291 = vcmp.lt.s32.totalorder %v3259, 0
        %v3292 = vsel %vm3291, 3.1415927, 0.0
        %vm3293 = vcmp.eq.f32.partialorder %v3255, 0.0
        %v3294 = vsel %vm3293, %v3292, %v3290
        %vm3295 = vcmp.ne.f32.partialorder %v3259, %v3259
        %vm3296 = vcmp.ne.f32.partialorder %v3255, %v3255
        %vm3297 = vmor %vm3295, %vm3296
        %v3298 = vsel %vm3297, nan, %v3294
        %vm3299 = vcmp.lt.f32.partialorder %v3259, 0.0
        %v3300 = vsel %vm3299, 2.3561945, 0.7853982
        %vm3301 = vcmp.eq.s32.totalorder %v3261, inf
        %vm3302 = vcmp.eq.s32.totalorder %v3262, inf
        %vm3303 = vmand %vm3301, %vm3302
        %v3304 = vsel %vm3303, %v3300, %v3298
        %v3305 = vand.u32 2147483647, %v3304
        %v3306 = vand.u32 %v3255, 2147483648
        %v3307 = vor.u32 %v3305, %v3306
        %v3308 = vand.u32 2147483647, %v3260
        %v3309 = vand.u32 2147483647, %v3256
        %v3310 = vmin.f32 %v3308, %v3309
        %v3311 = vmax.f32 %v3308, %v3309
        %v3312 = vrcp.pop %v3311
        %v3313 = vmul.f32 %v3310, %v3312
        %v3314 = vmul.f32 %v3313, %v3313
        %v3315 = vmul.f32 0.002785687, %v3314
        %v3316 = vadd.f32 %v3315, -0.015866
        %v3317 = vmul.f32 %v3316, %v3314
        %v3318 = vadd.f32 %v3317, 0.04247222
        %v3319 = vmul.f32 %v3318, %v3314
        %v3320 = vadd.f32 %v3319, -0.074975304
        %v3321 = vmul.f32 %v3320, %v3314
        %v3322 = vadd.f32 %v3321, 0.1064488
        %v3323 = vmul.f32 %v3322, %v3314
        %v3324 = vadd.f32 %v3323, -0.14207031
        %v3325 = vmul.f32 %v3324, %v3314
        %v3326 = vadd.f32 %v3325, 0.19993454
        %v3327 = vmul.f32 %v3326, %v3314
        %v3328 = vadd.f32 %v3327, -0.33333147
        %v3329 = vmul.f32 %v3328, %v3314
        %v3330 = vmul.f32 %v3329, %v3313
        %v3331 = vadd.f32 %v3330, %v3313
        %vm3332 = vcmp.gt.f32.partialorder %v3309, %v3308
        %v3333 = vsub.f32 1.5707964, %v3331
        %v3334 = vsel %vm3332, %v3333, %v3331
        %vm3335 = vcmp.lt.f32.partialorder %v3260, 0.0
        %v3336 = vsub.f32 3.1415927, %v3334
        %v3337 = vsel %vm3335, %v3336, %v3334
        %vm3338 = vcmp.lt.s32.totalorder %v3260, 0
        %v3339 = vsel %vm3338, 3.1415927, 0.0
        %vm3340 = vcmp.eq.f32.partialorder %v3256, 0.0
        %v3341 = vsel %vm3340, %v3339, %v3337
        %vm3342 = vcmp.ne.f32.partialorder %v3260, %v3260
        %vm3343 = vcmp.ne.f32.partialorder %v3256, %v3256
        %vm3344 = vmor %vm3342, %vm3343
        %v3345 = vsel %vm3344, nan, %v3341
        %vm3346 = vcmp.lt.f32.partialorder %v3260, 0.0
        %v3347 = vsel %vm3346, 2.3561945, 0.7853982
        %vm3348 = vcmp.eq.s32.totalorder %v3308, inf
        %vm3349 = vcmp.eq.s32.totalorder %v3309, inf
        %vm3350 = vmand %vm3348, %vm3349
        %v3351 = vsel %vm3350, %v3347, %v3345
        %v3352 = vand.u32 2147483647, %v3351
        %v3353 = vand.u32 %v3256, 2147483648
        %v3354 = vor.u32 %v3352, %v3353
        %s3355 = scalar_lea.vmem %s152, 80 [#allocation5]
        %3356 = vst [vmem:[%s3355] sm:$0xff] %v3307
        %3357 = vst [vmem:[%s3355 + $0x8] sm:$0xff] %v3354
        %s3358 = sand.u32 %s68, 1
        %s3359 = scalar_lea.sflag [#allocation4], %s3358
        %s3360 = sand.u32 %s68, 1
        %s3361 = smul.addr %s3360, 96
        %s3362 = scalar_lea.vmem [#allocation5], %s3361
        // Predicated region
        $region29: #{tpu_custom_call.1} parent=23 // pred_check
          %p3363 = pneg %p78
        $region30: #{tpu_custom_call.1} parent=23 // pred_check_branch
          %3365 = sbr.rel (%p3363) target = $region32
        $region31: #{tpu_custom_call.1} parent=23 // pred_region
          %s3366 = smul.u32 2, %s23
          %s3368 = ssub.s32 1536, 1536
          %3369 = vsyncadd %s3359, %s3368
          %s3370 = smul.addr %s22, 12
          %s3371 = sadd.s32 %s3366, %s3370
          %s3372 = smul.addr %s3371, 128
          %s3373 = scalar_lea.hbm %s1, %s3372
          %s3374 = sshll.u32 %s3362, 4
          %s3375 = int_to_ptr.vmem [resolvable:$true] %s3374
          %3380 = dma.vmem_to_hbm [thread:$0]  %s3375, 1536, %s3373, %s3359, 128, 128, 8
        $region32: #{tpu_custom_call.1} parent=23 // pred_fallthru
          _
      $region24: #{tpu_custom_call.1} parent=5 // pred_fallthru
        _
      %p3381 = scmp.le.s32.totalorder 2, %s13
      // Predicated region
      $region33: #{tpu_custom_call.1} parent=5 // pred_check
        %p3382 = pneg %p3381
      $region34: #{tpu_custom_call.1} parent=5 // pred_check_branch
        %3384 = sbr.rel (%p3382) target = $region36
      $region35: #{tpu_custom_call.1} parent=5 // pred_region
        %s3385 = ssub.s32 %s13, 2
        // Predicated region
        $region37: #{tpu_custom_call.1} parent=35 // pred_check
          %p3386 = pneg %p84
        $region38: #{tpu_custom_call.1} parent=35 // pred_check_branch
          %3388 = sbr.rel (%p3386) target = $region40
        $region39: #{tpu_custom_call.1} parent=35 // pred_region
          %s3389 = sand.u32 %s69, 1
          %s3390 = scalar_lea.sflag [#allocation4], %s3389
          %s3391 = sand.u32 %s69, 1
          %s3392 = smul.addr %s3391, 96
          %s3393 = scalar_lea.vmem [#allocation5], %s3392
          %3394 = dma.done %s3390, 1536
        $region40: #{tpu_custom_call.1} parent=35 // pred_fallthru
          _
      $region36: #{tpu_custom_call.1} parent=5 // pred_fallthru
        _
    $region6: #{tpu_custom_call.1} parent=1 // loop_footer
      %s17 = sadd.s32 1, %s13
    $region7: #{tpu_custom_call.1} parent=1 // loop_footer_branch
      %12 = sbr.rel target = $region3
    $region8: #{tpu_custom_call.1} parent=1 // loop_exit
      _
    %3395 = vsyncpa [#allocation3], 1
    %s3396 = scalar_lea.sflag [#allocation3], 1
    %3397 = vsyncpa %s3396, 1
    %3398 = vsyncpa [#allocation4], 1
    %s3399 = scalar_lea.sflag [#allocation4], 1
    %3400 = vsyncpa %s3399, 1

</llo_original>
